<compile_context>
chip_gen: v7x
topology: tpu7x:2x2x1
jax: 0.10.0
libtpu: 0.0.40
codegen_flags: <defaults>
</compile_context>

<pallas_src>
import functools
import math

import jax
import jax.numpy as jnp
from jax import lax
from jax.experimental import pallas as pl
from jax.experimental.pallas import tpu as pltpu

COMPUTE_DTYPE = jnp.bfloat16          # MXU input dtype (accumulation stays f32)

# per-kernel scoped-VMEM budgets (fit v7x's 64 MiB physical with headroom)
_VMEM_K1 = 32 * 1024 * 1024
_VMEM_K2 = 48 * 1024 * 1024
_VMEM_K3 = 32 * 1024 * 1024


# ----------------------------------------------------------------------------
# helpers
# ----------------------------------------------------------------------------
def _layernorm_noaffine(x, eps=1e-5):
    # gamma/beta are folded into the following matmul in the wrapper.
    mu = jnp.mean(x, axis=-1, keepdims=True)
    var = jnp.mean((x - mu) ** 2, axis=-1, keepdims=True)
    return (x - mu) * lax.rsqrt(var + eps)


def _pick_tile(n, cap):
    """Largest divisor of n <= cap that is a multiple of 8.

    Falls back to n itself (a full-extent block is always legal lowering-wise,
    it just uses more VMEM than intended)."""
    if n <= cap:
        return n
    for t in range(cap, 0, -1):
        if n % t == 0 and t % 8 == 0:
            return t
    return n


def _pick_row_tile(H, W, target_tokens):
    """Largest row count th dividing H with th*W <= target_tokens and
    th*W a multiple of 8 (or th == H, i.e. full-extent).  Falls back to H."""
    for th in range(H, 0, -1):
        if H % th:
            continue
        if th * W > max(target_tokens, W):
            continue
        if (th * W) % 8 == 0 or th == H:
            return th
    return H


# ----------------------------------------------------------------------------
# Kernel 1: norm1 (affine folded) + q/k/v projections   grid = (B, N // tn)
#   Three aligned (tn, C)@(C, C) dots written straight to q/k/v — no lane
#   slicing of a fused 3C result.  Attention scale is folded into Wq/bq.
# ----------------------------------------------------------------------------
def norm1_qkv_kernel(x_ref, wq_ref, wk_ref, wv_ref, bq_ref, bk_ref, bv_ref,
                     q_ref, k_ref, v_ref):
    xn = _layernorm_noaffine(x_ref[0]).astype(wq_ref.dtype)           # (tn, C)
    q_ref[0] = (jnp.dot(xn, wq_ref[...], preferred_element_type=jnp.float32)
                + bq_ref[...]).astype(q_ref.dtype)
    k_ref[0] = (jnp.dot(xn, wk_ref[...], preferred_element_type=jnp.float32)
                + bk_ref[...]).astype(k_ref.dtype)
    v_ref[0] = (jnp.dot(xn, wv_ref[...], preferred_element_type=jnp.float32)
                + bv_ref[...]).astype(v_ref.dtype)


# ----------------------------------------------------------------------------
# Kernel 2: attention with VMEM-resident K/V + output projection + residual
#   grid = (B, N // tq).  K/V blocks are (1, N, C) with an index map that
#   ignores the q-tile index, so they are DMA'd once per image and stay
#   resident across q tiles (no HBM re-streaming, no online-softmax state).
#   Per-head outputs go into a lane-dense (tq, C) staging scratch; the proj
#   is ONE wide matmul fused with bias + residual.
# ----------------------------------------------------------------------------
def attn_proj_kernel(q_ref, k_ref, v_ref, x_ref, wp_ref, bp_ref, o_ref,
                     o_stage, *, num_heads):
    nh = num_heads
    C = q_ref.shape[-1]
    hd = C // nh

    q_t = q_ref[0]                              # (tq, C) bf16, scale pre-folded
    k_t = k_ref[0]                              # (N,  C) bf16, VMEM-resident
    v_t = v_ref[0]                              # (N,  C) bf16, VMEM-resident

    for h in range(nh):                         # static, small (<= 8)
        qh = q_t[:, h * hd:(h + 1) * hd]        # (tq, hd)
        kh = k_t[:, h * hd:(h + 1) * hd]        # (N,  hd)
        vh = v_t[:, h * hd:(h + 1) * hd]        # (N,  hd)
        s = lax.dot_general(qh, kh, (((1,), (1,)), ((), ())),
                            preferred_element_type=jnp.float32)      # (tq, N)
        m = jnp.max(s, axis=-1, keepdims=True)
        p = jnp.exp(s - m)
        l = jnp.sum(p, axis=-1, keepdims=True)
        oh = jnp.dot(p.astype(vh.dtype), vh,
                     preferred_element_type=jnp.float32)             # (tq, hd)
        inv_l = pl.reciprocal(l, approx=True)                        # EUP slot
        o_stage[:, h * hd:(h + 1) * hd] = (oh * inv_l).astype(o_stage.dtype)

    proj = jnp.dot(o_stage[...], wp_ref[...],
                   preferred_element_type=jnp.float32)               # one wide matmul
    o_ref[0] = x_ref[0] + proj + bp_ref[...]                         # residual + bias


# ----------------------------------------------------------------------------
# Kernel 3: row-tiled fused MLP = norm2(folded) + fc1 + 3x3 depthwise conv
#           + GELU + fc2 + residual.   grid = (B, H // th)
#   The conv halo rows are recomputed from one row of each neighbouring tile
#   (masked to zero at the image border == the conv's zero padding), so the
#   hidden activation never touches HBM.  Only the 1-element halo border of
#   the padded scratch is zeroed; the tap loop uses 3 sublane shifts (one per
#   kw) with the kh taps taken from the free untiled leading axis.
# ----------------------------------------------------------------------------
def mlp_fused_kernel(x_ref, xt_ref, xb_ref, w1_ref, b1_ref, dww_ref, dwb_ref,
                     w2_ref, b2_ref, o_ref, hpad_ref, *, W, th):
    i = pl.program_id(1)
    n_tiles = pl.num_programs(1)
    hid = w1_ref.shape[1]

    def fc1(rows):                              # rows: (R, C) f32
        xn = _layernorm_noaffine(rows).astype(w1_ref.dtype)
        return jnp.dot(xn, w1_ref[...],
                       preferred_element_type=jnp.float32) + b1_ref[...]

    x = x_ref[0]                                                      # (th*W, C)
    h_tile = fc1(x)                                                   # (th*W, hid)

    # halo rows: last image row of the tile above, first of the tile below.
    h_top = jnp.where(i > 0, fc1(xt_ref[0, (th - 1) * W:, :]), 0.0)   # (W, hid)
    h_bot = jnp.where(i < n_tiles - 1, fc1(xb_ref[0, :W, :]), 0.0)    # (W, hid)

    # build the zero-padded halo in VMEM; zero only the border cells.
    hpad_ref[1:th + 1, 1:W + 1, :] = h_tile.reshape(th, W, hid)
    hpad_ref[0:1, 1:W + 1, :] = h_top.reshape(1, W, hid)
    hpad_ref[th + 1:th + 2, 1:W + 1, :] = h_bot.reshape(1, W, hid)
    zcol = jnp.zeros((th + 2, 1, hid), jnp.float32)
    hpad_ref[:, 0:1, :] = zcol
    hpad_ref[:, W + 1:W + 2, :] = zcol

    dww = dww_ref[...]                                                # (9, hid)
    acc = jnp.zeros((th, W, hid), jnp.float32)
    for kw in range(3):                         # 3 sublane shifts total
        shifted = hpad_ref[:, kw:kw + W, :]                           # (th+2, W, hid)
        for kh in range(3):                     # leading-axis slices are free
            acc = acc + shifted[kh:kh + th] * dww[kh * 3 + kw].reshape(1, 1, hid)
    acc = acc + dwb_ref[...].reshape(1, 1, hid)

    # exact GELU (torch.nn.GELU default): 0.5*x*(1+erf(x/sqrt(2)))
    y = 0.5 * acc * (1.0 + lax.erf(acc * (1.0 / math.sqrt(2.0))))

    out = jnp.dot(y.reshape(th * W, hid).astype(w2_ref.dtype), w2_ref[...],
                  preferred_element_type=jnp.float32) + b2_ref[...]
    o_ref[0] = x + out                                                # residual


# ----------------------------------------------------------------------------
# Wrapper
# ----------------------------------------------------------------------------
def block_forward(x, params, num_heads, H, W, *,
                  compute_dtype=COMPUTE_DTYPE,
                  attn_q_tile_tokens=256,        # use 128 on v5e (128-wide MXU)
                  mlp_row_tile_tokens=1024):
    B, N, C = x.shape
    assert N == H * W, "token count must equal H*W"
    assert C % num_heads == 0
    hd = C // num_heads
    scale = hd ** (-0.5)
    hid = params["w1"].shape[1]
    f32 = jnp.float32
    cdt = compute_dtype

    # ---- one-time weight prep: fold LayerNorm affines (and the attention
    #      scale) into the adjacent matmuls; split QKV into aligned (C,C) dots.
    g1 = params["g1"].reshape(C, 1)
    be1 = params["be1"].reshape(1, C)
    wq = params["wq"]
    wk = params["wkv"][:, :C]
    wv = params["wkv"][:, C:]
    wq_f = (g1 * wq * scale).astype(cdt)
    wk_f = (g1 * wk).astype(cdt)
    wv_f = (g1 * wv).astype(cdt)
    bq = (be1 @ wq) * scale
    bk = be1 @ wk
    bv = be1 @ wv

    g2 = params["g2"].reshape(C, 1)
    be2 = params["be2"].reshape(1, C)
    w1_f = (g2 * params["w1"]).astype(cdt)
    b1_f = be2 @ params["w1"] + params["b1"]
    w2 = params["w2"].astype(cdt)
    wp = params["wproj"].astype(cdt)

    tn = _pick_tile(N, 512)                      # token tile for the QKV projection
    tq = _pick_tile(N, attn_q_tile_tokens)       # attention q tile
    th = _pick_row_tile(H, W, mlp_row_tile_tokens)
    n_row_tiles = H // th
    tile_n = th * W

    # ---- kernel 1: norm1 + q/k/v projections ------------------------------
    q, k, v = pl.pallas_call(
        norm1_qkv_kernel,
        out_shape=(jax.ShapeDtypeStruct((B, N, C), cdt),) * 3,
        grid=(B, N // tn),
        in_specs=[
            pl.BlockSpec((1, tn, C), lambda b, i: (b, i, 0)),
            pl.BlockSpec((C, C), lambda b, i: (0, 0)),
            pl.BlockSpec((C, C), lambda b, i: (0, 0)),
            pl.BlockSpec((C, C), lambda b, i: (0, 0)),
            pl.BlockSpec((1, C), lambda b, i: (0, 0)),
            pl.BlockSpec((1, C), lambda b, i: (0, 0)),
            pl.BlockSpec((1, C), lambda b, i: (0, 0)),
        ],
        out_specs=(pl.BlockSpec((1, tn, C), lambda b, i: (b, i, 0)),) * 3,
        compiler_params=pltpu.CompilerParams(
            dimension_semantics=("parallel", "parallel"),
            vmem_limit_bytes=_VMEM_K1),
    )(x, wq_f, wk_f, wv_f, bq, bk, bv)

    # ---- kernel 2: attention (resident K/V) + proj + residual --------------
    x1 = pl.pallas_call(
        functools.partial(attn_proj_kernel, num_heads=num_heads),
        out_shape=jax.ShapeDtypeStruct((B, N, C), f32),
        grid=(B, N // tq),
        in_specs=[
            pl.BlockSpec((1, tq, C), lambda b, qi: (b, qi, 0)),   # q tile
            pl.BlockSpec((1, N, C), lambda b, qi: (b, 0, 0)),     # K resident
            pl.BlockSpec((1, N, C), lambda b, qi: (b, 0, 0)),     # V resident
            pl.BlockSpec((1, tq, C), lambda b, qi: (b, qi, 0)),   # x (residual)
            pl.BlockSpec((C, C), lambda b, qi: (0, 0)),           # Wproj
            pl.BlockSpec((1, C), lambda b, qi: (0, 0)),           # bproj
        ],
        out_specs=pl.BlockSpec((1, tq, C), lambda b, qi: (b, qi, 0)),
        scratch_shapes=[pltpu.VMEM((tq, C), cdt)],                # lane-dense head staging
        compiler_params=pltpu.CompilerParams(
            dimension_semantics=("parallel", "parallel"),
            vmem_limit_bytes=_VMEM_K2),
    )(q, k, v, x, wp, params["bproj"])

    # ---- kernel 3: row-tiled fused MLP --------------------------------------
    def tile_idx(b, i):
        return (b, i, 0)

    def top_idx(b, i):
        return (b, jnp.maximum(i - 1, 0), 0)          # clamped; masked in-kernel

    def bot_idx(b, i):
        return (b, jnp.minimum(i + 1, n_row_tiles - 1), 0)

    out = pl.pallas_call(
        functools.partial(mlp_fused_kernel, W=W, th=th),
        out_shape=jax.ShapeDtypeStruct((B, N, C), f32),
        grid=(B, n_row_tiles),
        in_specs=[
            pl.BlockSpec((1, tile_n, C), tile_idx),   # current row tile
            pl.BlockSpec((1, tile_n, C), top_idx),    # tile above (top halo source)
            pl.BlockSpec((1, tile_n, C), bot_idx),    # tile below (bottom halo source)
            pl.BlockSpec((C, hid), lambda b, i: (0, 0)),
            pl.BlockSpec((1, hid), lambda b, i: (0, 0)),
            pl.BlockSpec((9, hid), lambda b, i: (0, 0)),
            pl.BlockSpec((1, hid), lambda b, i: (0, 0)),
            pl.BlockSpec((hid, C), lambda b, i: (0, 0)),
            pl.BlockSpec((1, C), lambda b, i: (0, 0)),
        ],
        out_specs=pl.BlockSpec((1, tile_n, C), tile_idx),
        scratch_shapes=[pltpu.VMEM((th + 2, W + 2, hid), f32)],
        compiler_params=pltpu.CompilerParams(
            dimension_semantics=("parallel", "parallel"),
            vmem_limit_bytes=_VMEM_K3),
    )(x1, x1, x1, w1_f, b1_f, params["dww"], params["dwb"], w2, params["b2"])

    return out


# ----------------------------------------------------------------------------
# pure-JAX reference (f32) for a correctness sanity check
# ----------------------------------------------------------------------------
def reference_forward(x, params, num_heads, H, W):
    B, N, C = x.shape
    hd = C // num_heads
    scale = hd ** (-0.5)

    def ln(v, g, b):
        mu = v.mean(-1, keepdims=True)
        var = ((v - mu) ** 2).mean(-1, keepdims=True)
        return (v - mu) / jnp.sqrt(var + 1e-5) * g + b

    xn = ln(x, params["g1"], params["be1"])
    qf = xn @ params["wq"]
    kvf = xn @ params["wkv"]
    kf, vf = kvf[..., :C], kvf[..., C:]

    def heads(t):
        return t.reshape(B, N, num_heads, hd).transpose(0, 2, 1, 3)

    qh, kh, vh = heads(qf), heads(kf), heads(vf)
    attn = jax.nn.softmax((qh @ kh.transpose(0, 1, 3, 2)) * scale, axis=-1)
    o = (attn @ vh).transpose(0, 2, 1, 3).reshape(B, N, C)
    x1 = x + o @ params["wproj"] + params["bproj"]

    xn2 = ln(x1, params["g2"], params["be2"])
    h = xn2 @ params["w1"] + params["b1"]
    hid = h.shape[-1]
    hp = jnp.pad(h.reshape(B, H, W, hid), ((0, 0), (1, 1), (1, 1), (0, 0)))
    conv = sum(hp[:, i:i + H, j:j + W, :] * params["dww"][i * 3 + j]
               for i in range(3) for j in range(3)) + params["dwb"]
    y = 0.5 * conv * (1.0 + lax.erf(conv * (1.0 / math.sqrt(2.0))))
    out = y.reshape(B, N, hid) @ params["w2"] + params["b2"]
    return x1 + out


# ----------------------------------------------------------------------------
# deterministic synthetic parameter init (mirrors Block._init_weights shapes;
# LayerNorm affines and biases are slightly randomized so the test actually
# exercises the affine-folding and bias paths)
# ----------------------------------------------------------------------------
def init_params(key, dim, mlp_ratio=4.0):
    hid = int(dim * mlp_ratio)
    ks = jax.random.split(key, 14)
    f32 = jnp.float32

    def tn(k, shape, std=0.02):  # trunc_normal_(std=0.02)
        return (std * jax.random.truncated_normal(k, -2.0, 2.0, shape)).astype(f32)

    dw_std = math.sqrt(2.0 / 9.0)  # conv fan_out = 3*3*hid // hid = 9
    return dict(
        g1=(1.0 + 0.1 * jax.random.normal(ks[6], (1, dim))).astype(f32),
        be1=(0.05 * jax.random.normal(ks[7], (1, dim))).astype(f32),
        g2=(1.0 + 0.1 * jax.random.normal(ks[8], (1, dim))).astype(f32),
        be2=(0.05 * jax.random.normal(ks[9], (1, dim))).astype(f32),
        wq=tn(ks[0], (dim, dim)),
        wkv=tn(ks[1], (dim, 2 * dim)),
        wproj=tn(ks[2], (dim, dim)),
        bproj=(0.02 * jax.random.normal(ks[10], (1, dim))).astype(f32),
        w1=tn(ks[3], (dim, hid)),
        b1=(0.02 * jax.random.normal(ks[11], (1, hid))).astype(f32),
        dww=(dw_std * jax.random.normal(ks[4], (9, hid))).astype(f32),
        dwb=(0.02 * jax.random.normal(ks[12], (1, hid))).astype(f32),
        w2=tn(ks[5], (hid, dim)),
        b2=(0.02 * jax.random.normal(ks[13], (1, dim))).astype(f32),
    )


if __name__ == "__main__":
    B, H, W = 2, 16, 8
    dim, num_heads, mlp_ratio = 64, 2, 4.0
    N = H * W

    key = jax.random.PRNGKey(0)
    kx, kp = jax.random.split(key)
    x = jax.random.normal(kx, (B, N, dim), jnp.float32)
    params = init_params(kp, dim, mlp_ratio)

    # small tile caps so the test exercises multiple q tiles and multiple MLP
    # row tiles (halo + border masking); defaults target real PVTv2 stages.
    fwd = jax.jit(functools.partial(
        block_forward, num_heads=num_heads, H=H, W=W,
        attn_q_tile_tokens=64, mlp_row_tile_tokens=64))
    out = fwd(x, params)
    jax.block_until_ready(out)

    assert out.shape == (B, N, dim) and out.dtype == jnp.float32

    ref = reference_forward(x, params, num_heads, H, W)
    max_err = float(jnp.max(jnp.abs(out - ref)))
    assert max_err < 5e-2, f"mismatch vs reference: max abs err {max_err}"

    print("KERNEL_OK")
</pallas_src>

<mosaic_0001>
module attributes {stable_mosaic.version = 11 : i64} {
  func.func @norm1_qkv_kernel(%arg0: i32, %arg1: i32, %arg2: memref<1x128x64xf32, #tpu.memory_space<vmem>>, %arg3: memref<64x64xbf16, #tpu.memory_space<vmem>>, %arg4: memref<64x64xbf16, #tpu.memory_space<vmem>>, %arg5: memref<64x64xbf16, #tpu.memory_space<vmem>>, %arg6: memref<1x64xf32, #tpu.memory_space<vmem>>, %arg7: memref<1x64xf32, #tpu.memory_space<vmem>>, %arg8: memref<1x64xf32, #tpu.memory_space<vmem>>, %arg9: memref<1x128x64xbf16, #tpu.memory_space<vmem>>, %arg10: memref<1x128x64xbf16, #tpu.memory_space<vmem>>, %arg11: memref<1x128x64xbf16, #tpu.memory_space<vmem>>) attributes {dimension_semantics = [#tpu.dimension_semantics<parallel>, #tpu.dimension_semantics<parallel>], iteration_bounds = array<i64: 2, 1>, scalar_prefetch = 0 : i64, scratch_operands = 0 : i64, tpu.core_type = #tpu.core_type<tc>, window_params = [{transform_indices = @transform_0, window_bounds = array<i64: 1, 128, 64>}, {pipeline_mode = #tpu.pipeline_mode<synchronous>, transform_indices = @transform_1, window_bounds = array<i64: 64, 64>}, {pipeline_mode = #tpu.pipeline_mode<synchronous>, transform_indices = @transform_2, window_bounds = array<i64: 64, 64>}, {pipeline_mode = #tpu.pipeline_mode<synchronous>, transform_indices = @transform_3, window_bounds = array<i64: 64, 64>}, {pipeline_mode = #tpu.pipeline_mode<synchronous>, transform_indices = @transform_4, window_bounds = array<i64: 1, 64>}, {pipeline_mode = #tpu.pipeline_mode<synchronous>, transform_indices = @transform_5, window_bounds = array<i64: 1, 64>}, {pipeline_mode = #tpu.pipeline_mode<synchronous>, transform_indices = @transform_6, window_bounds = array<i64: 1, 64>}, {transform_indices = @transform_7, window_bounds = array<i64: 1, 128, 64>}, {transform_indices = @transform_8, window_bounds = array<i64: 1, 128, 64>}, {transform_indices = @transform_9, window_bounds = array<i64: 1, 128, 64>}]} {
    %c0 = arith.constant 0 : index
    %c0_0 = arith.constant 0 : index
    %c0_1 = arith.constant 0 : index
    %0 = vector.load %arg2[%c0, %c0_0, %c0_1] : memref<1x128x64xf32, #tpu.memory_space<vmem>>, vector<1x128x64xf32>
    %1 = vector.shape_cast %0 : vector<1x128x64xf32> to vector<128x64xf32>
    %cst = arith.constant dense<0.000000e+00> : vector<128xf32>
    %2 = vector.multi_reduction <add>, %1, %cst [1] : vector<128x64xf32> to vector<128xf32>
    %3 = vector.shape_cast %2 : vector<128xf32> to vector<128x1xf32>
    %cst_2 = arith.constant 6.400000e+01 : f32
    %4 = vector.broadcast %cst_2 : f32 to vector<128x1xf32>
    %5 = arith.divf %3, %4 : vector<128x1xf32>
    %6 = vector.broadcast %5 : vector<128x1xf32> to vector<128x64xf32>
    %7 = arith.subf %1, %6 : vector<128x64xf32>
    %8 = arith.mulf %7, %7 : vector<128x64xf32>
    %cst_3 = arith.constant dense<0.000000e+00> : vector<128xf32>
    %9 = vector.multi_reduction <add>, %8, %cst_3 [1] : vector<128x64xf32> to vector<128xf32>
    %10 = vector.shape_cast %9 : vector<128xf32> to vector<128x1xf32>
    %cst_4 = arith.constant 6.400000e+01 : f32
    %11 = vector.broadcast %cst_4 : f32 to vector<128x1xf32>
    %12 = arith.divf %10, %11 : vector<128x1xf32>
    %13 = vector.broadcast %5 : vector<128x1xf32> to vector<128x64xf32>
    %14 = arith.subf %1, %13 : vector<128x64xf32>
    %cst_5 = arith.constant 9.99999974E-6 : f32
    %15 = vector.broadcast %cst_5 : f32 to vector<128x1xf32>
    %16 = arith.addf %12, %15 : vector<128x1xf32>
    %17 = math.rsqrt %16 : vector<128x1xf32>
    %18 = vector.broadcast %17 : vector<128x1xf32> to vector<128x64xf32>
    %19 = arith.mulf %14, %18 : vector<128x64xf32>
    %20 = arith.truncf %19 : vector<128x64xf32> to vector<128x64xbf16>
    %c0_6 = arith.constant 0 : index
    %c0_7 = arith.constant 0 : index
    %21 = vector.load %arg3[%c0_6, %c0_7] : memref<64x64xbf16, #tpu.memory_space<vmem>>, vector<64x64xbf16>
    %cst_8 = arith.constant dense<0.000000e+00> : vector<128x64xf32>
    %22 = tpu.matmul %20, %21, %cst_8 {dimension_numbers = #tpu.dot_dimension_numbers<[1], [0], [0], [1], [0, 0, 1, 1], [], []>} : vector<128x64xbf16>, vector<64x64xbf16>, vector<128x64xf32> -> vector<128x64xf32>
    %c0_9 = arith.constant 0 : index
    %c0_10 = arith.constant 0 : index
    %23 = vector.load %arg6[%c0_9, %c0_10] : memref<1x64xf32, #tpu.memory_space<vmem>>, vector<1x64xf32>
    %24 = vector.broadcast %23 : vector<1x64xf32> to vector<128x64xf32>
    %25 = arith.addf %22, %24 : vector<128x64xf32>
    %26 = arith.truncf %25 : vector<128x64xf32> to vector<128x64xbf16>
    %c0_11 = arith.constant 0 : index
    %c0_12 = arith.constant 0 : index
    %c0_13 = arith.constant 0 : index
    %27 = vector.load %arg9[%c0_11, %c0_12, %c0_13] : memref<1x128x64xbf16, #tpu.memory_space<vmem>>, vector<1x128x64xbf16>
    %28 = vector.shape_cast %27 : vector<1x128x64xbf16> to vector<128x64xbf16>
    %29 = vector.shape_cast %26 : vector<128x64xbf16> to vector<1x128x64xbf16>
    tpu.vector_store %arg9[%c0_11, %c0_12, %c0_13], %29 {strides = array<i32>} : memref<1x128x64xbf16, #tpu.memory_space<vmem>>, vector<1x128x64xbf16>,
    %c0_14 = arith.constant 0 : index
    %c0_15 = arith.constant 0 : index
    %30 = vector.load %arg4[%c0_14, %c0_15] : memref<64x64xbf16, #tpu.memory_space<vmem>>, vector<64x64xbf16>
    %cst_16 = arith.constant dense<0.000000e+00> : vector<128x64xf32>
    %31 = tpu.matmul %20, %30, %cst_16 {dimension_numbers = #tpu.dot_dimension_numbers<[1], [0], [0], [1], [0, 0, 1, 1], [], []>} : vector<128x64xbf16>, vector<64x64xbf16>, vector<128x64xf32> -> vector<128x64xf32>
    %c0_17 = arith.constant 0 : index
    %c0_18 = arith.constant 0 : index
    %32 = vector.load %arg7[%c0_17, %c0_18] : memref<1x64xf32, #tpu.memory_space<vmem>>, vector<1x64xf32>
    %33 = vector.broadcast %32 : vector<1x64xf32> to vector<128x64xf32>
    %34 = arith.addf %31, %33 : vector<128x64xf32>
    %35 = arith.truncf %34 : vector<128x64xf32> to vector<128x64xbf16>
    %c0_19 = arith.constant 0 : index
    %c0_20 = arith.constant 0 : index
    %c0_21 = arith.constant 0 : index
    %36 = vector.load %arg10[%c0_19, %c0_20, %c0_21] : memref<1x128x64xbf16, #tpu.memory_space<vmem>>, vector<1x128x64xbf16>
    %37 = vector.shape_cast %36 : vector<1x128x64xbf16> to vector<128x64xbf16>
    %38 = vector.shape_cast %35 : vector<128x64xbf16> to vector<1x128x64xbf16>
    tpu.vector_store %arg10[%c0_19, %c0_20, %c0_21], %38 {strides = array<i32>} : memref<1x128x64xbf16, #tpu.memory_space<vmem>>, vector<1x128x64xbf16>,
    %c0_22 = arith.constant 0 : index
    %c0_23 = arith.constant 0 : index
    %39 = vector.load %arg5[%c0_22, %c0_23] : memref<64x64xbf16, #tpu.memory_space<vmem>>, vector<64x64xbf16>
    %cst_24 = arith.constant dense<0.000000e+00> : vector<128x64xf32>
    %40 = tpu.matmul %20, %39, %cst_24 {dimension_numbers = #tpu.dot_dimension_numbers<[1], [0], [0], [1], [0, 0, 1, 1], [], []>} : vector<128x64xbf16>, vector<64x64xbf16>, vector<128x64xf32> -> vector<128x64xf32>
    %c0_25 = arith.constant 0 : index
    %c0_26 = arith.constant 0 : index
    %41 = vector.load %arg8[%c0_25, %c0_26] : memref<1x64xf32, #tpu.memory_space<vmem>>, vector<1x64xf32>
    %42 = vector.broadcast %41 : vector<1x64xf32> to vector<128x64xf32>
    %43 = arith.addf %40, %42 : vector<128x64xf32>
    %44 = arith.truncf %43 : vector<128x64xf32> to vector<128x64xbf16>
    %c0_27 = arith.constant 0 : index
    %c0_28 = arith.constant 0 : index
    %c0_29 = arith.constant 0 : index
    %45 = vector.load %arg11[%c0_27, %c0_28, %c0_29] : memref<1x128x64xbf16, #tpu.memory_space<vmem>>, vector<1x128x64xbf16>
    %46 = vector.shape_cast %45 : vector<1x128x64xbf16> to vector<128x64xbf16>
    %47 = vector.shape_cast %44 : vector<128x64xbf16> to vector<1x128x64xbf16>
    tpu.vector_store %arg11[%c0_27, %c0_28, %c0_29], %47 {strides = array<i32>} : memref<1x128x64xbf16, #tpu.memory_space<vmem>>, vector<1x128x64xbf16>,
    return
  }
  func.func @transform_0(%arg0: i32, %arg1: i32) -> (i32, i32, i32) {
    %c0_i32 = arith.constant 0 : i32
    %c0_i32_0 = arith.constant 0 : i32
    return %arg0, %arg1, %c0_i32 : i32, i32, i32
  }
  func.func @transform_1(%arg0: i32, %arg1: i32) -> (i32, i32) {
    %c0_i32 = arith.constant 0 : i32
    %c0_i32_0 = arith.constant 0 : i32
    %c0_i32_1 = arith.constant 0 : i32
    return %c0_i32, %c0_i32_0 : i32, i32
  }
  func.func @transform_2(%arg0: i32, %arg1: i32) -> (i32, i32) {
    %c0_i32 = arith.constant 0 : i32
    %c0_i32_0 = arith.constant 0 : i32
    %c0_i32_1 = arith.constant 0 : i32
    return %c0_i32, %c0_i32_0 : i32, i32
  }
  func.func @transform_3(%arg0: i32, %arg1: i32) -> (i32, i32) {
    %c0_i32 = arith.constant 0 : i32
    %c0_i32_0 = arith.constant 0 : i32
    %c0_i32_1 = arith.constant 0 : i32
    return %c0_i32, %c0_i32_0 : i32, i32
  }
  func.func @transform_4(%arg0: i32, %arg1: i32) -> (i32, i32) {
    %c0_i32 = arith.constant 0 : i32
    %c0_i32_0 = arith.constant 0 : i32
    %c0_i32_1 = arith.constant 0 : i32
    return %c0_i32, %c0_i32_0 : i32, i32
  }
  func.func @transform_5(%arg0: i32, %arg1: i32) -> (i32, i32) {
    %c0_i32 = arith.constant 0 : i32
    %c0_i32_0 = arith.constant 0 : i32
    %c0_i32_1 = arith.constant 0 : i32
    return %c0_i32, %c0_i32_0 : i32, i32
  }
  func.func @transform_6(%arg0: i32, %arg1: i32) -> (i32, i32) {
    %c0_i32 = arith.constant 0 : i32
    %c0_i32_0 = arith.constant 0 : i32
    %c0_i32_1 = arith.constant 0 : i32
    return %c0_i32, %c0_i32_0 : i32, i32
  }
  func.func @transform_7(%arg0: i32, %arg1: i32) -> (i32, i32, i32) {
    %c0_i32 = arith.constant 0 : i32
    %c0_i32_0 = arith.constant 0 : i32
    return %arg0, %arg1, %c0_i32 : i32, i32, i32
  }
  func.func @transform_8(%arg0: i32, %arg1: i32) -> (i32, i32, i32) {
    %c0_i32 = arith.constant 0 : i32
    %c0_i32_0 = arith.constant 0 : i32
    return %arg0, %arg1, %c0_i32 : i32, i32, i32
  }
  func.func @transform_9(%arg0: i32, %arg1: i32) -> (i32, i32, i32) {
    %c0_i32 = arith.constant 0 : i32
    %c0_i32_0 = arith.constant 0 : i32
    return %arg0, %arg1, %c0_i32 : i32, i32, i32
  }
}

module attributes {stable_mosaic.version = 11 : i64} {
  func.func @attn_proj_kernel(%arg0: i32, %arg1: i32, %arg2: memref<1x64x64xbf16, #tpu.memory_space<vmem>>, %arg3: memref<1x128x64xbf16, #tpu.memory_space<vmem>>, %arg4: memref<1x128x64xbf16, #tpu.memory_space<vmem>>, %arg5: memref<1x64x64xf32, #tpu.memory_space<vmem>>, %arg6: memref<64x64xbf16, #tpu.memory_space<vmem>>, %arg7: memref<1x64xf32, #tpu.memory_space<vmem>>, %arg8: memref<1x64x64xf32, #tpu.memory_space<vmem>>, %arg9: memref<64x64xbf16, #tpu.memory_space<vmem>>) attributes {dimension_semantics = [#tpu.dimension_semantics<parallel>, #tpu.dimension_semantics<parallel>], iteration_bounds = array<i64: 2, 2>, scalar_prefetch = 0 : i64, scratch_operands = 1 : i64, tpu.core_type = #tpu.core_type<tc>, window_params = [{transform_indices = @transform_0, window_bounds = array<i64: 1, 64, 64>}, {transform_indices = @transform_1, window_bounds = array<i64: 1, 128, 64>}, {transform_indices = @transform_2, window_bounds = array<i64: 1, 128, 64>}, {transform_indices = @transform_3, window_bounds = array<i64: 1, 64, 64>}, {pipeline_mode = #tpu.pipeline_mode<synchronous>, transform_indices = @transform_4, window_bounds = array<i64: 64, 64>}, {pipeline_mode = #tpu.pipeline_mode<synchronous>, transform_indices = @transform_5, window_bounds = array<i64: 1, 64>}, {transform_indices = @transform_6, window_bounds = array<i64: 1, 64, 64>}]} {
    %c0 = arith.constant 0 : index
    %c0_0 = arith.constant 0 : index
    %c0_1 = arith.constant 0 : index
    %0 = vector.load %arg2[%c0, %c0_0, %c0_1] : memref<1x64x64xbf16, #tpu.memory_space<vmem>>, vector<1x64x64xbf16>
    %1 = vector.shape_cast %0 : vector<1x64x64xbf16> to vector<64x64xbf16>
    %c0_2 = arith.constant 0 : index
    %c0_3 = arith.constant 0 : index
    %c0_4 = arith.constant 0 : index
    %2 = vector.load %arg3[%c0_2, %c0_3, %c0_4] : memref<1x128x64xbf16, #tpu.memory_space<vmem>>, vector<1x128x64xbf16>
    %3 = vector.shape_cast %2 : vector<1x128x64xbf16> to vector<128x64xbf16>
    %c0_5 = arith.constant 0 : index
    %c0_6 = arith.constant 0 : index
    %c0_7 = arith.constant 0 : index
    %4 = vector.load %arg4[%c0_5, %c0_6, %c0_7] : memref<1x128x64xbf16, #tpu.memory_space<vmem>>, vector<1x128x64xbf16>
    %5 = vector.shape_cast %4 : vector<1x128x64xbf16> to vector<128x64xbf16>
    %6 = vector.extract_strided_slice %1 {offsets = [0, 0], sizes = [64, 32], strides = [1, 1]} : vector<64x64xbf16> to vector<64x32xbf16>
    %7 = vector.extract_strided_slice %3 {offsets = [0, 0], sizes = [128, 32], strides = [1, 1]} : vector<128x64xbf16> to vector<128x32xbf16>
    %8 = vector.extract_strided_slice %5 {offsets = [0, 0], sizes = [128, 32], strides = [1, 1]} : vector<128x64xbf16> to vector<128x32xbf16>
    %cst = arith.constant dense<0.000000e+00> : vector<64x128xf32>
    %9 = tpu.matmul %6, %7, %cst {dimension_numbers = #tpu.dot_dimension_numbers<[1], [1], [0], [0], [0, 0, 1, 0], [], []>} : vector<64x32xbf16>, vector<128x32xbf16>, vector<64x128xf32> -> vector<64x128xf32>
    %cst_8 = arith.constant dense<0xFF800000> : vector<64xf32>
    %10 = vector.multi_reduction <maximumf>, %9, %cst_8 [1] : vector<64x128xf32> to vector<64xf32>
    %11 = vector.shape_cast %10 : vector<64xf32> to vector<64x1xf32>
    %12 = vector.broadcast %11 : vector<64x1xf32> to vector<64x128xf32>
    %13 = arith.subf %9, %12 : vector<64x128xf32>
    %14 = math.exp %13 : vector<64x128xf32>
    %cst_9 = arith.constant dense<0.000000e+00> : vector<64xf32>
    %15 = vector.multi_reduction <add>, %14, %cst_9 [1] : vector<64x128xf32> to vector<64xf32>
    %16 = vector.shape_cast %15 : vector<64xf32> to vector<64x1xf32>
    %17 = arith.truncf %14 : vector<64x128xf32> to vector<64x128xbf16>
    %cst_10 = arith.constant dense<0.000000e+00> : vector<64x32xf32>
    %18 = tpu.matmul %17, %8, %cst_10 {dimension_numbers = #tpu.dot_dimension_numbers<[1], [0], [0], [1], [0, 0, 1, 1], [], []>} : vector<64x128xbf16>, vector<128x32xbf16>, vector<64x32xf32> -> vector<64x32xf32>
    %19 = tpu.reciprocal %16 {approx = true} : vector<64x1xf32> -> vector<64x1xf32>
    %20 = vector.broadcast %19 : vector<64x1xf32> to vector<64x32xf32>
    %21 = arith.mulf %18, %20 : vector<64x32xf32>
    %22 = arith.truncf %21 : vector<64x32xf32> to vector<64x32xbf16>
    %c0_11 = arith.constant 0 : index
    %c0_12 = arith.constant 0 : index
    %23 = vector.load %arg9[%c0_11, %c0_12] : memref<64x64xbf16, #tpu.memory_space<vmem>>, vector<64x32xbf16>
    tpu.vector_store %arg9[%c0_11, %c0_12], %22 {strides = array<i32>} : memref<64x64xbf16, #tpu.memory_space<vmem>>, vector<64x32xbf16>,
    %24 = vector.extract_strided_slice %1 {offsets = [0, 32], sizes = [64, 32], strides = [1, 1]} : vector<64x64xbf16> to vector<64x32xbf16>
    %25 = vector.extract_strided_slice %3 {offsets = [0, 32], sizes = [128, 32], strides = [1, 1]} : vector<128x64xbf16> to vector<128x32xbf16>
    %26 = vector.extract_strided_slice %5 {offsets = [0, 32], sizes = [128, 32], strides = [1, 1]} : vector<128x64xbf16> to vector<128x32xbf16>
    %cst_13 = arith.constant dense<0.000000e+00> : vector<64x128xf32>
    %27 = tpu.matmul %24, %25, %cst_13 {dimension_numbers = #tpu.dot_dimension_numbers<[1], [1], [0], [0], [0, 0, 1, 0], [], []>} : vector<64x32xbf16>, vector<128x32xbf16>, vector<64x128xf32> -> vector<64x128xf32>
    %cst_14 = arith.constant dense<0xFF800000> : vector<64xf32>
    %28 = vector.multi_reduction <maximumf>, %27, %cst_14 [1] : vector<64x128xf32> to vector<64xf32>
    %29 = vector.shape_cast %28 : vector<64xf32> to vector<64x1xf32>
    %30 = vector.broadcast %29 : vector<64x1xf32> to vector<64x128xf32>
    %31 = arith.subf %27, %30 : vector<64x128xf32>
    %32 = math.exp %31 : vector<64x128xf32>
    %cst_15 = arith.constant dense<0.000000e+00> : vector<64xf32>
    %33 = vector.multi_reduction <add>, %32, %cst_15 [1] : vector<64x128xf32> to vector<64xf32>
    %34 = vector.shape_cast %33 : vector<64xf32> to vector<64x1xf32>
    %35 = arith.truncf %32 : vector<64x128xf32> to vector<64x128xbf16>
    %cst_16 = arith.constant dense<0.000000e+00> : vector<64x32xf32>
    %36 = tpu.matmul %35, %26, %cst_16 {dimension_numbers = #tpu.dot_dimension_numbers<[1], [0], [0], [1], [0, 0, 1, 1], [], []>} : vector<64x128xbf16>, vector<128x32xbf16>, vector<64x32xf32> -> vector<64x32xf32>
    %37 = tpu.reciprocal %34 {approx = true} : vector<64x1xf32> -> vector<64x1xf32>
    %38 = vector.broadcast %37 : vector<64x1xf32> to vector<64x32xf32>
    %39 = arith.mulf %36, %38 : vector<64x32xf32>
    %40 = arith.truncf %39 : vector<64x32xf32> to vector<64x32xbf16>
    %c0_17 = arith.constant 0 : index
    %c32 = arith.constant 32 : index
    %41 = vector.load %arg9[%c0_17, %c32] : memref<64x64xbf16, #tpu.memory_space<vmem>>, vector<64x32xbf16>
    tpu.vector_store %arg9[%c0_17, %c32], %40 {strides = array<i32>} : memref<64x64xbf16, #tpu.memory_space<vmem>>, vector<64x32xbf16>,
    %c0_18 = arith.constant 0 : index
    %c0_19 = arith.constant 0 : index
    %42 = vector.load %arg9[%c0_18, %c0_19] : memref<64x64xbf16, #tpu.memory_space<vmem>>, vector<64x64xbf16>
    %c0_20 = arith.constant 0 : index
    %c0_21 = arith.constant 0 : index
    %43 = vector.load %arg6[%c0_20, %c0_21] : memref<64x64xbf16, #tpu.memory_space<vmem>>, vector<64x64xbf16>
    %cst_22 = arith.constant dense<0.000000e+00> : vector<64x64xf32>
    %44 = tpu.matmul %42, %43, %cst_22 {dimension_numbers = #tpu.dot_dimension_numbers<[1], [0], [0], [1], [0, 0, 1, 1], [], []>} : vector<64x64xbf16>, vector<64x64xbf16>, vector<64x64xf32> -> vector<64x64xf32>
    %c0_23 = arith.constant 0 : index
    %c0_24 = arith.constant 0 : index
    %c0_25 = arith.constant 0 : index
    %45 = vector.load %arg5[%c0_23, %c0_24, %c0_25] : memref<1x64x64xf32, #tpu.memory_space<vmem>>, vector<1x64x64xf32>
    %46 = vector.shape_cast %45 : vector<1x64x64xf32> to vector<64x64xf32>
    %47 = arith.addf %46, %44 : vector<64x64xf32>
    %c0_26 = arith.constant 0 : index
    %c0_27 = arith.constant 0 : index
    %48 = vector.load %arg7[%c0_26, %c0_27] : memref<1x64xf32, #tpu.memory_space<vmem>>, vector<1x64xf32>
    %49 = vector.broadcast %48 : vector<1x64xf32> to vector<64x64xf32>
    %50 = arith.addf %47, %49 : vector<64x64xf32>
    %c0_28 = arith.constant 0 : index
    %c0_29 = arith.constant 0 : index
    %c0_30 = arith.constant 0 : index
    %51 = vector.load %arg8[%c0_28, %c0_29, %c0_30] : memref<1x64x64xf32, #tpu.memory_space<vmem>>, vector<1x64x64xf32>
    %52 = vector.shape_cast %51 : vector<1x64x64xf32> to vector<64x64xf32>
    %53 = vector.shape_cast %50 : vector<64x64xf32> to vector<1x64x64xf32>
    tpu.vector_store %arg8[%c0_28, %c0_29, %c0_30], %53 {strides = array<i32>} : memref<1x64x64xf32, #tpu.memory_space<vmem>>, vector<1x64x64xf32>,
    return
  }
  func.func @transform_0(%arg0: i32, %arg1: i32) -> (i32, i32, i32) {
    %c0_i32 = arith.constant 0 : i32
    %c0_i32_0 = arith.constant 0 : i32
    return %arg0, %arg1, %c0_i32 : i32, i32, i32
  }
  func.func @transform_1(%arg0: i32, %arg1: i32) -> (i32, i32, i32) {
    %c0_i32 = arith.constant 0 : i32
    %c0_i32_0 = arith.constant 0 : i32
    %c0_i32_1 = arith.constant 0 : i32
    return %arg0, %c0_i32, %c0_i32_0 : i32, i32, i32
  }
  func.func @transform_2(%arg0: i32, %arg1: i32) -> (i32, i32, i32) {
    %c0_i32 = arith.constant 0 : i32
    %c0_i32_0 = arith.constant 0 : i32
    %c0_i32_1 = arith.constant 0 : i32
    return %arg0, %c0_i32, %c0_i32_0 : i32, i32, i32
  }
  func.func @transform_3(%arg0: i32, %arg1: i32) -> (i32, i32, i32) {
    %c0_i32 = arith.constant 0 : i32
    %c0_i32_0 = arith.constant 0 : i32
    return %arg0, %arg1, %c0_i32 : i32, i32, i32
  }
  func.func @transform_4(%arg0: i32, %arg1: i32) -> (i32, i32) {
    %c0_i32 = arith.constant 0 : i32
    %c0_i32_0 = arith.constant 0 : i32
    %c0_i32_1 = arith.constant 0 : i32
    return %c0_i32, %c0_i32_0 : i32, i32
  }
  func.func @transform_5(%arg0: i32, %arg1: i32) -> (i32, i32) {
    %c0_i32 = arith.constant 0 : i32
    %c0_i32_0 = arith.constant 0 : i32
    %c0_i32_1 = arith.constant 0 : i32
    return %c0_i32, %c0_i32_0 : i32, i32
  }
  func.func @transform_6(%arg0: i32, %arg1: i32) -> (i32, i32, i32) {
    %c0_i32 = arith.constant 0 : i32
    %c0_i32_0 = arith.constant 0 : i32
    return %arg0, %arg1, %c0_i32 : i32, i32, i32
  }
}

module attributes {stable_mosaic.version = 11 : i64} {
  func.func @mlp_fused_kernel(%arg0: i32, %arg1: i32, %arg2: memref<1x64x64xf32, #tpu.memory_space<vmem>>, %arg3: memref<1x64x64xf32, #tpu.memory_space<vmem>>, %arg4: memref<1x64x64xf32, #tpu.memory_space<vmem>>, %arg5: memref<64x256xbf16, #tpu.memory_space<vmem>>, %arg6: memref<1x256xf32, #tpu.memory_space<vmem>>, %arg7: memref<9x256xf32, #tpu.memory_space<vmem>>, %arg8: memref<1x256xf32, #tpu.memory_space<vmem>>, %arg9: memref<256x64xbf16, #tpu.memory_space<vmem>>, %arg10: memref<1x64xf32, #tpu.memory_space<vmem>>, %arg11: memref<1x64x64xf32, #tpu.memory_space<vmem>>, %arg12: memref<10x10x256xf32, #tpu.memory_space<vmem>>) attributes {dimension_semantics = [#tpu.dimension_semantics<parallel>, #tpu.dimension_semantics<parallel>], iteration_bounds = array<i64: 2, 2>, scalar_prefetch = 0 : i64, scratch_operands = 1 : i64, tpu.core_type = #tpu.core_type<tc>, window_params = [{transform_indices = @transform_0, window_bounds = array<i64: 1, 64, 64>}, {transform_indices = @transform_1, window_bounds = array<i64: 1, 64, 64>}, {transform_indices = @transform_2, window_bounds = array<i64: 1, 64, 64>}, {pipeline_mode = #tpu.pipeline_mode<synchronous>, transform_indices = @transform_3, window_bounds = array<i64: 64, 256>}, {pipeline_mode = #tpu.pipeline_mode<synchronous>, transform_indices = @transform_4, window_bounds = array<i64: 1, 256>}, {pipeline_mode = #tpu.pipeline_mode<synchronous>, transform_indices = @transform_5, window_bounds = array<i64: 9, 256>}, {pipeline_mode = #tpu.pipeline_mode<synchronous>, transform_indices = @transform_6, window_bounds = array<i64: 1, 256>}, {pipeline_mode = #tpu.pipeline_mode<synchronous>, transform_indices = @transform_7, window_bounds = array<i64: 256, 64>}, {pipeline_mode = #tpu.pipeline_mode<synchronous>, transform_indices = @transform_8, window_bounds = array<i64: 1, 64>}, {transform_indices = @transform_9, window_bounds = array<i64: 1, 64, 64>}]} {
    %c0 = arith.constant 0 : index
    %c0_0 = arith.constant 0 : index
    %c0_1 = arith.constant 0 : index
    %0 = vector.load %arg2[%c0, %c0_0, %c0_1] : memref<1x64x64xf32, #tpu.memory_space<vmem>>, vector<1x64x64xf32>
    %1 = vector.shape_cast %0 : vector<1x64x64xf32> to vector<64x64xf32>
    %cst = arith.constant dense<0.000000e+00> : vector<64xf32>
    %2 = vector.multi_reduction <add>, %1, %cst [1] : vector<64x64xf32> to vector<64xf32>
    %3 = vector.shape_cast %2 : vector<64xf32> to vector<64x1xf32>
    %cst_2 = arith.constant 6.400000e+01 : f32
    %4 = vector.broadcast %cst_2 : f32 to vector<64x1xf32>
    %5 = arith.divf %3, %4 : vector<64x1xf32>
    %6 = vector.broadcast %5 : vector<64x1xf32> to vector<64x64xf32>
    %7 = arith.subf %1, %6 : vector<64x64xf32>
    %8 = arith.mulf %7, %7 : vector<64x64xf32>
    %cst_3 = arith.constant dense<0.000000e+00> : vector<64xf32>
    %9 = vector.multi_reduction <add>, %8, %cst_3 [1] : vector<64x64xf32> to vector<64xf32>
    %10 = vector.shape_cast %9 : vector<64xf32> to vector<64x1xf32>
    %cst_4 = arith.constant 6.400000e+01 : f32
    %11 = vector.broadcast %cst_4 : f32 to vector<64x1xf32>
    %12 = arith.divf %10, %11 : vector<64x1xf32>
    %13 = vector.broadcast %5 : vector<64x1xf32> to vector<64x64xf32>
    %14 = arith.subf %1, %13 : vector<64x64xf32>
    %cst_5 = arith.constant 9.99999974E-6 : f32
    %15 = vector.broadcast %cst_5 : f32 to vector<64x1xf32>
    %16 = arith.addf %12, %15 : vector<64x1xf32>
    %17 = math.rsqrt %16 : vector<64x1xf32>
    %18 = vector.broadcast %17 : vector<64x1xf32> to vector<64x64xf32>
    %19 = arith.mulf %14, %18 : vector<64x64xf32>
    %20 = arith.truncf %19 : vector<64x64xf32> to vector<64x64xbf16>
    %c0_6 = arith.constant 0 : index
    %c0_7 = arith.constant 0 : index
    %21 = vector.load %arg5[%c0_6, %c0_7] : memref<64x256xbf16, #tpu.memory_space<vmem>>, vector<64x256xbf16>
    %cst_8 = arith.constant dense<0.000000e+00> : vector<64x256xf32>
    %22 = tpu.matmul %20, %21, %cst_8 {dimension_numbers = #tpu.dot_dimension_numbers<[1], [0], [0], [1], [0, 0, 1, 1], [], []>} : vector<64x64xbf16>, vector<64x256xbf16>, vector<64x256xf32> -> vector<64x256xf32>
    %c0_9 = arith.constant 0 : index
    %c0_10 = arith.constant 0 : index
    %23 = vector.load %arg6[%c0_9, %c0_10] : memref<1x256xf32, #tpu.memory_space<vmem>>, vector<1x256xf32>
    %24 = vector.broadcast %23 : vector<1x256xf32> to vector<64x256xf32>
    %25 = arith.addf %22, %24 : vector<64x256xf32>
    %c0_i32 = arith.constant 0 : i32
    %26 = arith.cmpi sgt, %arg1, %c0_i32 : i32
    %c0_11 = arith.constant 0 : index
    %c56 = arith.constant 56 : index
    %c0_12 = arith.constant 0 : index
    %27 = vector.load %arg3[%c0_11, %c56, %c0_12] : memref<1x64x64xf32, #tpu.memory_space<vmem>>, vector<1x8x64xf32>
    %28 = vector.shape_cast %27 : vector<1x8x64xf32> to vector<8x64xf32>
    %cst_13 = arith.constant dense<0.000000e+00> : vector<8xf32>
    %29 = vector.multi_reduction <add>, %28, %cst_13 [1] : vector<8x64xf32> to vector<8xf32>
    %30 = vector.shape_cast %29 : vector<8xf32> to vector<8x1xf32>
    %cst_14 = arith.constant 6.400000e+01 : f32
    %31 = vector.broadcast %cst_14 : f32 to vector<8x1xf32>
    %32 = arith.divf %30, %31 : vector<8x1xf32>
    %33 = vector.broadcast %32 : vector<8x1xf32> to vector<8x64xf32>
    %34 = arith.subf %28, %33 : vector<8x64xf32>
    %35 = arith.mulf %34, %34 : vector<8x64xf32>
    %cst_15 = arith.constant dense<0.000000e+00> : vector<8xf32>
    %36 = vector.multi_reduction <add>, %35, %cst_15 [1] : vector<8x64xf32> to vector<8xf32>
    %37 = vector.shape_cast %36 : vector<8xf32> to vector<8x1xf32>
    %cst_16 = arith.constant 6.400000e+01 : f32
    %38 = vector.broadcast %cst_16 : f32 to vector<8x1xf32>
    %39 = arith.divf %37, %38 : vector<8x1xf32>
    %40 = vector.broadcast %32 : vector<8x1xf32> to vector<8x64xf32>
    %41 = arith.subf %28, %40 : vector<8x64xf32>
    %cst_17 = arith.constant 9.99999974E-6 : f32
    %42 = vector.broadcast %cst_17 : f32 to vector<8x1xf32>
    %43 = arith.addf %39, %42 : vector<8x1xf32>
    %44 = math.rsqrt %43 : vector<8x1xf32>
    %45 = vector.broadcast %44 : vector<8x1xf32> to vector<8x64xf32>
    %46 = arith.mulf %41, %45 : vector<8x64xf32>
    %47 = arith.truncf %46 : vector<8x64xf32> to vector<8x64xbf16>
    %c0_18 = arith.constant 0 : index
    %c0_19 = arith.constant 0 : index
    %48 = vector.load %arg5[%c0_18, %c0_19] : memref<64x256xbf16, #tpu.memory_space<vmem>>, vector<64x256xbf16>
    %cst_20 = arith.constant dense<0.000000e+00> : vector<8x256xf32>
    %49 = tpu.matmul %47, %48, %cst_20 {dimension_numbers = #tpu.dot_dimension_numbers<[1], [0], [0], [1], [0, 0, 1, 1], [], []>} : vector<8x64xbf16>, vector<64x256xbf16>, vector<8x256xf32> -> vector<8x256xf32>
    %c0_21 = arith.constant 0 : index
    %c0_22 = arith.constant 0 : index
    %50 = vector.load %arg6[%c0_21, %c0_22] : memref<1x256xf32, #tpu.memory_space<vmem>>, vector<1x256xf32>
    %51 = vector.broadcast %50 : vector<1x256xf32> to vector<8x256xf32>
    %52 = arith.addf %49, %51 : vector<8x256xf32>
    %cst_23 = arith.constant 0.000000e+00 : f32
    %53 = vector.broadcast %cst_23 : f32 to vector<8x256xf32>
    %54 = arith.select %26, %52, %53 : vector<8x256xf32>
    %c1_i32 = arith.constant 1 : i32
    %55 = arith.cmpi slt, %arg1, %c1_i32 : i32
    %c0_24 = arith.constant 0 : index
    %c0_25 = arith.constant 0 : index
    %c0_26 = arith.constant 0 : index
    %56 = vector.load %arg4[%c0_24, %c0_25, %c0_26] : memref<1x64x64xf32, #tpu.memory_space<vmem>>, vector<1x8x64xf32>
    %57 = vector.shape_cast %56 : vector<1x8x64xf32> to vector<8x64xf32>
    %cst_27 = arith.constant dense<0.000000e+00> : vector<8xf32>
    %58 = vector.multi_reduction <add>, %57, %cst_27 [1] : vector<8x64xf32> to vector<8xf32>
    %59 = vector.shape_cast %58 : vector<8xf32> to vector<8x1xf32>
    %cst_28 = arith.constant 6.400000e+01 : f32
    %60 = vector.broadcast %cst_28 : f32 to vector<8x1xf32>
    %61 = arith.divf %59, %60 : vector<8x1xf32>
    %62 = vector.broadcast %61 : vector<8x1xf32> to vector<8x64xf32>
    %63 = arith.subf %57, %62 : vector<8x64xf32>
    %64 = arith.mulf %63, %63 : vector<8x64xf32>
    %cst_29 = arith.constant dense<0.000000e+00> : vector<8xf32>
    %65 = vector.multi_reduction <add>, %64, %cst_29 [1] : vector<8x64xf32> to vector<8xf32>
    %66 = vector.shape_cast %65 : vector<8xf32> to vector<8x1xf32>
    %cst_30 = arith.constant 6.400000e+01 : f32
    %67 = vector.broadcast %cst_30 : f32 to vector<8x1xf32>
    %68 = arith.divf %66, %67 : vector<8x1xf32>
    %69 = vector.broadcast %61 : vector<8x1xf32> to vector<8x64xf32>
    %70 = arith.subf %57, %69 : vector<8x64xf32>
    %cst_31 = arith.constant 9.99999974E-6 : f32
    %71 = vector.broadcast %cst_31 : f32 to vector<8x1xf32>
    %72 = arith.addf %68, %71 : vector<8x1xf32>
    %73 = math.rsqrt %72 : vector<8x1xf32>
    %74 = vector.broadcast %73 : vector<8x1xf32> to vector<8x64xf32>
    %75 = arith.mulf %70, %74 : vector<8x64xf32>
    %76 = arith.truncf %75 : vector<8x64xf32> to vector<8x64xbf16>
    %c0_32 = arith.constant 0 : index
    %c0_33 = arith.constant 0 : index
    %77 = vector.load %arg5[%c0_32, %c0_33] : memref<64x256xbf16, #tpu.memory_space<vmem>>, vector<64x256xbf16>
    %cst_34 = arith.constant dense<0.000000e+00> : vector<8x256xf32>
    %78 = tpu.matmul %76, %77, %cst_34 {dimension_numbers = #tpu.dot_dimension_numbers<[1], [0], [0], [1], [0, 0, 1, 1], [], []>} : vector<8x64xbf16>, vector<64x256xbf16>, vector<8x256xf32> -> vector<8x256xf32>
    %c0_35 = arith.constant 0 : index
    %c0_36 = arith.constant 0 : index
    %79 = vector.load %arg6[%c0_35, %c0_36] : memref<1x256xf32, #tpu.memory_space<vmem>>, vector<1x256xf32>
    %80 = vector.broadcast %79 : vector<1x256xf32> to vector<8x256xf32>
    %81 = arith.addf %78, %80 : vector<8x256xf32>
    %cst_37 = arith.constant 0.000000e+00 : f32
    %82 = vector.broadcast %cst_37 : f32 to vector<8x256xf32>
    %83 = arith.select %55, %81, %82 : vector<8x256xf32>
    %84 = vector.shape_cast %25 : vector<64x256xf32> to vector<8x8x256xf32>
    %c1 = arith.constant 1 : index
    %c1_38 = arith.constant 1 : index
    %c0_39 = arith.constant 0 : index
    %85 = vector.load %arg12[%c1, %c1_38, %c0_39] : memref<10x10x256xf32, #tpu.memory_space<vmem>>, vector<8x8x256xf32>
    tpu.vector_store %arg12[%c1, %c1_38, %c0_39], %84 {strides = array<i32>} : memref<10x10x256xf32, #tpu.memory_space<vmem>>, vector<8x8x256xf32>,
    %86 = vector.shape_cast %54 : vector<8x256xf32> to vector<1x8x256xf32>
    %c0_40 = arith.constant 0 : index
    %c1_41 = arith.constant 1 : index
    %c0_42 = arith.constant 0 : index
    %87 = vector.load %arg12[%c0_40, %c1_41, %c0_42] : memref<10x10x256xf32, #tpu.memory_space<vmem>>, vector<1x8x256xf32>
    tpu.vector_store %arg12[%c0_40, %c1_41, %c0_42], %86 {strides = array<i32>} : memref<10x10x256xf32, #tpu.memory_space<vmem>>, vector<1x8x256xf32>,
    %88 = vector.shape_cast %83 : vector<8x256xf32> to vector<1x8x256xf32>
    %c9 = arith.constant 9 : index
    %c1_43 = arith.constant 1 : index
    %c0_44 = arith.constant 0 : index
    %89 = vector.load %arg12[%c9, %c1_43, %c0_44] : memref<10x10x256xf32, #tpu.memory_space<vmem>>, vector<1x8x256xf32>
    tpu.vector_store %arg12[%c9, %c1_43, %c0_44], %88 {strides = array<i32>} : memref<10x10x256xf32, #tpu.memory_space<vmem>>, vector<1x8x256xf32>,
    %cst_45 = arith.constant 0.000000e+00 : f32
    %90 = vector.broadcast %cst_45 : f32 to vector<10x1x256xf32>
    %c0_46 = arith.constant 0 : index
    %c0_47 = arith.constant 0 : index
    %c0_48 = arith.constant 0 : index
    %91 = vector.load %arg12[%c0_46, %c0_47, %c0_48] : memref<10x10x256xf32, #tpu.memory_space<vmem>>, vector<10x1x256xf32>
    tpu.vector_store %arg12[%c0_46, %c0_47, %c0_48], %90 {strides = array<i32>} : memref<10x10x256xf32, #tpu.memory_space<vmem>>, vector<10x1x256xf32>,
    %c0_49 = arith.constant 0 : index
    %c9_50 = arith.constant 9 : index
    %c0_51 = arith.constant 0 : index
    %92 = vector.load %arg12[%c0_49, %c9_50, %c0_51] : memref<10x10x256xf32, #tpu.memory_space<vmem>>, vector<10x1x256xf32>
    tpu.vector_store %arg12[%c0_49, %c9_50, %c0_51], %90 {strides = array<i32>} : memref<10x10x256xf32, #tpu.memory_space<vmem>>, vector<10x1x256xf32>,
    %c0_52 = arith.constant 0 : index
    %c0_53 = arith.constant 0 : index
    %93 = vector.load %arg7[%c0_52, %c0_53] : memref<9x256xf32, #tpu.memory_space<vmem>>, vector<9x256xf32>
    %cst_54 = arith.constant 0.000000e+00 : f32
    %94 = vector.broadcast %cst_54 : f32 to vector<8x8x256xf32>
    %c0_55 = arith.constant 0 : index
    %c0_56 = arith.constant 0 : index
    %c0_57 = arith.constant 0 : index
    %95 = vector.load %arg12[%c0_55, %c0_56, %c0_57] : memref<10x10x256xf32, #tpu.memory_space<vmem>>, vector<10x8x256xf32>
    %96 = vector.extract_strided_slice %95 {offsets = [0, 0, 0], sizes = [8, 8, 256], strides = [1, 1, 1]} : vector<10x8x256xf32> to vector<8x8x256xf32>
    %97 = vector.extract_strided_slice %93 {offsets = [0, 0], sizes = [1, 256], strides = [1, 1]} : vector<9x256xf32> to vector<1x256xf32>
    %98 = vector.shape_cast %97 : vector<1x256xf32> to vector<256xf32>
    %99 = vector.shape_cast %98 : vector<256xf32> to vector<1x1x256xf32>
    %100 = vector.broadcast %99 : vector<1x1x256xf32> to vector<8x8x256xf32>
    %101 = arith.mulf %96, %100 : vector<8x8x256xf32>
    %102 = arith.addf %94, %101 : vector<8x8x256xf32>
    %103 = vector.extract_strided_slice %95 {offsets = [1, 0, 0], sizes = [8, 8, 256], strides = [1, 1, 1]} : vector<10x8x256xf32> to vector<8x8x256xf32>
    %104 = vector.extract_strided_slice %93 {offsets = [3, 0], sizes = [1, 256], strides = [1, 1]} : vector<9x256xf32> to vector<1x256xf32>
    %105 = vector.shape_cast %104 : vector<1x256xf32> to vector<256xf32>
    %106 = vector.shape_cast %105 : vector<256xf32> to vector<1x1x256xf32>
    %107 = vector.broadcast %106 : vector<1x1x256xf32> to vector<8x8x256xf32>
    %108 = arith.mulf %103, %107 : vector<8x8x256xf32>
    %109 = arith.addf %102, %108 : vector<8x8x256xf32>
    %110 = vector.extract_strided_slice %95 {offsets = [2, 0, 0], sizes = [8, 8, 256], strides = [1, 1, 1]} : vector<10x8x256xf32> to vector<8x8x256xf32>
    %111 = vector.extract_strided_slice %93 {offsets = [6, 0], sizes = [1, 256], strides = [1, 1]} : vector<9x256xf32> to vector<1x256xf32>
    %112 = vector.shape_cast %111 : vector<1x256xf32> to vector<256xf32>
    %113 = vector.shape_cast %112 : vector<256xf32> to vector<1x1x256xf32>
    %114 = vector.broadcast %113 : vector<1x1x256xf32> to vector<8x8x256xf32>
    %115 = arith.mulf %110, %114 : vector<8x8x256xf32>
    %116 = arith.addf %109, %115 : vector<8x8x256xf32>
    %c0_58 = arith.constant 0 : index
    %c1_59 = arith.constant 1 : index
    %c0_60 = arith.constant 0 : index
    %117 = vector.load %arg12[%c0_58, %c1_59, %c0_60] : memref<10x10x256xf32, #tpu.memory_space<vmem>>, vector<10x8x256xf32>
    %118 = vector.extract_strided_slice %117 {offsets = [0, 0, 0], sizes = [8, 8, 256], strides = [1, 1, 1]} : vector<10x8x256xf32> to vector<8x8x256xf32>
    %119 = vector.extract_strided_slice %93 {offsets = [1, 0], sizes = [1, 256], strides = [1, 1]} : vector<9x256xf32> to vector<1x256xf32>
    %120 = vector.shape_cast %119 : vector<1x256xf32> to vector<256xf32>
    %121 = vector.shape_cast %120 : vector<256xf32> to vector<1x1x256xf32>
    %122 = vector.broadcast %121 : vector<1x1x256xf32> to vector<8x8x256xf32>
    %123 = arith.mulf %118, %122 : vector<8x8x256xf32>
    %124 = arith.addf %116, %123 : vector<8x8x256xf32>
    %125 = vector.extract_strided_slice %117 {offsets = [1, 0, 0], sizes = [8, 8, 256], strides = [1, 1, 1]} : vector<10x8x256xf32> to vector<8x8x256xf32>
    %126 = vector.extract_strided_slice %93 {offsets = [4, 0], sizes = [1, 256], strides = [1, 1]} : vector<9x256xf32> to vector<1x256xf32>
    %127 = vector.shape_cast %126 : vector<1x256xf32> to vector<256xf32>
    %128 = vector.shape_cast %127 : vector<256xf32> to vector<1x1x256xf32>
    %129 = vector.broadcast %128 : vector<1x1x256xf32> to vector<8x8x256xf32>
    %130 = arith.mulf %125, %129 : vector<8x8x256xf32>
    %131 = arith.addf %124, %130 : vector<8x8x256xf32>
    %132 = vector.extract_strided_slice %117 {offsets = [2, 0, 0], sizes = [8, 8, 256], strides = [1, 1, 1]} : vector<10x8x256xf32> to vector<8x8x256xf32>
    %133 = vector.extract_strided_slice %93 {offsets = [7, 0], sizes = [1, 256], strides = [1, 1]} : vector<9x256xf32> to vector<1x256xf32>
    %134 = vector.shape_cast %133 : vector<1x256xf32> to vector<256xf32>
    %135 = vector.shape_cast %134 : vector<256xf32> to vector<1x1x256xf32>
    %136 = vector.broadcast %135 : vector<1x1x256xf32> to vector<8x8x256xf32>
    %137 = arith.mulf %132, %136 : vector<8x8x256xf32>
    %138 = arith.addf %131, %137 : vector<8x8x256xf32>
    %c0_61 = arith.constant 0 : index
    %c2 = arith.constant 2 : index
    %c0_62 = arith.constant 0 : index
    %139 = vector.load %arg12[%c0_61, %c2, %c0_62] : memref<10x10x256xf32, #tpu.memory_space<vmem>>, vector<10x8x256xf32>
    %140 = vector.extract_strided_slice %139 {offsets = [0, 0, 0], sizes = [8, 8, 256], strides = [1, 1, 1]} : vector<10x8x256xf32> to vector<8x8x256xf32>
    %141 = vector.extract_strided_slice %93 {offsets = [2, 0], sizes = [1, 256], strides = [1, 1]} : vector<9x256xf32> to vector<1x256xf32>
    %142 = vector.shape_cast %141 : vector<1x256xf32> to vector<256xf32>
    %143 = vector.shape_cast %142 : vector<256xf32> to vector<1x1x256xf32>
    %144 = vector.broadcast %143 : vector<1x1x256xf32> to vector<8x8x256xf32>
    %145 = arith.mulf %140, %144 : vector<8x8x256xf32>
    %146 = arith.addf %138, %145 : vector<8x8x256xf32>
    %147 = vector.extract_strided_slice %139 {offsets = [1, 0, 0], sizes = [8, 8, 256], strides = [1, 1, 1]} : vector<10x8x256xf32> to vector<8x8x256xf32>
    %148 = vector.extract_strided_slice %93 {offsets = [5, 0], sizes = [1, 256], strides = [1, 1]} : vector<9x256xf32> to vector<1x256xf32>
    %149 = vector.shape_cast %148 : vector<1x256xf32> to vector<256xf32>
    %150 = vector.shape_cast %149 : vector<256xf32> to vector<1x1x256xf32>
    %151 = vector.broadcast %150 : vector<1x1x256xf32> to vector<8x8x256xf32>
    %152 = arith.mulf %147, %151 : vector<8x8x256xf32>
    %153 = arith.addf %146, %152 : vector<8x8x256xf32>
    %154 = vector.extract_strided_slice %139 {offsets = [2, 0, 0], sizes = [8, 8, 256], strides = [1, 1, 1]} : vector<10x8x256xf32> to vector<8x8x256xf32>
    %155 = vector.extract_strided_slice %93 {offsets = [8, 0], sizes = [1, 256], strides = [1, 1]} : vector<9x256xf32> to vector<1x256xf32>
    %156 = vector.shape_cast %155 : vector<1x256xf32> to vector<256xf32>
    %157 = vector.shape_cast %156 : vector<256xf32> to vector<1x1x256xf32>
    %158 = vector.broadcast %157 : vector<1x1x256xf32> to vector<8x8x256xf32>
    %159 = arith.mulf %154, %158 : vector<8x8x256xf32>
    %160 = arith.addf %153, %159 : vector<8x8x256xf32>
    %c0_63 = arith.constant 0 : index
    %c0_64 = arith.constant 0 : index
    %161 = vector.load %arg8[%c0_63, %c0_64] : memref<1x256xf32, #tpu.memory_space<vmem>>, vector<1x256xf32>
    %162 = vector.shape_cast %161 : vector<1x256xf32> to vector<1x1x256xf32>
    %163 = vector.broadcast %162 : vector<1x1x256xf32> to vector<8x8x256xf32>
    %164 = arith.addf %160, %163 : vector<8x8x256xf32>
    %cst_65 = arith.constant 5.000000e-01 : f32
    %165 = vector.broadcast %cst_65 : f32 to vector<8x8x256xf32>
    %166 = arith.mulf %165, %164 : vector<8x8x256xf32>
    %cst_66 = arith.constant 0.707106769 : f32
    %167 = vector.broadcast %cst_66 : f32 to vector<8x8x256xf32>
    %168 = arith.mulf %164, %167 : vector<8x8x256xf32>
    %169 = math.erf %168 : vector<8x8x256xf32>
    %cst_67 = arith.constant 1.000000e+00 : f32
    %170 = vector.broadcast %cst_67 : f32 to vector<8x8x256xf32>
    %171 = arith.addf %170, %169 : vector<8x8x256xf32>
    %172 = arith.mulf %166, %171 : vector<8x8x256xf32>
    %173 = vector.shape_cast %172 : vector<8x8x256xf32> to vector<64x256xf32>
    %174 = arith.truncf %173 : vector<64x256xf32> to vector<64x256xbf16>
    %c0_68 = arith.constant 0 : index
    %c0_69 = arith.constant 0 : index
    %175 = vector.load %arg9[%c0_68, %c0_69] : memref<256x64xbf16, #tpu.memory_space<vmem>>, vector<256x64xbf16>
    %cst_70 = arith.constant dense<0.000000e+00> : vector<64x64xf32>
    %176 = tpu.matmul %174, %175, %cst_70 {dimension_numbers = #tpu.dot_dimension_numbers<[1], [0], [0], [1], [0, 0, 1, 1], [], []>} : vector<64x256xbf16>, vector<256x64xbf16>, vector<64x64xf32> -> vector<64x64xf32>
    %c0_71 = arith.constant 0 : index
    %c0_72 = arith.constant 0 : index
    %177 = vector.load %arg10[%c0_71, %c0_72] : memref<1x64xf32, #tpu.memory_space<vmem>>, vector<1x64xf32>
    %178 = vector.broadcast %177 : vector<1x64xf32> to vector<64x64xf32>
    %179 = arith.addf %176, %178 : vector<64x64xf32>
    %180 = arith.addf %1, %179 : vector<64x64xf32>
    %c0_73 = arith.constant 0 : index
    %c0_74 = arith.constant 0 : index
    %c0_75 = arith.constant 0 : index
    %181 = vector.load %arg11[%c0_73, %c0_74, %c0_75] : memref<1x64x64xf32, #tpu.memory_space<vmem>>, vector<1x64x64xf32>
    %182 = vector.shape_cast %181 : vector<1x64x64xf32> to vector<64x64xf32>
    %183 = vector.shape_cast %180 : vector<64x64xf32> to vector<1x64x64xf32>
    tpu.vector_store %arg11[%c0_73, %c0_74, %c0_75], %183 {strides = array<i32>} : memref<1x64x64xf32, #tpu.memory_space<vmem>>, vector<1x64x64xf32>,
    return
  }
  func.func @transform_0(%arg0: i32, %arg1: i32) -> (i32, i32, i32) {
    %c0_i32 = arith.constant 0 : i32
    %c0_i32_0 = arith.constant 0 : i32
    return %arg0, %arg1, %c0_i32 : i32, i32, i32
  }
  func.func @transform_1(%arg0: i32, %arg1: i32) -> (i32, i32, i32) {
    %c1_i32 = arith.constant 1 : i32
    %0 = arith.subi %arg1, %c1_i32 : i32
    %c0_i32 = arith.constant 0 : i32
    %1 = arith.maxsi %0, %c0_i32 : i32
    %c0_i32_0 = arith.constant 0 : i32
    %c0_i32_1 = arith.constant 0 : i32
    return %arg0, %1, %c0_i32_0 : i32, i32, i32
  }
  func.func @transform_2(%arg0: i32, %arg1: i32) -> (i32, i32, i32) {
    %c1_i32 = arith.constant 1 : i32
    %0 = arith.addi %arg1, %c1_i32 : i32
    %c1_i32_0 = arith.constant 1 : i32
    %1 = arith.minsi %0, %c1_i32_0 : i32
    %c0_i32 = arith.constant 0 : i32
    %c0_i32_1 = arith.constant 0 : i32
    return %arg0, %1, %c0_i32 : i32, i32, i32
  }
  func.func @transform_3(%arg0: i32, %arg1: i32) -> (i32, i32) {
    %c0_i32 = arith.constant 0 : i32
    %c0_i32_0 = arith.constant 0 : i32
    %c0_i32_1 = arith.constant 0 : i32
    return %c0_i32, %c0_i32_0 : i32, i32
  }
  func.func @transform_4(%arg0: i32, %arg1: i32) -> (i32, i32) {
    %c0_i32 = arith.constant 0 : i32
    %c0_i32_0 = arith.constant 0 : i32
    %c0_i32_1 = arith.constant 0 : i32
    return %c0_i32, %c0_i32_0 : i32, i32
  }
  func.func @transform_5(%arg0: i32, %arg1: i32) -> (i32, i32) {
    %c0_i32 = arith.constant 0 : i32
    %c0_i32_0 = arith.constant 0 : i32
    %c0_i32_1 = arith.constant 0 : i32
    return %c0_i32, %c0_i32_0 : i32, i32
  }
  func.func @transform_6(%arg0: i32, %arg1: i32) -> (i32, i32) {
    %c0_i32 = arith.constant 0 : i32
    %c0_i32_0 = arith.constant 0 : i32
    %c0_i32_1 = arith.constant 0 : i32
    return %c0_i32, %c0_i32_0 : i32, i32
  }
  func.func @transform_7(%arg0: i32, %arg1: i32) -> (i32, i32) {
    %c0_i32 = arith.constant 0 : i32
    %c0_i32_0 = arith.constant 0 : i32
    %c0_i32_1 = arith.constant 0 : i32
    return %c0_i32, %c0_i32_0 : i32, i32
  }
  func.func @transform_8(%arg0: i32, %arg1: i32) -> (i32, i32) {
    %c0_i32 = arith.constant 0 : i32
    %c0_i32_0 = arith.constant 0 : i32
    %c0_i32_1 = arith.constant 0 : i32
    return %c0_i32, %c0_i32_0 : i32, i32
  }
  func.func @transform_9(%arg0: i32, %arg1: i32) -> (i32, i32, i32) {
    %c0_i32 = arith.constant 0 : i32
    %c0_i32_0 = arith.constant 0 : i32
    return %arg0, %arg1, %c0_i32 : i32, i32, i32
  }
}

</mosaic_0001>

<llo_original>
// kernel: block_forward.3
$region0: #{block_forward.3}
  #allocation0 [shape = 'u32[]', space=smem, size = 0x4, offset = 0x4, fixed_abs, tag = 'smem constant byte address 0x4 - core index']
  #allocation1 [shape = 'u32[144,128]{1,0:T(1,128)}', space=vmem, size = 0x12000, scoped, tag = 'internal scratch']
  %s0 = inlined_call_operand.vmem [shape: f32[2,128,64], index: 0, kind: input, shape index: {}]
  %s1 = inlined_call_operand.vmem [shape: bf16[64,64], index: 1, kind: input, shape index: {}]
  %s2 = inlined_call_operand.vmem [shape: bf16[64,64], index: 2, kind: input, shape index: {}]
  %s3 = inlined_call_operand.vmem [shape: bf16[64,64], index: 3, kind: input, shape index: {}]
  %s4 = inlined_call_operand.vmem [shape: f32[1,64], index: 4, kind: input, shape index: {}]
  %s5 = inlined_call_operand.vmem [shape: f32[1,64], index: 5, kind: input, shape index: {}]
  %s6 = inlined_call_operand.vmem [shape: f32[1,64], index: 6, kind: input, shape index: {}]
  %s7 = inlined_call_operand.vmem [shape: bf16[2,128,64], index: 7, kind: output, shape index: {0}]
  %s8 = inlined_call_operand.vmem [shape: bf16[2,128,64], index: 8, kind: output, shape index: {1}]
  %s9 = inlined_call_operand.vmem [shape: bf16[2,128,64], index: 9, kind: output, shape index: {2}]
  %10 = xla_tuple %s7, %s8, %s9
  %s11 = sld [smem:[#allocation0]]
  $region77: #{block_forward.3} parent=0
    _
  %s13 = ssub.s32 1, %s11
  %s14 = scalar_select 0, %s13, %s11
  loop: start=0, step=1, limit=4
  $region2: #{block_forward.3} parent=0 // loop_pre_header
    _
  $region3: #{block_forward.3} parent=0 // loop_header
    %s16 = sphi 0, %s20
    %p17 = scmp.ge.s32.totalorder %s16, 4
    %s23 = sphi 0, %s35
    %s24 = sphi 0, %s31
    %s25 = sphi 0, %s23
    %s26 = sphi 0, %s24
    %s27 = sphi 0, %s25
    %s28 = sphi 0, %s26
    %s40 = sphi 0, %s42
    %s43 = sphi 0, %s40
    %s44 = sphi 0, %s43
    %s60 = sphi 0, %s44
    %s64 = sphi 0, %s64
    %s66 = sphi 0, %s64
    %s67 = sphi 0, %s66
    %s81 = sphi 0, %s67
    %s85 = sphi 0, %s85
    %s87 = sphi 0, %s85
    %s88 = sphi 0, %s87
    %s102 = sphi 0, %s88
    %s106 = sphi 0, %s106
    %s108 = sphi 0, %s106
    %s109 = sphi 0, %s108
    %s123 = sphi 0, %s109
    %s127 = sphi 0, %s127
    %s129 = sphi 0, %s127
    %s130 = sphi 0, %s129
    %s144 = sphi 0, %s130
    %s148 = sphi 0, %s148
    %s150 = sphi 0, %s148
    %s151 = sphi 0, %s150
    %s165 = sphi 0, %s151
    %s169 = sphi 0, %s169
    %s171 = sphi 0, %s169
    %s172 = sphi 0, %s171
    %s186 = sphi 0, %s172
    %s194 = sphi 0, %s196
    %s197 = sphi 0, %s194
    %s198 = sphi 0, %s197
    %s214 = sphi 0, %s198
    %s222 = sphi 0, %s224
    %s225 = sphi 0, %s222
    %s226 = sphi 0, %s225
    %s242 = sphi 0, %s226
    %s250 = sphi 0, %s252
    %s253 = sphi 0, %s250
    %s254 = sphi 0, %s253
    %s270 = sphi 0, %s254
  $region4: #{block_forward.3} parent=0 // loop_header_branch
    %19 = sbr.rel (%p17) target = $region8
  $region5: #{block_forward.3} parent=0 // loop_body
    %s21 = ssub.s32 %s16, 1
    %s22 = ssub.s32 %s16, 2
    %s29 = sadd.s32 1, %s24
    %p30 = scmp.ge.s32.totalorder %s29, 1
    %s31 = scalar_select %p30, 0, %s29
    %s32 = sadd.s32 1, %s23
    %s33 = scalar_select %p30, %s32, %s23
    %p34 = scmp.ge.s32.totalorder %s33, 2
    %s35 = scalar_select %p34, 0, %s33
    %s36 = ssub.s32 %s23, %s35
    %s37 = ssub.s32 %s24, %s31
    %s38 = sor.u32 %s36, %s37
    %p39 = scmp.eq.s32.totalorder %s38, 0
    %s41 = sadd.s32 %s40, 1
    %s42 = scalar_select %p39, %s40, %s41
    %p45 = pneg %p39
    %p46 = scmp.eq.s32.totalorder %s16, 1
    %p47 = por %p45, %p46
    %p48 = scmp.ne.s32.totalorder %s40, %s43
    %p49 = scmp.eq.s32.totalorder %s16, 0
    %p50 = por %p48, %p49
    %p51 = scmp.ne.s32.totalorder %s40, %s43
    %p52 = scmp.eq.s32.totalorder %s21, 1
    %p53 = por %p51, %p52
    %p54 = scmp.ne.s32.totalorder %s43, %s44
    %p55 = scmp.eq.s32.totalorder %s21, 0
    %p56 = por %p54, %p55
    %p57 = scmp.ne.s32.totalorder %s43, %s44
    %p58 = scmp.eq.s32.totalorder %s22, 1
    %p59 = por %p57, %p58
    %p61 = scmp.ne.s32.totalorder %s44, %s60
    %p62 = scmp.eq.s32.totalorder %s22, 0
    %p63 = por %p61, %p62
    %s65 = sadd.s32 %s64, 1
    %p68 = scmp.eq.s32.totalorder %s16, 1
    %p69 = scmp.ne.s32.totalorder %s64, %s66
    %p70 = scmp.eq.s32.totalorder %s16, 0
    %p71 = por %p69, %p70
    %p72 = scmp.ne.s32.totalorder %s64, %s66
    %p73 = scmp.eq.s32.totalorder %s21, 1
    %p74 = por %p72, %p73
    %p75 = scmp.ne.s32.totalorder %s66, %s67
    %p76 = scmp.eq.s32.totalorder %s21, 0
    %p77 = por %p75, %p76
    %p78 = scmp.ne.s32.totalorder %s66, %s67
    %p79 = scmp.eq.s32.totalorder %s22, 1
    %p80 = por %p78, %p79
    %p82 = scmp.ne.s32.totalorder %s67, %s81
    %p83 = scmp.eq.s32.totalorder %s22, 0
    %p84 = por %p82, %p83
    %s86 = sadd.s32 %s85, 1
    %p89 = scmp.eq.s32.totalorder %s16, 1
    %p90 = scmp.ne.s32.totalorder %s85, %s87
    %p91 = scmp.eq.s32.totalorder %s16, 0
    %p92 = por %p90, %p91
    %p93 = scmp.ne.s32.totalorder %s85, %s87
    %p94 = scmp.eq.s32.totalorder %s21, 1
    %p95 = por %p93, %p94
    %p96 = scmp.ne.s32.totalorder %s87, %s88
    %p97 = scmp.eq.s32.totalorder %s21, 0
    %p98 = por %p96, %p97
    %p99 = scmp.ne.s32.totalorder %s87, %s88
    %p100 = scmp.eq.s32.totalorder %s22, 1
    %p101 = por %p99, %p100
    %p103 = scmp.ne.s32.totalorder %s88, %s102
    %p104 = scmp.eq.s32.totalorder %s22, 0
    %p105 = por %p103, %p104
    %s107 = sadd.s32 %s106, 1
    %p110 = scmp.eq.s32.totalorder %s16, 1
    %p111 = scmp.ne.s32.totalorder %s106, %s108
    %p112 = scmp.eq.s32.totalorder %s16, 0
    %p113 = por %p111, %p112
    %p114 = scmp.ne.s32.totalorder %s106, %s108
    %p115 = scmp.eq.s32.totalorder %s21, 1
    %p116 = por %p114, %p115
    %p117 = scmp.ne.s32.totalorder %s108, %s109
    %p118 = scmp.eq.s32.totalorder %s21, 0
    %p119 = por %p117, %p118
    %p120 = scmp.ne.s32.totalorder %s108, %s109
    %p121 = scmp.eq.s32.totalorder %s22, 1
    %p122 = por %p120, %p121
    %p124 = scmp.ne.s32.totalorder %s109, %s123
    %p125 = scmp.eq.s32.totalorder %s22, 0
    %p126 = por %p124, %p125
    %s128 = sadd.s32 %s127, 1
    %p131 = scmp.eq.s32.totalorder %s16, 1
    %p132 = scmp.ne.s32.totalorder %s127, %s129
    %p133 = scmp.eq.s32.totalorder %s16, 0
    %p134 = por %p132, %p133
    %p135 = scmp.ne.s32.totalorder %s127, %s129
    %p136 = scmp.eq.s32.totalorder %s21, 1
    %p137 = por %p135, %p136
    %p138 = scmp.ne.s32.totalorder %s129, %s130
    %p139 = scmp.eq.s32.totalorder %s21, 0
    %p140 = por %p138, %p139
    %p141 = scmp.ne.s32.totalorder %s129, %s130
    %p142 = scmp.eq.s32.totalorder %s22, 1
    %p143 = por %p141, %p142
    %p145 = scmp.ne.s32.totalorder %s130, %s144
    %p146 = scmp.eq.s32.totalorder %s22, 0
    %p147 = por %p145, %p146
    %s149 = sadd.s32 %s148, 1
    %p152 = scmp.eq.s32.totalorder %s16, 1
    %p153 = scmp.ne.s32.totalorder %s148, %s150
    %p154 = scmp.eq.s32.totalorder %s16, 0
    %p155 = por %p153, %p154
    %p156 = scmp.ne.s32.totalorder %s148, %s150
    %p157 = scmp.eq.s32.totalorder %s21, 1
    %p158 = por %p156, %p157
    %p159 = scmp.ne.s32.totalorder %s150, %s151
    %p160 = scmp.eq.s32.totalorder %s21, 0
    %p161 = por %p159, %p160
    %p162 = scmp.ne.s32.totalorder %s150, %s151
    %p163 = scmp.eq.s32.totalorder %s22, 1
    %p164 = por %p162, %p163
    %p166 = scmp.ne.s32.totalorder %s151, %s165
    %p167 = scmp.eq.s32.totalorder %s22, 0
    %p168 = por %p166, %p167
    %s170 = sadd.s32 %s169, 1
    %p173 = scmp.eq.s32.totalorder %s16, 1
    %p174 = scmp.ne.s32.totalorder %s169, %s171
    %p175 = scmp.eq.s32.totalorder %s16, 0
    %p176 = por %p174, %p175
    %p177 = scmp.ne.s32.totalorder %s169, %s171
    %p178 = scmp.eq.s32.totalorder %s21, 1
    %p179 = por %p177, %p178
    %p180 = scmp.ne.s32.totalorder %s171, %s172
    %p181 = scmp.eq.s32.totalorder %s21, 0
    %p182 = por %p180, %p181
    %p183 = scmp.ne.s32.totalorder %s171, %s172
    %p184 = scmp.eq.s32.totalorder %s22, 1
    %p185 = por %p183, %p184
    %p187 = scmp.ne.s32.totalorder %s172, %s186
    %p188 = scmp.eq.s32.totalorder %s22, 0
    %p189 = por %p187, %p188
    %s190 = ssub.s32 %s23, %s35
    %s191 = ssub.s32 %s24, %s31
    %s192 = sor.u32 %s190, %s191
    %p193 = scmp.eq.s32.totalorder %s192, 0
    %s195 = sadd.s32 %s194, 1
    %s196 = scalar_select %p193, %s194, %s195
    %p199 = pneg %p193
    %p200 = scmp.eq.s32.totalorder %s16, 1
    %p201 = por %p199, %p200
    %p202 = scmp.ne.s32.totalorder %s194, %s197
    %p203 = scmp.eq.s32.totalorder %s16, 0
    %p204 = por %p202, %p203
    %p205 = scmp.ne.s32.totalorder %s194, %s197
    %p206 = scmp.eq.s32.totalorder %s21, 1
    %p207 = por %p205, %p206
    %p208 = scmp.ne.s32.totalorder %s197, %s198
    %p209 = scmp.eq.s32.totalorder %s21, 0
    %p210 = por %p208, %p209
    %p211 = scmp.ne.s32.totalorder %s197, %s198
    %p212 = scmp.eq.s32.totalorder %s22, 1
    %p213 = por %p211, %p212
    %p215 = scmp.ne.s32.totalorder %s198, %s214
    %p216 = scmp.eq.s32.totalorder %s22, 0
    %p217 = por %p215, %p216
    %s218 = ssub.s32 %s23, %s35
    %s219 = ssub.s32 %s24, %s31
    %s220 = sor.u32 %s218, %s219
    %p221 = scmp.eq.s32.totalorder %s220, 0
    %s223 = sadd.s32 %s222, 1
    %s224 = scalar_select %p221, %s222, %s223
    %p227 = pneg %p221
    %p228 = scmp.eq.s32.totalorder %s16, 1
    %p229 = por %p227, %p228
    %p230 = scmp.ne.s32.totalorder %s222, %s225
    %p231 = scmp.eq.s32.totalorder %s16, 0
    %p232 = por %p230, %p231
    %p233 = scmp.ne.s32.totalorder %s222, %s225
    %p234 = scmp.eq.s32.totalorder %s21, 1
    %p235 = por %p233, %p234
    %p236 = scmp.ne.s32.totalorder %s225, %s226
    %p237 = scmp.eq.s32.totalorder %s21, 0
    %p238 = por %p236, %p237
    %p239 = scmp.ne.s32.totalorder %s225, %s226
    %p240 = scmp.eq.s32.totalorder %s22, 1
    %p241 = por %p239, %p240
    %p243 = scmp.ne.s32.totalorder %s226, %s242
    %p244 = scmp.eq.s32.totalorder %s22, 0
    %p245 = por %p243, %p244
    %s246 = ssub.s32 %s23, %s35
    %s247 = ssub.s32 %s24, %s31
    %s248 = sor.u32 %s246, %s247
    %p249 = scmp.eq.s32.totalorder %s248, 0
    %s251 = sadd.s32 %s250, 1
    %s252 = scalar_select %p249, %s250, %s251
    %p255 = pneg %p249
    %p256 = scmp.eq.s32.totalorder %s16, 1
    %p257 = por %p255, %p256
    %p258 = scmp.ne.s32.totalorder %s250, %s253
    %p259 = scmp.eq.s32.totalorder %s16, 0
    %p260 = por %p258, %p259
    %p261 = scmp.ne.s32.totalorder %s250, %s253
    %p262 = scmp.eq.s32.totalorder %s21, 1
    %p263 = por %p261, %p262
    %p264 = scmp.ne.s32.totalorder %s253, %s254
    %p265 = scmp.eq.s32.totalorder %s21, 0
    %p266 = por %p264, %p265
    %p267 = scmp.ne.s32.totalorder %s253, %s254
    %p268 = scmp.eq.s32.totalorder %s22, 1
    %p269 = por %p267, %p268
    %p271 = scmp.ne.s32.totalorder %s254, %s270
    %p272 = scmp.eq.s32.totalorder %s22, 0
    %p273 = por %p271, %p272
    %p274 = scmp.le.s32.totalorder 1, %s16
    %p275 = scmp.lt.s32.totalorder %s16, 3
    %p276 = pnand %p274, %p275
    %p277 = pneg %p276
    // Predicated region
    $region9: #{block_forward.3} parent=5 // pred_check
      _
    $region10: #{block_forward.3} parent=5 // pred_check_branch
      %279 = sbr.rel (%p276) target = $region12
    $region11: #{block_forward.3} parent=5 // pred_region
      %s280 = ssub.s32 %s16, 1
      // Predicated region
      $region13: #{block_forward.3} parent=11 // pred_check
        %p281 = pneg %p77
      $region14: #{block_forward.3} parent=11 // pred_check_branch
        %283 = sbr.rel (%p281) target = $region16
      $region15: #{block_forward.3} parent=11 // pred_region
        _
      $region16: #{block_forward.3} parent=11 // pred_fallthru
        _
      // Predicated region
      $region17: #{block_forward.3} parent=11 // pred_check
        %p284 = pneg %p98
      $region18: #{block_forward.3} parent=11 // pred_check_branch
        %286 = sbr.rel (%p284) target = $region20
      $region19: #{block_forward.3} parent=11 // pred_region
        _
      $region20: #{block_forward.3} parent=11 // pred_fallthru
        _
      // Predicated region
      $region21: #{block_forward.3} parent=11 // pred_check
        %p287 = pneg %p119
      $region22: #{block_forward.3} parent=11 // pred_check_branch
        %289 = sbr.rel (%p287) target = $region24
      $region23: #{block_forward.3} parent=11 // pred_region
        _
      $region24: #{block_forward.3} parent=11 // pred_fallthru
        _
      // Predicated region
      $region25: #{block_forward.3} parent=11 // pred_check
        %p290 = pneg %p140
      $region26: #{block_forward.3} parent=11 // pred_check_branch
        %292 = sbr.rel (%p290) target = $region28
      $region27: #{block_forward.3} parent=11 // pred_region
        _
      $region28: #{block_forward.3} parent=11 // pred_fallthru
        _
      // Predicated region
      $region29: #{block_forward.3} parent=11 // pred_check
        %p293 = pneg %p161
      $region30: #{block_forward.3} parent=11 // pred_check_branch
        %295 = sbr.rel (%p293) target = $region32
      $region31: #{block_forward.3} parent=11 // pred_region
        _
      $region32: #{block_forward.3} parent=11 // pred_fallthru
        _
      // Predicated region
      $region33: #{block_forward.3} parent=11 // pred_check
        %p296 = pneg %p182
      $region34: #{block_forward.3} parent=11 // pred_check_branch
        %298 = sbr.rel (%p296) target = $region36
      $region35: #{block_forward.3} parent=11 // pred_region
        _
      $region36: #{block_forward.3} parent=11 // pred_fallthru
        _
    $region12: #{block_forward.3} parent=5 // pred_fallthru
      _
    %p299 = scmp.lt.s32.totalorder %s16, 2
    // Predicated region
    $region37: #{block_forward.3} parent=5 // pred_check
      %p300 = pneg %p299
    $region38: #{block_forward.3} parent=5 // pred_check_branch
      %302 = sbr.rel (%p300) target = $region40
    $region39: #{block_forward.3} parent=5 // pred_region
      // Predicated region
      $region41: #{block_forward.3} parent=39 // pred_check
        %p303 = pneg %p50
      $region42: #{block_forward.3} parent=39 // pred_check_branch
        %305 = sbr.rel (%p303) target = $region44
      $region43: #{block_forward.3} parent=39 // pred_region
        %s306 = smul.u32 16, %s24
        %p307 = scmp.lt.s32.totalorder %s23, 1
        %s308 = scalar_select %p307, %s23, 1
        %p309 = scmp.lt.s32.totalorder %s306, 15
        %s310 = scalar_select %p309, %s306, 15
        %s311 = smul.addr %s308, 16
        %s312 = sadd.s32 %s310, %s311
        %s313 = smul.addr %s312, 8
        %s314 = scalar_lea.vmem %s0, %s313
        %s315 = smul.u32 16, %s24
      $region44: #{block_forward.3} parent=39 // pred_fallthru
        _
    $region40: #{block_forward.3} parent=5 // pred_fallthru
      _
    %p316 = scmp.le.s32.totalorder 1, %s16
    %p317 = scmp.lt.s32.totalorder %s16, 3
    %p318 = pnand %p316, %p317
    %p319 = pneg %p318
    // Predicated region
    $region45: #{block_forward.3} parent=5 // pred_check
      _
    $region46: #{block_forward.3} parent=5 // pred_check_branch
      %321 = sbr.rel (%p318) target = $region48
    $region47: #{block_forward.3} parent=5 // pred_region
      %s322 = ssub.s32 %s16, 1
      %s323 = smul.u32 16, %s26
      %p324 = scmp.lt.s32.totalorder %s25, 1
      %s325 = scalar_select %p324, %s25, 1
      %p326 = scmp.lt.s32.totalorder %s323, 15
      %s327 = scalar_select %p326, %s323, 15
      %s328 = smul.addr %s325, 16
      %s329 = sadd.s32 %s327, %s328
      %s330 = smul.addr %s329, 8
      %s331 = scalar_lea.vmem %s0, %s330
      %p332 = pneg %p56
      %p333 = pneg %p53
      %p334 = pneg %p77
      %p335 = pneg %p74
      %p336 = pneg %p98
      %p337 = pneg %p95
      %p338 = pneg %p119
      %p339 = pneg %p116
      %p340 = pneg %p140
      %p341 = pneg %p137
      %p342 = pneg %p161
      %p343 = pneg %p158
      %p344 = pneg %p182
      %p345 = pneg %p179
      %p346 = pneg %p210
      %p347 = pneg %p207
      %s348 = smul.u32 16, %s26
      %p349 = scmp.lt.s32.totalorder %s25, 1
      %s350 = scalar_select %p349, %s25, 1
      %p351 = scmp.lt.s32.totalorder %s348, 15
      %s352 = scalar_select %p351, %s348, 15
      %s353 = smul.addr %s350, 16
      %s354 = sadd.s32 %s352, %s353
      %s355 = smul.addr %s354, 4
      %s356 = scalar_lea.vmem %s7, %s355
      %p357 = pneg %p238
      %p358 = pneg %p235
      %s359 = smul.u32 16, %s26
      %p360 = scmp.lt.s32.totalorder %s25, 1
      %s361 = scalar_select %p360, %s25, 1
      %p362 = scmp.lt.s32.totalorder %s359, 15
      %s363 = scalar_select %p362, %s359, 15
      %s364 = smul.addr %s361, 16
      %s365 = sadd.s32 %s363, %s364
      %s366 = smul.addr %s365, 4
      %s367 = scalar_lea.vmem %s8, %s366
      %p368 = pneg %p266
      %p369 = pneg %p263
      %s370 = smul.u32 16, %s26
      %p371 = scmp.lt.s32.totalorder %s25, 1
      %s372 = scalar_select %p371, %s25, 1
      %p373 = scmp.lt.s32.totalorder %s370, 15
      %s374 = scalar_select %p373, %s370, 15
      %s375 = smul.addr %s372, 16
      %s376 = sadd.s32 %s374, %s375
      %s377 = smul.addr %s376, 4
      %s378 = scalar_lea.vmem %s9, %s377
      %s379 = smul.u32 16, %s26
      %p380 = scmp.lt.s32.totalorder %s25, 1
      %s381 = scalar_select %p380, %s25, 1
      %p382 = scmp.lt.s32.totalorder %s379, 15
      %s383 = scalar_select %p382, %s379, 15
      %s384 = smul.addr %s381, 16
      %s385 = sadd.s32 %s383, %s384
      %s386 = smul.addr %s385, 8
      %s387 = scalar_lea.vmem %s0, %s386
      %s388 = smul.u32 16, %s26
      %s389 = smul.u32 16, %s26
      %p390 = scmp.lt.s32.totalorder %s25, 1
      %s391 = scalar_select %p390, %s25, 1
      %p392 = scmp.lt.s32.totalorder %s389, 15
      %s393 = scalar_select %p392, %s389, 15
      %s394 = smul.addr %s391, 16
      %s395 = sadd.s32 %s393, %s394
      %s396 = smul.addr %s395, 4
      %s397 = scalar_lea.vmem %s7, %s396
      %s398 = smul.u32 16, %s26
      %s399 = smul.u32 16, %s26
      %p400 = scmp.lt.s32.totalorder %s25, 1
      %s401 = scalar_select %p400, %s25, 1
      %p402 = scmp.lt.s32.totalorder %s399, 15
      %s403 = scalar_select %p402, %s399, 15
      %s404 = smul.addr %s401, 16
      %s405 = sadd.s32 %s403, %s404
      %s406 = smul.addr %s405, 4
      %s407 = scalar_lea.vmem %s8, %s406
      %s408 = smul.u32 16, %s26
      %s409 = smul.u32 16, %s26
      %p410 = scmp.lt.s32.totalorder %s25, 1
      %s411 = scalar_select %p410, %s25, 1
      %p412 = scmp.lt.s32.totalorder %s409, 15
      %s413 = scalar_select %p412, %s409, 15
      %s414 = smul.addr %s411, 16
      %s415 = sadd.s32 %s413, %s414
      %s416 = smul.addr %s415, 4
      %s417 = scalar_lea.vmem %s9, %s416
      %s418 = smul.u32 16, %s26
      %v420 = vld [vmem:[%s387] sm:$0xff]
      %v421 = vld [vmem:[%s387 + $0x8] sm:$0xff]
      %v422 = vld [vmem:[%s387 + $0x10] sm:$0xff]
      %v423 = vld [vmem:[%s387 + $0x18] sm:$0xff]
      %v424 = vld [vmem:[%s387 + $0x20] sm:$0xff]
      %v425 = vld [vmem:[%s387 + $0x28] sm:$0xff]
      %v426 = vld [vmem:[%s387 + $0x30] sm:$0xff]
      %v427 = vld [vmem:[%s387 + $0x38] sm:$0xff]
      %v428 = vld [vmem:[%s387 + $0x40] sm:$0xff]
      %v429 = vld [vmem:[%s387 + $0x48] sm:$0xff]
      %v430 = vld [vmem:[%s387 + $0x50] sm:$0xff]
      %v431 = vld [vmem:[%s387 + $0x58] sm:$0xff]
      %v432 = vld [vmem:[%s387 + $0x60] sm:$0xff]
      %v433 = vld [vmem:[%s387 + $0x68] sm:$0xff]
      %v434 = vld [vmem:[%s387 + $0x70] sm:$0xff]
      %v435 = vld [vmem:[%s387 + $0x78] sm:$0xff]
      %vm436 = vcmask 523264
      %v437 = vsel %vm436, %v420, 0.0
      %438 = vadd.xlane.f32.xlu0 %v437
      %v439 = vpop.xlane.xlu0 %438
      %v440 = vsel %vm436, %v421, 0.0
      %441 = vadd.xlane.f32.xlu0 %v440
      %v442 = vpop.xlane.xlu0 %441
      %v443 = vsel %vm436, %v422, 0.0
      %444 = vadd.xlane.f32.xlu0 %v443
      %v445 = vpop.xlane.xlu0 %444
      %v446 = vsel %vm436, %v423, 0.0
      %447 = vadd.xlane.f32.xlu0 %v446
      %v448 = vpop.xlane.xlu0 %447
      %v449 = vsel %vm436, %v424, 0.0
      %450 = vadd.xlane.f32.xlu0 %v449
      %v451 = vpop.xlane.xlu0 %450
      %v452 = vsel %vm436, %v425, 0.0
      %453 = vadd.xlane.f32.xlu0 %v452
      %v454 = vpop.xlane.xlu0 %453
      %v455 = vsel %vm436, %v426, 0.0
      %456 = vadd.xlane.f32.xlu0 %v455
      %v457 = vpop.xlane.xlu0 %456
      %v458 = vsel %vm436, %v427, 0.0
      %459 = vadd.xlane.f32.xlu0 %v458
      %v460 = vpop.xlane.xlu0 %459
      %v461 = vsel %vm436, %v428, 0.0
      %462 = vadd.xlane.f32.xlu0 %v461
      %v463 = vpop.xlane.xlu0 %462
      %v464 = vsel %vm436, %v429, 0.0
      %465 = vadd.xlane.f32.xlu0 %v464
      %v466 = vpop.xlane.xlu0 %465
      %v467 = vsel %vm436, %v430, 0.0
      %468 = vadd.xlane.f32.xlu0 %v467
      %v469 = vpop.xlane.xlu0 %468
      %v470 = vsel %vm436, %v431, 0.0
      %471 = vadd.xlane.f32.xlu0 %v470
      %v472 = vpop.xlane.xlu0 %471
      %v473 = vsel %vm436, %v432, 0.0
      %474 = vadd.xlane.f32.xlu0 %v473
      %v475 = vpop.xlane.xlu0 %474
      %v476 = vsel %vm436, %v433, 0.0
      %477 = vadd.xlane.f32.xlu0 %v476
      %v478 = vpop.xlane.xlu0 %477
      %v479 = vsel %vm436, %v434, 0.0
      %480 = vadd.xlane.f32.xlu0 %v479
      %v481 = vpop.xlane.xlu0 %480
      %v482 = vsel %vm436, %v435, 0.0
      %483 = vadd.xlane.f32.xlu0 %v482
      %v484 = vpop.xlane.xlu0 %483
      %v485 = vrcp.pop 64.0
      %v486 = vmul.f32 %v439, %v485
      %v487 = vmul.f32 %v442, %v485
      %v488 = vmul.f32 %v445, %v485
      %v489 = vmul.f32 %v448, %v485
      %v490 = vmul.f32 %v451, %v485
      %v491 = vmul.f32 %v454, %v485
      %v492 = vmul.f32 %v457, %v485
      %v493 = vmul.f32 %v460, %v485
      %v494 = vmul.f32 %v463, %v485
      %v495 = vmul.f32 %v466, %v485
      %v496 = vmul.f32 %v469, %v485
      %v497 = vmul.f32 %v472, %v485
      %v498 = vmul.f32 %v475, %v485
      %v499 = vmul.f32 %v478, %v485
      %v500 = vmul.f32 %v481, %v485
      %v501 = vmul.f32 %v484, %v485
      %v502 = vsub.f32 %v420, %v486
      %v503 = vsub.f32 %v421, %v487
      %v504 = vsub.f32 %v422, %v488
      %v505 = vsub.f32 %v423, %v489
      %v506 = vsub.f32 %v424, %v490
      %v507 = vsub.f32 %v425, %v491
      %v508 = vsub.f32 %v426, %v492
      %v509 = vsub.f32 %v427, %v493
      %v510 = vsub.f32 %v428, %v494
      %v511 = vsub.f32 %v429, %v495
      %v512 = vsub.f32 %v430, %v496
      %v513 = vsub.f32 %v431, %v497
      %v514 = vsub.f32 %v432, %v498
      %v515 = vsub.f32 %v433, %v499
      %v516 = vsub.f32 %v434, %v500
      %v517 = vsub.f32 %v435, %v501
      %v518 = vmul.f32 %v502, %v502
      %v519 = vmul.f32 %v503, %v503
      %v520 = vmul.f32 %v504, %v504
      %v521 = vmul.f32 %v505, %v505
      %v522 = vmul.f32 %v506, %v506
      %v523 = vmul.f32 %v507, %v507
      %v524 = vmul.f32 %v508, %v508
      %v525 = vmul.f32 %v509, %v509
      %v526 = vmul.f32 %v510, %v510
      %v527 = vmul.f32 %v511, %v511
      %v528 = vmul.f32 %v512, %v512
      %v529 = vmul.f32 %v513, %v513
      %v530 = vmul.f32 %v514, %v514
      %v531 = vmul.f32 %v515, %v515
      %v532 = vmul.f32 %v516, %v516
      %v533 = vmul.f32 %v517, %v517
      %v534 = vsel %vm436, %v518, 0.0
      %535 = vadd.xlane.f32.xlu0 %v534
      %v536 = vpop.xlane.xlu0 %535
      %v537 = vsel %vm436, %v519, 0.0
      %538 = vadd.xlane.f32.xlu0 %v537
      %v539 = vpop.xlane.xlu0 %538
      %v540 = vsel %vm436, %v520, 0.0
      %541 = vadd.xlane.f32.xlu0 %v540
      %v542 = vpop.xlane.xlu0 %541
      %v543 = vsel %vm436, %v521, 0.0
      %544 = vadd.xlane.f32.xlu0 %v543
      %v545 = vpop.xlane.xlu0 %544
      %v546 = vsel %vm436, %v522, 0.0
      %547 = vadd.xlane.f32.xlu0 %v546
      %v548 = vpop.xlane.xlu0 %547
      %v549 = vsel %vm436, %v523, 0.0
      %550 = vadd.xlane.f32.xlu0 %v549
      %v551 = vpop.xlane.xlu0 %550
      %v552 = vsel %vm436, %v524, 0.0
      %553 = vadd.xlane.f32.xlu0 %v552
      %v554 = vpop.xlane.xlu0 %553
      %v555 = vsel %vm436, %v525, 0.0
      %556 = vadd.xlane.f32.xlu0 %v555
      %v557 = vpop.xlane.xlu0 %556
      %v558 = vsel %vm436, %v526, 0.0
      %559 = vadd.xlane.f32.xlu0 %v558
      %v560 = vpop.xlane.xlu0 %559
      %v561 = vsel %vm436, %v527, 0.0
      %562 = vadd.xlane.f32.xlu0 %v561
      %v563 = vpop.xlane.xlu0 %562
      %v564 = vsel %vm436, %v528, 0.0
      %565 = vadd.xlane.f32.xlu0 %v564
      %v566 = vpop.xlane.xlu0 %565
      %v567 = vsel %vm436, %v529, 0.0
      %568 = vadd.xlane.f32.xlu0 %v567
      %v569 = vpop.xlane.xlu0 %568
      %v570 = vsel %vm436, %v530, 0.0
      %571 = vadd.xlane.f32.xlu0 %v570
      %v572 = vpop.xlane.xlu0 %571
      %v573 = vsel %vm436, %v531, 0.0
      %574 = vadd.xlane.f32.xlu0 %v573
      %v575 = vpop.xlane.xlu0 %574
      %v576 = vsel %vm436, %v532, 0.0
      %577 = vadd.xlane.f32.xlu0 %v576
      %v578 = vpop.xlane.xlu0 %577
      %v579 = vsel %vm436, %v533, 0.0
      %580 = vadd.xlane.f32.xlu0 %v579
      %v581 = vpop.xlane.xlu0 %580
      %v582 = vmul.f32 %v536, %v485
      %v583 = vmul.f32 %v539, %v485
      %v584 = vmul.f32 %v542, %v485
      %v585 = vmul.f32 %v545, %v485
      %v586 = vmul.f32 %v548, %v485
      %v587 = vmul.f32 %v551, %v485
      %v588 = vmul.f32 %v554, %v485
      %v589 = vmul.f32 %v557, %v485
      %v590 = vmul.f32 %v560, %v485
      %v591 = vmul.f32 %v563, %v485
      %v592 = vmul.f32 %v566, %v485
      %v593 = vmul.f32 %v569, %v485
      %v594 = vmul.f32 %v572, %v485
      %v595 = vmul.f32 %v575, %v485
      %v596 = vmul.f32 %v578, %v485
      %v597 = vmul.f32 %v581, %v485
      %v598 = vadd.f32 %v582, 1e-05
      %v599 = vadd.f32 %v583, 1e-05
      %v600 = vadd.f32 %v584, 1e-05
      %v601 = vadd.f32 %v585, 1e-05
      %v602 = vadd.f32 %v586, 1e-05
      %v603 = vadd.f32 %v587, 1e-05
      %v604 = vadd.f32 %v588, 1e-05
      %v605 = vadd.f32 %v589, 1e-05
      %v606 = vadd.f32 %v590, 1e-05
      %v607 = vadd.f32 %v591, 1e-05
      %v608 = vadd.f32 %v592, 1e-05
      %v609 = vadd.f32 %v593, 1e-05
      %v610 = vadd.f32 %v594, 1e-05
      %v611 = vadd.f32 %v595, 1e-05
      %v612 = vadd.f32 %v596, 1e-05
      %v613 = vadd.f32 %v597, 1e-05
      %v614 = vrsqrt.pop %v598
      %v615 = vrsqrt.pop %v599
      %v616 = vrsqrt.pop %v600
      %v617 = vrsqrt.pop %v601
      %v618 = vrsqrt.pop %v602
      %v619 = vrsqrt.pop %v603
      %v620 = vrsqrt.pop %v604
      %v621 = vrsqrt.pop %v605
      %v622 = vrsqrt.pop %v606
      %v623 = vrsqrt.pop %v607
      %v624 = vrsqrt.pop %v608
      %v625 = vrsqrt.pop %v609
      %v626 = vrsqrt.pop %v610
      %v627 = vrsqrt.pop %v611
      %v628 = vrsqrt.pop %v612
      %v629 = vrsqrt.pop %v613
      %v630 = vmul.f32 %v502, %v614
      %v631 = vmul.f32 %v503, %v615
      %v632 = vmul.f32 %v504, %v616
      %v633 = vmul.f32 %v505, %v617
      %v634 = vmul.f32 %v506, %v618
      %v635 = vmul.f32 %v507, %v619
      %v636 = vmul.f32 %v508, %v620
      %v637 = vmul.f32 %v509, %v621
      %v638 = vmul.f32 %v510, %v622
      %v639 = vmul.f32 %v511, %v623
      %v640 = vmul.f32 %v512, %v624
      %v641 = vmul.f32 %v513, %v625
      %v642 = vmul.f32 %v514, %v626
      %v643 = vmul.f32 %v515, %v627
      %v644 = vmul.f32 %v516, %v628
      %v645 = vmul.f32 %v517, %v629
      %v646 = vpack.c.bf16 %v631, %v630
      %v647 = vpack.c.bf16 %v633, %v632
      %v648 = vpack.c.bf16 %v635, %v634
      %v649 = vpack.c.bf16 %v637, %v636
      %v650 = vpack.c.bf16 %v639, %v638
      %v651 = vpack.c.bf16 %v641, %v640
      %v652 = vpack.c.bf16 %v643, %v642
      %v653 = vpack.c.bf16 %v645, %v644
      %v654 = vld [vmem:[%s1] sm:$0xf]
      %v655 = vld [vmem:[%s1 + $0x4] sm:$0xf]
      %v656 = vld [vmem:[%s1 + $0x8] sm:$0xf]
      %v657 = vld [vmem:[%s1 + $0xc] sm:$0xf]
      %v658 = vld [vmem:[%s1 + $0x10] sm:$0xf]
      %v659 = vld [vmem:[%s1 + $0x14] sm:$0xf]
      %v660 = vld [vmem:[%s1 + $0x18] sm:$0xf]
      %v661 = vld [vmem:[%s1 + $0x1c] sm:$0xf]
      %v662 = vld [vmem:[%s4] sm:$0x1]
      %v664 = vlaneseq
      %v665 = vshrl.u32 %v664, 7
      %v666 = vsub.s32 0, %v665
      %v667 = vrot.slane %v662, %v666
      %v677 = vunpack.c.l.b16 %v654
      %v678 = vunpack.c.l.b16 %v655
      %v679 = vunpack.c.l.b16 %v656
      %v680 = vunpack.c.l.b16 %v657
      %v681 = vunpack.c.l.b16 %v658
      %v682 = vunpack.c.l.b16 %v659
      %v683 = vunpack.c.l.b16 %v660
      %v684 = vunpack.c.l.b16 %v661
      %v685 = vpack.c.b16 %v678, %v677
      %v686 = vpack.c.b16 %v680, %v679
      %v687 = vpack.c.b16 %v682, %v681
      %v688 = vpack.c.b16 %v684, %v683
      %v694 = vsel %vm436, %v646, 0
      %v697 = vsel %vm436, %v647, 0
      %v700 = vsel %vm436, %v648, 0
      %v703 = vsel %vm436, %v649, 0
      %v706 = vsel %vm436, %v650, 0
      %v709 = vsel %vm436, %v651, 0
      %v712 = vsel %vm436, %v652, 0
      %v715 = vsel %vm436, %v653, 0
      %717 = vmatprep.subr.bf16.mxu0 0
      %718 = vmatpush1.bf16.msra.mxu0 %v685
      %719 = vmatprep.subr.bf16.mxu0 0
      %720 = vmatpush1.bf16.msra.mxu0 %v686
      %721 = vmatprep.subr.bf16.mxu0 0
      %722 = vmatpush1.bf16.msra.mxu0 %v687
      %723 = vmatprep.subr.bf16.mxu0 0
      %724 = vmatpush1.bf16.msra.mxu0 %v688
      %725 = vmatprep.subr.bf16.mxu0 0
      %726 = vmatpush1.bf16.msra.mxu0 0
      %727 = vmatprep.subr.bf16.mxu0 0
      %728 = vmatpush1.bf16.msra.mxu0 0
      %729 = vmatprep.subr.bf16.mxu0 0
      %730 = vmatpush1.bf16.msra.mxu0 0
      %731 = vmatprep.subr.bf16.mxu0 0
      %732 = vmatpush1.bf16.msra.mxu0 0
      %733 = vmatprep.subr.bf16.mxu0 0
      %734 = vmatpush1.bf16.msra.mxu0 0
      %735 = vmatprep.subr.bf16.mxu0 0
      %736 = vmatpush1.bf16.msra.mxu0 0
      %737 = vmatprep.subr.bf16.mxu0 0
      %738 = vmatpush1.bf16.msra.mxu0 0
      %739 = vmatprep.subr.bf16.mxu0 0
      %740 = vmatpush1.bf16.msra.mxu0 0
      %741 = vmatprep.subr.bf16.mxu0 0
      %742 = vmatpush1.bf16.msra.mxu0 0
      %743 = vmatprep.subr.bf16.mxu0 0
      %744 = vmatpush1.bf16.msra.mxu0 0
      %745 = vmatprep.subr.bf16.mxu0 0
      %746 = vmatpush1.bf16.msra.mxu0 0
      %747 = vmatprep.subr.bf16.mxu0 0
      %748 = vmatpush1.bf16.msra.mxu0 0
      %749 = vmatprep.mubr.bf16.mxu0 0
      %750 = vmatmul.mubr.bf16.gmra.mrb[0].mxu0 %v694
      %v751 = vpop.f32.mrb[0].mxu0
      %v752 = vadd.f32 %v667, %v751
      %v753 = vpop.f32.mrb[0].mxu0
      %v754 = vpop.f32.mrb[0].mxu0
      %v755 = vadd.f32 %v667, %v754
      %v756 = vpop.f32.mrb[0].mxu0
      %757 = vmatprep.mubr.bf16.mxu0 0
      %758 = vmatmul.mubr.bf16.gmra.mrb[0].mxu0 %v697
      %v759 = vpop.f32.mrb[0].mxu0
      %v760 = vadd.f32 %v667, %v759
      %v761 = vpop.f32.mrb[0].mxu0
      %v762 = vpop.f32.mrb[0].mxu0
      %v763 = vadd.f32 %v667, %v762
      %v764 = vpop.f32.mrb[0].mxu0
      %765 = vmatprep.mubr.bf16.mxu0 0
      %766 = vmatmul.mubr.bf16.gmra.mrb[0].mxu0 %v700
      %v767 = vpop.f32.mrb[0].mxu0
      %v768 = vadd.f32 %v667, %v767
      %v769 = vpop.f32.mrb[0].mxu0
      %v770 = vpop.f32.mrb[0].mxu0
      %v771 = vadd.f32 %v667, %v770
      %v772 = vpop.f32.mrb[0].mxu0
      %773 = vmatprep.mubr.bf16.mxu0 0
      %774 = vmatmul.mubr.bf16.gmra.mrb[0].mxu0 %v703
      %v775 = vpop.f32.mrb[0].mxu0
      %v776 = vadd.f32 %v667, %v775
      %v777 = vpop.f32.mrb[0].mxu0
      %v778 = vpop.f32.mrb[0].mxu0
      %v779 = vadd.f32 %v667, %v778
      %v780 = vpop.f32.mrb[0].mxu0
      %781 = vmatprep.mubr.bf16.mxu0 0
      %782 = vmatmul.mubr.bf16.gmra.mrb[0].mxu0 %v706
      %v783 = vpop.f32.mrb[0].mxu0
      %v784 = vadd.f32 %v667, %v783
      %v785 = vpop.f32.mrb[0].mxu0
      %v786 = vpop.f32.mrb[0].mxu0
      %v787 = vadd.f32 %v667, %v786
      %v788 = vpop.f32.mrb[0].mxu0
      %789 = vmatprep.mubr.bf16.mxu0 0
      %790 = vmatmul.mubr.bf16.gmra.mrb[0].mxu0 %v709
      %v791 = vpop.f32.mrb[0].mxu0
      %v792 = vadd.f32 %v667, %v791
      %v793 = vpop.f32.mrb[0].mxu0
      %v794 = vpop.f32.mrb[0].mxu0
      %v795 = vadd.f32 %v667, %v794
      %v796 = vpop.f32.mrb[0].mxu0
      %797 = vmatprep.mubr.bf16.mxu0 0
      %798 = vmatmul.mubr.bf16.gmra.mrb[0].mxu0 %v712
      %v799 = vpop.f32.mrb[0].mxu0
      %v800 = vadd.f32 %v667, %v799
      %v801 = vpop.f32.mrb[0].mxu0
      %v802 = vpop.f32.mrb[0].mxu0
      %v803 = vadd.f32 %v667, %v802
      %v804 = vpop.f32.mrb[0].mxu0
      %805 = vmatprep.mubr.bf16.mxu0 0
      %806 = vmatmul.mubr.bf16.gmra.mrb[0].mxu0 %v715
      %v807 = vpop.f32.mrb[0].mxu0
      %v808 = vadd.f32 %v667, %v807
      %v809 = vpop.f32.mrb[0].mxu0
      %v810 = vpop.f32.mrb[0].mxu0
      %v811 = vadd.f32 %v667, %v810
      %v812 = vpop.f32.mrb[0].mxu0
      %813 = vdwg.mxu0
      %v814 = vpack.c.bf16 %v755, %v752
      %v815 = vpack.c.bf16 %v763, %v760
      %v816 = vpack.c.bf16 %v771, %v768
      %v817 = vpack.c.bf16 %v779, %v776
      %v818 = vpack.c.bf16 %v787, %v784
      %v819 = vpack.c.bf16 %v795, %v792
      %v820 = vpack.c.bf16 %v803, %v800
      %v821 = vpack.c.bf16 %v811, %v808
      %v830 = vunpack.c.l.b16 %v814
      %v831 = vunpack.c.h.b16 %v814
      %v832 = vunpack.c.l.b16 %v815
      %v833 = vunpack.c.h.b16 %v815
      %v834 = vunpack.c.l.b16 %v816
      %v835 = vunpack.c.h.b16 %v816
      %v836 = vunpack.c.l.b16 %v817
      %v837 = vunpack.c.h.b16 %v817
      %v838 = vunpack.c.l.b16 %v818
      %v839 = vunpack.c.h.b16 %v818
      %v840 = vunpack.c.l.b16 %v819
      %v841 = vunpack.c.h.b16 %v819
      %v842 = vunpack.c.l.b16 %v820
      %v843 = vunpack.c.h.b16 %v820
      %v844 = vunpack.c.l.b16 %v821
      %v845 = vunpack.c.h.b16 %v821
      %v846 = vpack.c.b16 %v830, %v830
      %v847 = vpack.c.b16 %v831, %v831
      %v848 = vpack.c.b16 %v832, %v832
      %v849 = vpack.c.b16 %v833, %v833
      %v850 = vpack.c.b16 %v834, %v834
      %v851 = vpack.c.b16 %v835, %v835
      %v852 = vpack.c.b16 %v836, %v836
      %v853 = vpack.c.b16 %v837, %v837
      %v854 = vpack.c.b16 %v838, %v838
      %v855 = vpack.c.b16 %v839, %v839
      %v856 = vpack.c.b16 %v840, %v840
      %v857 = vpack.c.b16 %v841, %v841
      %v858 = vpack.c.b16 %v842, %v842
      %v859 = vpack.c.b16 %v843, %v843
      %v860 = vpack.c.b16 %v844, %v844
      %v861 = vpack.c.b16 %v845, %v845
      %vm878 = vcmask 519168
      %879 = vst.msk [vmem:[%s397] sm:$0xf] %vm878, %v846
      %880 = vst.msk [vmem:[%s397 + $0x4] sm:$0xf] %vm878, %v847
      %881 = vst.msk [vmem:[%s397 + $0x8] sm:$0xf] %vm878, %v848
      %882 = vst.msk [vmem:[%s397 + $0xc] sm:$0xf] %vm878, %v849
      %883 = vst.msk [vmem:[%s397 + $0x10] sm:$0xf] %vm878, %v850
      %884 = vst.msk [vmem:[%s397 + $0x14] sm:$0xf] %vm878, %v851
      %885 = vst.msk [vmem:[%s397 + $0x18] sm:$0xf] %vm878, %v852
      %886 = vst.msk [vmem:[%s397 + $0x1c] sm:$0xf] %vm878, %v853
      %887 = vst.msk [vmem:[%s397 + $0x20] sm:$0xf] %vm878, %v854
      %888 = vst.msk [vmem:[%s397 + $0x24] sm:$0xf] %vm878, %v855
      %889 = vst.msk [vmem:[%s397 + $0x28] sm:$0xf] %vm878, %v856
      %890 = vst.msk [vmem:[%s397 + $0x2c] sm:$0xf] %vm878, %v857
      %891 = vst.msk [vmem:[%s397 + $0x30] sm:$0xf] %vm878, %v858
      %892 = vst.msk [vmem:[%s397 + $0x34] sm:$0xf] %vm878, %v859
      %893 = vst.msk [vmem:[%s397 + $0x38] sm:$0xf] %vm878, %v860
      %894 = vst.msk [vmem:[%s397 + $0x3c] sm:$0xf] %vm878, %v861
      %v895 = vld [vmem:[%s2] sm:$0xf]
      %v896 = vld [vmem:[%s2 + $0x4] sm:$0xf]
      %v897 = vld [vmem:[%s2 + $0x8] sm:$0xf]
      %v898 = vld [vmem:[%s2 + $0xc] sm:$0xf]
      %v899 = vld [vmem:[%s2 + $0x10] sm:$0xf]
      %v900 = vld [vmem:[%s2 + $0x14] sm:$0xf]
      %v901 = vld [vmem:[%s2 + $0x18] sm:$0xf]
      %v902 = vld [vmem:[%s2 + $0x1c] sm:$0xf]
      %v903 = vld [vmem:[%s5] sm:$0x1]
      %v905 = vlaneseq
      %v906 = vshrl.u32 %v905, 7
      %v907 = vsub.s32 0, %v906
      %v908 = vrot.slane %v903, %v907
      %v918 = vunpack.c.l.b16 %v895
      %v919 = vunpack.c.l.b16 %v896
      %v920 = vunpack.c.l.b16 %v897
      %v921 = vunpack.c.l.b16 %v898
      %v922 = vunpack.c.l.b16 %v899
      %v923 = vunpack.c.l.b16 %v900
      %v924 = vunpack.c.l.b16 %v901
      %v925 = vunpack.c.l.b16 %v902
      %v926 = vpack.c.b16 %v919, %v918
      %v927 = vpack.c.b16 %v921, %v920
      %v928 = vpack.c.b16 %v923, %v922
      %v929 = vpack.c.b16 %v925, %v924
      %934 = vmatprep.subr.bf16.mxu0 0
      %935 = vmatpush1.bf16.msra.mxu0 %v926
      %936 = vmatprep.subr.bf16.mxu0 0
      %937 = vmatpush1.bf16.msra.mxu0 %v927
      %938 = vmatprep.subr.bf16.mxu0 0
      %939 = vmatpush1.bf16.msra.mxu0 %v928
      %940 = vmatprep.subr.bf16.mxu0 0
      %941 = vmatpush1.bf16.msra.mxu0 %v929
      %942 = vmatprep.subr.bf16.mxu0 0
      %943 = vmatpush1.bf16.msra.mxu0 0
      %944 = vmatprep.subr.bf16.mxu0 0
      %945 = vmatpush1.bf16.msra.mxu0 0
      %946 = vmatprep.subr.bf16.mxu0 0
      %947 = vmatpush1.bf16.msra.mxu0 0
      %948 = vmatprep.subr.bf16.mxu0 0
      %949 = vmatpush1.bf16.msra.mxu0 0
      %950 = vmatprep.subr.bf16.mxu0 0
      %951 = vmatpush1.bf16.msra.mxu0 0
      %952 = vmatprep.subr.bf16.mxu0 0
      %953 = vmatpush1.bf16.msra.mxu0 0
      %954 = vmatprep.subr.bf16.mxu0 0
      %955 = vmatpush1.bf16.msra.mxu0 0
      %956 = vmatprep.subr.bf16.mxu0 0
      %957 = vmatpush1.bf16.msra.mxu0 0
      %958 = vmatprep.subr.bf16.mxu0 0
      %959 = vmatpush1.bf16.msra.mxu0 0
      %960 = vmatprep.subr.bf16.mxu0 0
      %961 = vmatpush1.bf16.msra.mxu0 0
      %962 = vmatprep.subr.bf16.mxu0 0
      %963 = vmatpush1.bf16.msra.mxu0 0
      %964 = vmatprep.subr.bf16.mxu0 0
      %965 = vmatpush1.bf16.msra.mxu0 0
      %966 = vmatprep.mubr.bf16.mxu0 0
      %967 = vmatmul.mubr.bf16.gmra.mrb[0].mxu0 %v694
      %v968 = vpop.f32.mrb[0].mxu0
      %v969 = vadd.f32 %v908, %v968
      %v970 = vpop.f32.mrb[0].mxu0
      %v971 = vpop.f32.mrb[0].mxu0
      %v972 = vadd.f32 %v908, %v971
      %v973 = vpop.f32.mrb[0].mxu0
      %974 = vmatprep.mubr.bf16.mxu0 0
      %975 = vmatmul.mubr.bf16.gmra.mrb[0].mxu0 %v697
      %v976 = vpop.f32.mrb[0].mxu0
      %v977 = vadd.f32 %v908, %v976
      %v978 = vpop.f32.mrb[0].mxu0
      %v979 = vpop.f32.mrb[0].mxu0
      %v980 = vadd.f32 %v908, %v979
      %v981 = vpop.f32.mrb[0].mxu0
      %982 = vmatprep.mubr.bf16.mxu0 0
      %983 = vmatmul.mubr.bf16.gmra.mrb[0].mxu0 %v700
      %v984 = vpop.f32.mrb[0].mxu0
      %v985 = vadd.f32 %v908, %v984
      %v986 = vpop.f32.mrb[0].mxu0
      %v987 = vpop.f32.mrb[0].mxu0
      %v988 = vadd.f32 %v908, %v987
      %v989 = vpop.f32.mrb[0].mxu0
      %990 = vmatprep.mubr.bf16.mxu0 0
      %991 = vmatmul.mubr.bf16.gmra.mrb[0].mxu0 %v703
      %v992 = vpop.f32.mrb[0].mxu0
      %v993 = vadd.f32 %v908, %v992
      %v994 = vpop.f32.mrb[0].mxu0
      %v995 = vpop.f32.mrb[0].mxu0
      %v996 = vadd.f32 %v908, %v995
      %v997 = vpop.f32.mrb[0].mxu0
      %998 = vmatprep.mubr.bf16.mxu0 0
      %999 = vmatmul.mubr.bf16.gmra.mrb[0].mxu0 %v706
      %v1000 = vpop.f32.mrb[0].mxu0
      %v1001 = vadd.f32 %v908, %v1000
      %v1002 = vpop.f32.mrb[0].mxu0
      %v1003 = vpop.f32.mrb[0].mxu0
      %v1004 = vadd.f32 %v908, %v1003
      %v1005 = vpop.f32.mrb[0].mxu0
      %1006 = vmatprep.mubr.bf16.mxu0 0
      %1007 = vmatmul.mubr.bf16.gmra.mrb[0].mxu0 %v709
      %v1008 = vpop.f32.mrb[0].mxu0
      %v1009 = vadd.f32 %v908, %v1008
      %v1010 = vpop.f32.mrb[0].mxu0
      %v1011 = vpop.f32.mrb[0].mxu0
      %v1012 = vadd.f32 %v908, %v1011
      %v1013 = vpop.f32.mrb[0].mxu0
      %1014 = vmatprep.mubr.bf16.mxu0 0
      %1015 = vmatmul.mubr.bf16.gmra.mrb[0].mxu0 %v712
      %v1016 = vpop.f32.mrb[0].mxu0
      %v1017 = vadd.f32 %v908, %v1016
      %v1018 = vpop.f32.mrb[0].mxu0
      %v1019 = vpop.f32.mrb[0].mxu0
      %v1020 = vadd.f32 %v908, %v1019
      %v1021 = vpop.f32.mrb[0].mxu0
      %1022 = vmatprep.mubr.bf16.mxu0 0
      %1023 = vmatmul.mubr.bf16.gmra.mrb[0].mxu0 %v715
      %v1024 = vpop.f32.mrb[0].mxu0
      %v1025 = vadd.f32 %v908, %v1024
      %v1026 = vpop.f32.mrb[0].mxu0
      %v1027 = vpop.f32.mrb[0].mxu0
      %v1028 = vadd.f32 %v908, %v1027
      %v1029 = vpop.f32.mrb[0].mxu0
      %1030 = vdwg.mxu0
      %v1031 = vpack.c.bf16 %v972, %v969
      %v1032 = vpack.c.bf16 %v980, %v977
      %v1033 = vpack.c.bf16 %v988, %v985
      %v1034 = vpack.c.bf16 %v996, %v993
      %v1035 = vpack.c.bf16 %v1004, %v1001
      %v1036 = vpack.c.bf16 %v1012, %v1009
      %v1037 = vpack.c.bf16 %v1020, %v1017
      %v1038 = vpack.c.bf16 %v1028, %v1025
      %v1047 = vunpack.c.l.b16 %v1031
      %v1048 = vunpack.c.h.b16 %v1031
      %v1049 = vunpack.c.l.b16 %v1032
      %v1050 = vunpack.c.h.b16 %v1032
      %v1051 = vunpack.c.l.b16 %v1033
      %v1052 = vunpack.c.h.b16 %v1033
      %v1053 = vunpack.c.l.b16 %v1034
      %v1054 = vunpack.c.h.b16 %v1034
      %v1055 = vunpack.c.l.b16 %v1035
      %v1056 = vunpack.c.h.b16 %v1035
      %v1057 = vunpack.c.l.b16 %v1036
      %v1058 = vunpack.c.h.b16 %v1036
      %v1059 = vunpack.c.l.b16 %v1037
      %v1060 = vunpack.c.h.b16 %v1037
      %v1061 = vunpack.c.l.b16 %v1038
      %v1062 = vunpack.c.h.b16 %v1038
      %v1063 = vpack.c.b16 %v1047, %v1047
      %v1064 = vpack.c.b16 %v1048, %v1048
      %v1065 = vpack.c.b16 %v1049, %v1049
      %v1066 = vpack.c.b16 %v1050, %v1050
      %v1067 = vpack.c.b16 %v1051, %v1051
      %v1068 = vpack.c.b16 %v1052, %v1052
      %v1069 = vpack.c.b16 %v1053, %v1053
      %v1070 = vpack.c.b16 %v1054, %v1054
      %v1071 = vpack.c.b16 %v1055, %v1055
      %v1072 = vpack.c.b16 %v1056, %v1056
      %v1073 = vpack.c.b16 %v1057, %v1057
      %v1074 = vpack.c.b16 %v1058, %v1058
      %v1075 = vpack.c.b16 %v1059, %v1059
      %v1076 = vpack.c.b16 %v1060, %v1060
      %v1077 = vpack.c.b16 %v1061, %v1061
      %v1078 = vpack.c.b16 %v1062, %v1062
      %1095 = vst.msk [vmem:[%s407] sm:$0xf] %vm878, %v1063
      %1096 = vst.msk [vmem:[%s407 + $0x4] sm:$0xf] %vm878, %v1064
      %1097 = vst.msk [vmem:[%s407 + $0x8] sm:$0xf] %vm878, %v1065
      %1098 = vst.msk [vmem:[%s407 + $0xc] sm:$0xf] %vm878, %v1066
      %1099 = vst.msk [vmem:[%s407 + $0x10] sm:$0xf] %vm878, %v1067
      %1100 = vst.msk [vmem:[%s407 + $0x14] sm:$0xf] %vm878, %v1068
      %1101 = vst.msk [vmem:[%s407 + $0x18] sm:$0xf] %vm878, %v1069
      %1102 = vst.msk [vmem:[%s407 + $0x1c] sm:$0xf] %vm878, %v1070
      %1103 = vst.msk [vmem:[%s407 + $0x20] sm:$0xf] %vm878, %v1071
      %1104 = vst.msk [vmem:[%s407 + $0x24] sm:$0xf] %vm878, %v1072
      %1105 = vst.msk [vmem:[%s407 + $0x28] sm:$0xf] %vm878, %v1073
      %1106 = vst.msk [vmem:[%s407 + $0x2c] sm:$0xf] %vm878, %v1074
      %1107 = vst.msk [vmem:[%s407 + $0x30] sm:$0xf] %vm878, %v1075
      %1108 = vst.msk [vmem:[%s407 + $0x34] sm:$0xf] %vm878, %v1076
      %1109 = vst.msk [vmem:[%s407 + $0x38] sm:$0xf] %vm878, %v1077
      %1110 = vst.msk [vmem:[%s407 + $0x3c] sm:$0xf] %vm878, %v1078
      %v1111 = vld [vmem:[%s3] sm:$0xf]
      %v1112 = vld [vmem:[%s3 + $0x4] sm:$0xf]
      %v1113 = vld [vmem:[%s3 + $0x8] sm:$0xf]
      %v1114 = vld [vmem:[%s3 + $0xc] sm:$0xf]
      %v1115 = vld [vmem:[%s3 + $0x10] sm:$0xf]
      %v1116 = vld [vmem:[%s3 + $0x14] sm:$0xf]
      %v1117 = vld [vmem:[%s3 + $0x18] sm:$0xf]
      %v1118 = vld [vmem:[%s3 + $0x1c] sm:$0xf]
      %v1119 = vld [vmem:[%s6] sm:$0x1]
      %v1121 = vlaneseq
      %v1122 = vshrl.u32 %v1121, 7
      %v1123 = vsub.s32 0, %v1122
      %v1124 = vrot.slane %v1119, %v1123
      %v1134 = vunpack.c.l.b16 %v1111
      %v1135 = vunpack.c.l.b16 %v1112
      %v1136 = vunpack.c.l.b16 %v1113
      %v1137 = vunpack.c.l.b16 %v1114
      %v1138 = vunpack.c.l.b16 %v1115
      %v1139 = vunpack.c.l.b16 %v1116
      %v1140 = vunpack.c.l.b16 %v1117
      %v1141 = vunpack.c.l.b16 %v1118
      %v1142 = vpack.c.b16 %v1135, %v1134
      %v1143 = vpack.c.b16 %v1137, %v1136
      %v1144 = vpack.c.b16 %v1139, %v1138
      %v1145 = vpack.c.b16 %v1141, %v1140
      %1150 = vmatprep.subr.bf16.mxu0 0
      %1151 = vmatpush1.bf16.msra.mxu0 %v1142
      %1152 = vmatprep.subr.bf16.mxu0 0
      %1153 = vmatpush1.bf16.msra.mxu0 %v1143
      %1154 = vmatprep.subr.bf16.mxu0 0
      %1155 = vmatpush1.bf16.msra.mxu0 %v1144
      %1156 = vmatprep.subr.bf16.mxu0 0
      %1157 = vmatpush1.bf16.msra.mxu0 %v1145
      %1158 = vmatprep.subr.bf16.mxu0 0
      %1159 = vmatpush1.bf16.msra.mxu0 0
      %1160 = vmatprep.subr.bf16.mxu0 0
      %1161 = vmatpush1.bf16.msra.mxu0 0
      %1162 = vmatprep.subr.bf16.mxu0 0
      %1163 = vmatpush1.bf16.msra.mxu0 0
      %1164 = vmatprep.subr.bf16.mxu0 0
      %1165 = vmatpush1.bf16.msra.mxu0 0
      %1166 = vmatprep.subr.bf16.mxu0 0
      %1167 = vmatpush1.bf16.msra.mxu0 0
      %1168 = vmatprep.subr.bf16.mxu0 0
      %1169 = vmatpush1.bf16.msra.mxu0 0
      %1170 = vmatprep.subr.bf16.mxu0 0
      %1171 = vmatpush1.bf16.msra.mxu0 0
      %1172 = vmatprep.subr.bf16.mxu0 0
      %1173 = vmatpush1.bf16.msra.mxu0 0
      %1174 = vmatprep.subr.bf16.mxu0 0
      %1175 = vmatpush1.bf16.msra.mxu0 0
      %1176 = vmatprep.subr.bf16.mxu0 0
      %1177 = vmatpush1.bf16.msra.mxu0 0
      %1178 = vmatprep.subr.bf16.mxu0 0
      %1179 = vmatpush1.bf16.msra.mxu0 0
      %1180 = vmatprep.subr.bf16.mxu0 0
      %1181 = vmatpush1.bf16.msra.mxu0 0
      %1182 = vmatprep.mubr.bf16.mxu0 0
      %1183 = vmatmul.mubr.bf16.gmra.mrb[0].mxu0 %v694
      %v1184 = vpop.f32.mrb[0].mxu0
      %v1185 = vadd.f32 %v1124, %v1184
      %v1186 = vpop.f32.mrb[0].mxu0
      %v1187 = vpop.f32.mrb[0].mxu0
      %v1188 = vadd.f32 %v1124, %v1187
      %v1189 = vpop.f32.mrb[0].mxu0
      %1190 = vmatprep.mubr.bf16.mxu0 0
      %1191 = vmatmul.mubr.bf16.gmra.mrb[0].mxu0 %v697
      %v1192 = vpop.f32.mrb[0].mxu0
      %v1193 = vadd.f32 %v1124, %v1192
      %v1194 = vpop.f32.mrb[0].mxu0
      %v1195 = vpop.f32.mrb[0].mxu0
      %v1196 = vadd.f32 %v1124, %v1195
      %v1197 = vpop.f32.mrb[0].mxu0
      %1198 = vmatprep.mubr.bf16.mxu0 0
      %1199 = vmatmul.mubr.bf16.gmra.mrb[0].mxu0 %v700
      %v1200 = vpop.f32.mrb[0].mxu0
      %v1201 = vadd.f32 %v1124, %v1200
      %v1202 = vpop.f32.mrb[0].mxu0
      %v1203 = vpop.f32.mrb[0].mxu0
      %v1204 = vadd.f32 %v1124, %v1203
      %v1205 = vpop.f32.mrb[0].mxu0
      %1206 = vmatprep.mubr.bf16.mxu0 0
      %1207 = vmatmul.mubr.bf16.gmra.mrb[0].mxu0 %v703
      %v1208 = vpop.f32.mrb[0].mxu0
      %v1209 = vadd.f32 %v1124, %v1208
      %v1210 = vpop.f32.mrb[0].mxu0
      %v1211 = vpop.f32.mrb[0].mxu0
      %v1212 = vadd.f32 %v1124, %v1211
      %v1213 = vpop.f32.mrb[0].mxu0
      %1214 = vmatprep.mubr.bf16.mxu0 0
      %1215 = vmatmul.mubr.bf16.gmra.mrb[0].mxu0 %v706
      %v1216 = vpop.f32.mrb[0].mxu0
      %v1217 = vadd.f32 %v1124, %v1216
      %v1218 = vpop.f32.mrb[0].mxu0
      %v1219 = vpop.f32.mrb[0].mxu0
      %v1220 = vadd.f32 %v1124, %v1219
      %v1221 = vpop.f32.mrb[0].mxu0
      %1222 = vmatprep.mubr.bf16.mxu0 0
      %1223 = vmatmul.mubr.bf16.gmra.mrb[0].mxu0 %v709
      %v1224 = vpop.f32.mrb[0].mxu0
      %v1225 = vadd.f32 %v1124, %v1224
      %v1226 = vpop.f32.mrb[0].mxu0
      %v1227 = vpop.f32.mrb[0].mxu0
      %v1228 = vadd.f32 %v1124, %v1227
      %v1229 = vpop.f32.mrb[0].mxu0
      %1230 = vmatprep.mubr.bf16.mxu0 0
      %1231 = vmatmul.mubr.bf16.gmra.mrb[0].mxu0 %v712
      %v1232 = vpop.f32.mrb[0].mxu0
      %v1233 = vadd.f32 %v1124, %v1232
      %v1234 = vpop.f32.mrb[0].mxu0
      %v1235 = vpop.f32.mrb[0].mxu0
      %v1236 = vadd.f32 %v1124, %v1235
      %v1237 = vpop.f32.mrb[0].mxu0
      %1238 = vmatprep.mubr.bf16.mxu0 0
      %1239 = vmatmul.mubr.bf16.gmra.mrb[0].mxu0 %v715
      %v1240 = vpop.f32.mrb[0].mxu0
      %v1241 = vadd.f32 %v1124, %v1240
      %v1242 = vpop.f32.mrb[0].mxu0
      %v1243 = vpop.f32.mrb[0].mxu0
      %v1244 = vadd.f32 %v1124, %v1243
      %v1245 = vpop.f32.mrb[0].mxu0
      %1246 = vdwg.mxu0
      %v1247 = vpack.c.bf16 %v1188, %v1185
      %v1248 = vpack.c.bf16 %v1196, %v1193
      %v1249 = vpack.c.bf16 %v1204, %v1201
      %v1250 = vpack.c.bf16 %v1212, %v1209
      %v1251 = vpack.c.bf16 %v1220, %v1217
      %v1252 = vpack.c.bf16 %v1228, %v1225
      %v1253 = vpack.c.bf16 %v1236, %v1233
      %v1254 = vpack.c.bf16 %v1244, %v1241
      %v1263 = vunpack.c.l.b16 %v1247
      %v1264 = vunpack.c.h.b16 %v1247
      %v1265 = vunpack.c.l.b16 %v1248
      %v1266 = vunpack.c.h.b16 %v1248
      %v1267 = vunpack.c.l.b16 %v1249
      %v1268 = vunpack.c.h.b16 %v1249
      %v1269 = vunpack.c.l.b16 %v1250
      %v1270 = vunpack.c.h.b16 %v1250
      %v1271 = vunpack.c.l.b16 %v1251
      %v1272 = vunpack.c.h.b16 %v1251
      %v1273 = vunpack.c.l.b16 %v1252
      %v1274 = vunpack.c.h.b16 %v1252
      %v1275 = vunpack.c.l.b16 %v1253
      %v1276 = vunpack.c.h.b16 %v1253
      %v1277 = vunpack.c.l.b16 %v1254
      %v1278 = vunpack.c.h.b16 %v1254
      %v1279 = vpack.c.b16 %v1263, %v1263
      %v1280 = vpack.c.b16 %v1264, %v1264
      %v1281 = vpack.c.b16 %v1265, %v1265
      %v1282 = vpack.c.b16 %v1266, %v1266
      %v1283 = vpack.c.b16 %v1267, %v1267
      %v1284 = vpack.c.b16 %v1268, %v1268
      %v1285 = vpack.c.b16 %v1269, %v1269
      %v1286 = vpack.c.b16 %v1270, %v1270
      %v1287 = vpack.c.b16 %v1271, %v1271
      %v1288 = vpack.c.b16 %v1272, %v1272
      %v1289 = vpack.c.b16 %v1273, %v1273
      %v1290 = vpack.c.b16 %v1274, %v1274
      %v1291 = vpack.c.b16 %v1275, %v1275
      %v1292 = vpack.c.b16 %v1276, %v1276
      %v1293 = vpack.c.b16 %v1277, %v1277
      %v1294 = vpack.c.b16 %v1278, %v1278
      %1311 = vst.msk [vmem:[%s417] sm:$0xf] %vm878, %v1279
      %1312 = vst.msk [vmem:[%s417 + $0x4] sm:$0xf] %vm878, %v1280
      %1313 = vst.msk [vmem:[%s417 + $0x8] sm:$0xf] %vm878, %v1281
      %1314 = vst.msk [vmem:[%s417 + $0xc] sm:$0xf] %vm878, %v1282
      %1315 = vst.msk [vmem:[%s417 + $0x10] sm:$0xf] %vm878, %v1283
      %1316 = vst.msk [vmem:[%s417 + $0x14] sm:$0xf] %vm878, %v1284
      %1317 = vst.msk [vmem:[%s417 + $0x18] sm:$0xf] %vm878, %v1285
      %1318 = vst.msk [vmem:[%s417 + $0x1c] sm:$0xf] %vm878, %v1286
      %1319 = vst.msk [vmem:[%s417 + $0x20] sm:$0xf] %vm878, %v1287
      %1320 = vst.msk [vmem:[%s417 + $0x24] sm:$0xf] %vm878, %v1288
      %1321 = vst.msk [vmem:[%s417 + $0x28] sm:$0xf] %vm878, %v1289
      %1322 = vst.msk [vmem:[%s417 + $0x2c] sm:$0xf] %vm878, %v1290
      %1323 = vst.msk [vmem:[%s417 + $0x30] sm:$0xf] %vm878, %v1291
      %1324 = vst.msk [vmem:[%s417 + $0x34] sm:$0xf] %vm878, %v1292
      %1325 = vst.msk [vmem:[%s417 + $0x38] sm:$0xf] %vm878, %v1293
      %1326 = vst.msk [vmem:[%s417 + $0x3c] sm:$0xf] %vm878, %v1294
      %s1327 = smul.u32 16, %s26
      %p1328 = scmp.lt.s32.totalorder %s25, 1
      %s1329 = scalar_select %p1328, %s25, 1
      %p1330 = scmp.lt.s32.totalorder %s1327, 15
      %s1331 = scalar_select %p1330, %s1327, 15
      %s1332 = smul.addr %s1329, 16
      %s1333 = sadd.s32 %s1331, %s1332
      %s1334 = smul.addr %s1333, 4
      %s1335 = scalar_lea.vmem %s7, %s1334
      %s1336 = smul.u32 16, %s26
      %p1337 = scmp.lt.s32.totalorder %s25, 1
      %s1338 = scalar_select %p1337, %s25, 1
      %p1339 = scmp.lt.s32.totalorder %s1336, 15
      %s1340 = scalar_select %p1339, %s1336, 15
      %s1341 = smul.addr %s1338, 16
      %s1342 = sadd.s32 %s1340, %s1341
      %s1343 = smul.addr %s1342, 4
      %s1344 = scalar_lea.vmem %s8, %s1343
      %s1345 = smul.u32 16, %s26
      %p1346 = scmp.lt.s32.totalorder %s25, 1
      %s1347 = scalar_select %p1346, %s25, 1
      %p1348 = scmp.lt.s32.totalorder %s1345, 15
      %s1349 = scalar_select %p1348, %s1345, 15
      %s1350 = smul.addr %s1347, 16
      %s1351 = sadd.s32 %s1349, %s1350
      %s1352 = smul.addr %s1351, 4
      %s1353 = scalar_lea.vmem %s9, %s1352
      // Predicated region
      $region49: #{block_forward.3} parent=47 // pred_check
        %p1354 = pneg %p207
      $region50: #{block_forward.3} parent=47 // pred_check_branch
        %1356 = sbr.rel (%p1354) target = $region52
      $region51: #{block_forward.3} parent=47 // pred_region
        %s1357 = smul.u32 16, %s26
      $region52: #{block_forward.3} parent=47 // pred_fallthru
        _
      // Predicated region
      $region53: #{block_forward.3} parent=47 // pred_check
        %p1358 = pneg %p235
      $region54: #{block_forward.3} parent=47 // pred_check_branch
        %1360 = sbr.rel (%p1358) target = $region56
      $region55: #{block_forward.3} parent=47 // pred_region
        %s1361 = smul.u32 16, %s26
      $region56: #{block_forward.3} parent=47 // pred_fallthru
        _
      // Predicated region
      $region57: #{block_forward.3} parent=47 // pred_check
        %p1362 = pneg %p263
      $region58: #{block_forward.3} parent=47 // pred_check_branch
        %1364 = sbr.rel (%p1362) target = $region60
      $region59: #{block_forward.3} parent=47 // pred_region
        %s1365 = smul.u32 16, %s26
      $region60: #{block_forward.3} parent=47 // pred_fallthru
        _
    $region48: #{block_forward.3} parent=5 // pred_fallthru
      _
    %p1366 = scmp.le.s32.totalorder 2, %s16
    // Predicated region
    $region61: #{block_forward.3} parent=5 // pred_check
      %p1367 = pneg %p1366
    $region62: #{block_forward.3} parent=5 // pred_check_branch
      %1369 = sbr.rel (%p1367) target = $region64
    $region63: #{block_forward.3} parent=5 // pred_region
      %s1370 = ssub.s32 %s16, 2
      // Predicated region
      $region65: #{block_forward.3} parent=63 // pred_check
        %p1371 = pneg %p213
      $region66: #{block_forward.3} parent=63 // pred_check_branch
        %1373 = sbr.rel (%p1371) target = $region68
      $region67: #{block_forward.3} parent=63 // pred_region
        %s1374 = smul.u32 16, %s28
        %p1375 = scmp.lt.s32.totalorder %s27, 1
        %s1376 = scalar_select %p1375, %s27, 1
        %p1377 = scmp.lt.s32.totalorder %s1374, 15
        %s1378 = scalar_select %p1377, %s1374, 15
        %s1379 = smul.addr %s1376, 16
        %s1380 = sadd.s32 %s1378, %s1379
        %s1381 = smul.addr %s1380, 4
        %s1382 = scalar_lea.vmem %s7, %s1381
      $region68: #{block_forward.3} parent=63 // pred_fallthru
        _
      // Predicated region
      $region69: #{block_forward.3} parent=63 // pred_check
        %p1383 = pneg %p241
      $region70: #{block_forward.3} parent=63 // pred_check_branch
        %1385 = sbr.rel (%p1383) target = $region72
      $region71: #{block_forward.3} parent=63 // pred_region
        %s1386 = smul.u32 16, %s28
        %p1387 = scmp.lt.s32.totalorder %s27, 1
        %s1388 = scalar_select %p1387, %s27, 1
        %p1389 = scmp.lt.s32.totalorder %s1386, 15
        %s1390 = scalar_select %p1389, %s1386, 15
        %s1391 = smul.addr %s1388, 16
        %s1392 = sadd.s32 %s1390, %s1391
        %s1393 = smul.addr %s1392, 4
        %s1394 = scalar_lea.vmem %s8, %s1393
      $region72: #{block_forward.3} parent=63 // pred_fallthru
        _
      // Predicated region
      $region73: #{block_forward.3} parent=63 // pred_check
        %p1395 = pneg %p269
      $region74: #{block_forward.3} parent=63 // pred_check_branch
        %1397 = sbr.rel (%p1395) target = $region76
      $region75: #{block_forward.3} parent=63 // pred_region
        %s1398 = smul.u32 16, %s28
        %p1399 = scmp.lt.s32.totalorder %s27, 1
        %s1400 = scalar_select %p1399, %s27, 1
        %p1401 = scmp.lt.s32.totalorder %s1398, 15
        %s1402 = scalar_select %p1401, %s1398, 15
        %s1403 = smul.addr %s1400, 16
        %s1404 = sadd.s32 %s1402, %s1403
        %s1405 = smul.addr %s1404, 4
        %s1406 = scalar_lea.vmem %s9, %s1405
      $region76: #{block_forward.3} parent=63 // pred_fallthru
        _
    $region64: #{block_forward.3} parent=5 // pred_fallthru
      _
  $region6: #{block_forward.3} parent=0 // loop_footer
    %s20 = sadd.s32 1, %s16
  $region7: #{block_forward.3} parent=0 // loop_footer_branch
    %15 = sbr.rel target = $region3
  $region8: #{block_forward.3} parent=0 // loop_exit
    _

// kernel: block_forward.4
$region0: #{block_forward.4}
  #allocation0 [shape = 'u32[]', space=smem, size = 0x4, offset = 0x4, fixed_abs, tag = 'smem constant byte address 0x4 - core index']
  #allocation1 [shape = 'u32[144,128]{1,0:T(1,128)}', space=vmem, size = 0x12000, scoped, tag = 'internal scratch']
  #allocation2 [shape = 'bf16[64,64]{1,0:T(16,128)(2,1)}', space=vmem, size = 0x4000, scoped, tag = 'scratch operand']
  %s0 = inlined_call_operand.vmem [shape: bf16[2,128,64], index: 0, kind: input, shape index: {}]
  %s1 = inlined_call_operand.vmem [shape: bf16[2,128,64], index: 1, kind: input, shape index: {}]
  %s2 = inlined_call_operand.vmem [shape: bf16[2,128,64], index: 2, kind: input, shape index: {}]
  %s3 = inlined_call_operand.vmem [shape: f32[2,128,64], index: 3, kind: input, shape index: {}]
  %s4 = inlined_call_operand.vmem [shape: bf16[64,64], index: 4, kind: input, shape index: {}]
  %s5 = inlined_call_operand.vmem [shape: f32[1,64], index: 5, kind: input, shape index: {}]
  %s6 = inlined_call_operand.vmem [shape: f32[2,128,64], index: 6, kind: output, shape index: {}]
  %s7 = sld [smem:[#allocation0]]
  $region57: #{block_forward.4} parent=0
    _
  %s9 = ssub.s32 1, %s7
  %s10 = scalar_select 0, %s9, %s7
  loop: start=0, step=1, limit=6
  $region2: #{block_forward.4} parent=0 // loop_pre_header
    _
  $region3: #{block_forward.4} parent=0 // loop_header
    %s12 = sphi 0, %s16
    %p13 = scmp.ge.s32.totalorder %s12, 6
    %s19 = sphi 0, %s31
    %s20 = sphi 0, %s27
    %s21 = sphi 0, %s19
    %s22 = sphi 0, %s20
    %s23 = sphi 0, %s21
    %s24 = sphi 0, %s22
    %s36 = sphi 0, %s38
    %s39 = sphi 0, %s36
    %s40 = sphi 0, %s39
    %s56 = sphi 0, %s40
    %s62 = sphi 0, %s64
    %s65 = sphi 0, %s62
    %s66 = sphi 0, %s65
    %s82 = sphi 0, %s66
    %s88 = sphi 0, %s90
    %s91 = sphi 0, %s88
    %s92 = sphi 0, %s91
    %s108 = sphi 0, %s92
    %s116 = sphi 0, %s118
    %s119 = sphi 0, %s116
    %s120 = sphi 0, %s119
    %s136 = sphi 0, %s120
    %s140 = sphi 0, %s140
    %s142 = sphi 0, %s140
    %s143 = sphi 0, %s142
    %s157 = sphi 0, %s143
    %s161 = sphi 0, %s161
    %s163 = sphi 0, %s161
    %s164 = sphi 0, %s163
    %s178 = sphi 0, %s164
    %s186 = sphi 0, %s188
    %s189 = sphi 0, %s186
    %s190 = sphi 0, %s189
    %s206 = sphi 0, %s190
  $region4: #{block_forward.4} parent=0 // loop_header_branch
    %15 = sbr.rel (%p13) target = $region8
  $region5: #{block_forward.4} parent=0 // loop_body
    %s17 = ssub.s32 %s12, 1
    %s18 = ssub.s32 %s12, 2
    %s25 = sadd.s32 1, %s20
    %p26 = scmp.ge.s32.totalorder %s25, 2
    %s27 = scalar_select %p26, 0, %s25
    %s28 = sadd.s32 1, %s19
    %s29 = scalar_select %p26, %s28, %s19
    %p30 = scmp.ge.s32.totalorder %s29, 2
    %s31 = scalar_select %p30, 0, %s29
    %s32 = ssub.s32 %s19, %s31
    %s33 = ssub.s32 %s20, %s27
    %s34 = sor.u32 %s32, %s33
    %p35 = scmp.eq.s32.totalorder %s34, 0
    %s37 = sadd.s32 %s36, 1
    %s38 = scalar_select %p35, %s36, %s37
    %p41 = pneg %p35
    %p42 = scmp.eq.s32.totalorder %s12, 3
    %p43 = por %p41, %p42
    %p44 = scmp.ne.s32.totalorder %s36, %s39
    %p45 = scmp.eq.s32.totalorder %s12, 0
    %p46 = por %p44, %p45
    %p47 = scmp.ne.s32.totalorder %s36, %s39
    %p48 = scmp.eq.s32.totalorder %s17, 3
    %p49 = por %p47, %p48
    %p50 = scmp.ne.s32.totalorder %s39, %s40
    %p51 = scmp.eq.s32.totalorder %s17, 0
    %p52 = por %p50, %p51
    %p53 = scmp.ne.s32.totalorder %s39, %s40
    %p54 = scmp.eq.s32.totalorder %s18, 3
    %p55 = por %p53, %p54
    %p57 = scmp.ne.s32.totalorder %s40, %s56
    %p58 = scmp.eq.s32.totalorder %s18, 0
    %p59 = por %p57, %p58
    %s60 = ssub.s32 %s19, %s31
    %p61 = scmp.eq.s32.totalorder %s60, 0
    %s63 = sadd.s32 %s62, 1
    %s64 = scalar_select %p61, %s62, %s63
    %p67 = pneg %p61
    %p68 = scmp.eq.s32.totalorder %s12, 3
    %p69 = por %p67, %p68
    %p70 = scmp.ne.s32.totalorder %s62, %s65
    %p71 = scmp.eq.s32.totalorder %s12, 0
    %p72 = por %p70, %p71
    %p73 = scmp.ne.s32.totalorder %s62, %s65
    %p74 = scmp.eq.s32.totalorder %s17, 3
    %p75 = por %p73, %p74
    %p76 = scmp.ne.s32.totalorder %s65, %s66
    %p77 = scmp.eq.s32.totalorder %s17, 0
    %p78 = por %p76, %p77
    %p79 = scmp.ne.s32.totalorder %s65, %s66
    %p80 = scmp.eq.s32.totalorder %s18, 3
    %p81 = por %p79, %p80
    %p83 = scmp.ne.s32.totalorder %s66, %s82
    %p84 = scmp.eq.s32.totalorder %s18, 0
    %p85 = por %p83, %p84
    %s86 = ssub.s32 %s19, %s31
    %p87 = scmp.eq.s32.totalorder %s86, 0
    %s89 = sadd.s32 %s88, 1
    %s90 = scalar_select %p87, %s88, %s89
    %p93 = pneg %p87
    %p94 = scmp.eq.s32.totalorder %s12, 3
    %p95 = por %p93, %p94
    %p96 = scmp.ne.s32.totalorder %s88, %s91
    %p97 = scmp.eq.s32.totalorder %s12, 0
    %p98 = por %p96, %p97
    %p99 = scmp.ne.s32.totalorder %s88, %s91
    %p100 = scmp.eq.s32.totalorder %s17, 3
    %p101 = por %p99, %p100
    %p102 = scmp.ne.s32.totalorder %s91, %s92
    %p103 = scmp.eq.s32.totalorder %s17, 0
    %p104 = por %p102, %p103
    %p105 = scmp.ne.s32.totalorder %s91, %s92
    %p106 = scmp.eq.s32.totalorder %s18, 3
    %p107 = por %p105, %p106
    %p109 = scmp.ne.s32.totalorder %s92, %s108
    %p110 = scmp.eq.s32.totalorder %s18, 0
    %p111 = por %p109, %p110
    %s112 = ssub.s32 %s19, %s31
    %s113 = ssub.s32 %s20, %s27
    %s114 = sor.u32 %s112, %s113
    %p115 = scmp.eq.s32.totalorder %s114, 0
    %s117 = sadd.s32 %s116, 1
    %s118 = scalar_select %p115, %s116, %s117
    %p121 = pneg %p115
    %p122 = scmp.eq.s32.totalorder %s12, 3
    %p123 = por %p121, %p122
    %p124 = scmp.ne.s32.totalorder %s116, %s119
    %p125 = scmp.eq.s32.totalorder %s12, 0
    %p126 = por %p124, %p125
    %p127 = scmp.ne.s32.totalorder %s116, %s119
    %p128 = scmp.eq.s32.totalorder %s17, 3
    %p129 = por %p127, %p128
    %p130 = scmp.ne.s32.totalorder %s119, %s120
    %p131 = scmp.eq.s32.totalorder %s17, 0
    %p132 = por %p130, %p131
    %p133 = scmp.ne.s32.totalorder %s119, %s120
    %p134 = scmp.eq.s32.totalorder %s18, 3
    %p135 = por %p133, %p134
    %p137 = scmp.ne.s32.totalorder %s120, %s136
    %p138 = scmp.eq.s32.totalorder %s18, 0
    %p139 = por %p137, %p138
    %s141 = sadd.s32 %s140, 1
    %p144 = scmp.eq.s32.totalorder %s12, 3
    %p145 = scmp.ne.s32.totalorder %s140, %s142
    %p146 = scmp.eq.s32.totalorder %s12, 0
    %p147 = por %p145, %p146
    %p148 = scmp.ne.s32.totalorder %s140, %s142
    %p149 = scmp.eq.s32.totalorder %s17, 3
    %p150 = por %p148, %p149
    %p151 = scmp.ne.s32.totalorder %s142, %s143
    %p152 = scmp.eq.s32.totalorder %s17, 0
    %p153 = por %p151, %p152
    %p154 = scmp.ne.s32.totalorder %s142, %s143
    %p155 = scmp.eq.s32.totalorder %s18, 3
    %p156 = por %p154, %p155
    %p158 = scmp.ne.s32.totalorder %s143, %s157
    %p159 = scmp.eq.s32.totalorder %s18, 0
    %p160 = por %p158, %p159
    %s162 = sadd.s32 %s161, 1
    %p165 = scmp.eq.s32.totalorder %s12, 3
    %p166 = scmp.ne.s32.totalorder %s161, %s163
    %p167 = scmp.eq.s32.totalorder %s12, 0
    %p168 = por %p166, %p167
    %p169 = scmp.ne.s32.totalorder %s161, %s163
    %p170 = scmp.eq.s32.totalorder %s17, 3
    %p171 = por %p169, %p170
    %p172 = scmp.ne.s32.totalorder %s163, %s164
    %p173 = scmp.eq.s32.totalorder %s17, 0
    %p174 = por %p172, %p173
    %p175 = scmp.ne.s32.totalorder %s163, %s164
    %p176 = scmp.eq.s32.totalorder %s18, 3
    %p177 = por %p175, %p176
    %p179 = scmp.ne.s32.totalorder %s164, %s178
    %p180 = scmp.eq.s32.totalorder %s18, 0
    %p181 = por %p179, %p180
    %s182 = ssub.s32 %s19, %s31
    %s183 = ssub.s32 %s20, %s27
    %s184 = sor.u32 %s182, %s183
    %p185 = scmp.eq.s32.totalorder %s184, 0
    %s187 = sadd.s32 %s186, 1
    %s188 = scalar_select %p185, %s186, %s187
    %p191 = pneg %p185
    %p192 = scmp.eq.s32.totalorder %s12, 3
    %p193 = por %p191, %p192
    %p194 = scmp.ne.s32.totalorder %s186, %s189
    %p195 = scmp.eq.s32.totalorder %s12, 0
    %p196 = por %p194, %p195
    %p197 = scmp.ne.s32.totalorder %s186, %s189
    %p198 = scmp.eq.s32.totalorder %s17, 3
    %p199 = por %p197, %p198
    %p200 = scmp.ne.s32.totalorder %s189, %s190
    %p201 = scmp.eq.s32.totalorder %s17, 0
    %p202 = por %p200, %p201
    %p203 = scmp.ne.s32.totalorder %s189, %s190
    %p204 = scmp.eq.s32.totalorder %s18, 3
    %p205 = por %p203, %p204
    %p207 = scmp.ne.s32.totalorder %s190, %s206
    %p208 = scmp.eq.s32.totalorder %s18, 0
    %p209 = por %p207, %p208
    %p210 = scmp.le.s32.totalorder 1, %s12
    %p211 = scmp.lt.s32.totalorder %s12, 5
    %p212 = pnand %p210, %p211
    %p213 = pneg %p212
    // Predicated region
    $region9: #{block_forward.4} parent=5 // pred_check
      _
    $region10: #{block_forward.4} parent=5 // pred_check_branch
      %215 = sbr.rel (%p212) target = $region12
    $region11: #{block_forward.4} parent=5 // pred_region
      %s216 = ssub.s32 %s12, 1
      // Predicated region
      $region13: #{block_forward.4} parent=11 // pred_check
        %p217 = pneg %p153
      $region14: #{block_forward.4} parent=11 // pred_check_branch
        %219 = sbr.rel (%p217) target = $region16
      $region15: #{block_forward.4} parent=11 // pred_region
        _
      $region16: #{block_forward.4} parent=11 // pred_fallthru
        _
      // Predicated region
      $region17: #{block_forward.4} parent=11 // pred_check
        %p220 = pneg %p174
      $region18: #{block_forward.4} parent=11 // pred_check_branch
        %222 = sbr.rel (%p220) target = $region20
      $region19: #{block_forward.4} parent=11 // pred_region
        _
      $region20: #{block_forward.4} parent=11 // pred_fallthru
        _
    $region12: #{block_forward.4} parent=5 // pred_fallthru
      _
    %p223 = scmp.lt.s32.totalorder %s12, 4
    // Predicated region
    $region21: #{block_forward.4} parent=5 // pred_check
      %p224 = pneg %p223
    $region22: #{block_forward.4} parent=5 // pred_check_branch
      %226 = sbr.rel (%p224) target = $region24
    $region23: #{block_forward.4} parent=5 // pred_region
      // Predicated region
      $region25: #{block_forward.4} parent=23 // pred_check
        %p227 = pneg %p46
      $region26: #{block_forward.4} parent=23 // pred_check_branch
        %229 = sbr.rel (%p227) target = $region28
      $region27: #{block_forward.4} parent=23 // pred_region
        %s230 = smul.u32 8, %s20
        %p231 = scmp.lt.s32.totalorder %s19, 1
        %s232 = scalar_select %p231, %s19, 1
        %p233 = scmp.lt.s32.totalorder %s230, 15
        %s234 = scalar_select %p233, %s230, 15
        %s235 = smul.addr %s232, 16
        %s236 = sadd.s32 %s234, %s235
        %s237 = smul.addr %s236, 4
        %s238 = scalar_lea.vmem %s0, %s237
        %s239 = smul.u32 8, %s20
      $region28: #{block_forward.4} parent=23 // pred_fallthru
        _
      // Predicated region
      $region29: #{block_forward.4} parent=23 // pred_check
        %p240 = pneg %p72
      $region30: #{block_forward.4} parent=23 // pred_check_branch
        %242 = sbr.rel (%p240) target = $region32
      $region31: #{block_forward.4} parent=23 // pred_region
        %p243 = scmp.lt.s32.totalorder %s19, 1
        %s244 = scalar_select %p243, %s19, 1
        %s245 = smul.addr %s244, 16
        %s246 = smul.addr %s245, 4
        %s247 = scalar_lea.vmem %s1, %s246
      $region32: #{block_forward.4} parent=23 // pred_fallthru
        _
      // Predicated region
      $region33: #{block_forward.4} parent=23 // pred_check
        %p248 = pneg %p98
      $region34: #{block_forward.4} parent=23 // pred_check_branch
        %250 = sbr.rel (%p248) target = $region36
      $region35: #{block_forward.4} parent=23 // pred_region
        %p251 = scmp.lt.s32.totalorder %s19, 1
        %s252 = scalar_select %p251, %s19, 1
        %s253 = smul.addr %s252, 16
        %s254 = smul.addr %s253, 4
        %s255 = scalar_lea.vmem %s2, %s254
      $region36: #{block_forward.4} parent=23 // pred_fallthru
        _
      // Predicated region
      $region37: #{block_forward.4} parent=23 // pred_check
        %p256 = pneg %p126
      $region38: #{block_forward.4} parent=23 // pred_check_branch
        %258 = sbr.rel (%p256) target = $region40
      $region39: #{block_forward.4} parent=23 // pred_region
        %s259 = smul.u32 8, %s20
        %p260 = scmp.lt.s32.totalorder %s19, 1
        %s261 = scalar_select %p260, %s19, 1
        %p262 = scmp.lt.s32.totalorder %s259, 15
        %s263 = scalar_select %p262, %s259, 15
        %s264 = smul.addr %s261, 16
        %s265 = sadd.s32 %s263, %s264
        %s266 = smul.addr %s265, 8
        %s267 = scalar_lea.vmem %s3, %s266
        %s268 = smul.u32 8, %s20
      $region40: #{block_forward.4} parent=23 // pred_fallthru
        _
    $region24: #{block_forward.4} parent=5 // pred_fallthru
      _
    %p269 = scmp.le.s32.totalorder 1, %s12
    %p270 = scmp.lt.s32.totalorder %s12, 5
    %p271 = pnand %p269, %p270
    %p272 = pneg %p271
    // Predicated region
    $region41: #{block_forward.4} parent=5 // pred_check
      _
    $region42: #{block_forward.4} parent=5 // pred_check_branch
      %274 = sbr.rel (%p271) target = $region44
    $region43: #{block_forward.4} parent=5 // pred_region
      %s275 = ssub.s32 %s12, 1
      %s276 = smul.u32 8, %s22
      %p277 = scmp.lt.s32.totalorder %s21, 1
      %s278 = scalar_select %p277, %s21, 1
      %p279 = scmp.lt.s32.totalorder %s276, 15
      %s280 = scalar_select %p279, %s276, 15
      %s281 = smul.addr %s278, 16
      %s282 = sadd.s32 %s280, %s281
      %s283 = smul.addr %s282, 4
      %s284 = scalar_lea.vmem %s0, %s283
      %p285 = pneg %p52
      %p286 = pneg %p49
      %p287 = scmp.lt.s32.totalorder %s21, 1
      %s288 = scalar_select %p287, %s21, 1
      %s289 = smul.addr %s288, 16
      %s290 = smul.addr %s289, 4
      %s291 = scalar_lea.vmem %s1, %s290
      %p292 = pneg %p78
      %p293 = pneg %p75
      %p294 = scmp.lt.s32.totalorder %s21, 1
      %s295 = scalar_select %p294, %s21, 1
      %s296 = smul.addr %s295, 16
      %s297 = smul.addr %s296, 4
      %s298 = scalar_lea.vmem %s2, %s297
      %p299 = pneg %p104
      %p300 = pneg %p101
      %s301 = smul.u32 8, %s22
      %p302 = scmp.lt.s32.totalorder %s21, 1
      %s303 = scalar_select %p302, %s21, 1
      %p304 = scmp.lt.s32.totalorder %s301, 15
      %s305 = scalar_select %p304, %s301, 15
      %s306 = smul.addr %s303, 16
      %s307 = sadd.s32 %s305, %s306
      %s308 = smul.addr %s307, 8
      %s309 = scalar_lea.vmem %s3, %s308
      %p310 = pneg %p132
      %p311 = pneg %p129
      %p312 = pneg %p153
      %p313 = pneg %p150
      %p314 = pneg %p174
      %p315 = pneg %p171
      %p316 = pneg %p202
      %p317 = pneg %p199
      %s318 = smul.u32 8, %s22
      %p319 = scmp.lt.s32.totalorder %s21, 1
      %s320 = scalar_select %p319, %s21, 1
      %p321 = scmp.lt.s32.totalorder %s318, 15
      %s322 = scalar_select %p321, %s318, 15
      %s323 = smul.addr %s320, 16
      %s324 = sadd.s32 %s322, %s323
      %s325 = smul.addr %s324, 8
      %s326 = scalar_lea.vmem %s6, %s325
      %s327 = smul.u32 8, %s22
      %p328 = scmp.lt.s32.totalorder %s21, 1
      %s329 = scalar_select %p328, %s21, 1
      %p330 = scmp.lt.s32.totalorder %s327, 15
      %s331 = scalar_select %p330, %s327, 15
      %s332 = smul.addr %s329, 16
      %s333 = sadd.s32 %s331, %s332
      %s334 = smul.addr %s333, 4
      %s335 = scalar_lea.vmem %s0, %s334
      %s336 = smul.u32 8, %s22
      %p337 = scmp.lt.s32.totalorder %s21, 1
      %s338 = scalar_select %p337, %s21, 1
      %s339 = smul.addr %s338, 16
      %s340 = smul.addr %s339, 4
      %s341 = scalar_lea.vmem %s1, %s340
      %p342 = scmp.lt.s32.totalorder %s21, 1
      %s343 = scalar_select %p342, %s21, 1
      %s344 = smul.addr %s343, 16
      %s345 = smul.addr %s344, 4
      %s346 = scalar_lea.vmem %s2, %s345
      %s347 = smul.u32 8, %s22
      %p348 = scmp.lt.s32.totalorder %s21, 1
      %s349 = scalar_select %p348, %s21, 1
      %p350 = scmp.lt.s32.totalorder %s347, 15
      %s351 = scalar_select %p350, %s347, 15
      %s352 = smul.addr %s349, 16
      %s353 = sadd.s32 %s351, %s352
      %s354 = smul.addr %s353, 8
      %s355 = scalar_lea.vmem %s3, %s354
      %s356 = smul.u32 8, %s22
      %s357 = smul.u32 8, %s22
      %p358 = scmp.lt.s32.totalorder %s21, 1
      %s359 = scalar_select %p358, %s21, 1
      %p360 = scmp.lt.s32.totalorder %s357, 15
      %s361 = scalar_select %p360, %s357, 15
      %s362 = smul.addr %s359, 16
      %s363 = sadd.s32 %s361, %s362
      %s364 = smul.addr %s363, 8
      %s365 = scalar_lea.vmem %s6, %s364
      %s366 = smul.u32 8, %s22
      %v368 = vld [vmem:[%s335] sm:$0xf]
      %v369 = vld [vmem:[%s335 + $0x4] sm:$0xf]
      %v370 = vld [vmem:[%s335 + $0x8] sm:$0xf]
      %v371 = vld [vmem:[%s335 + $0xc] sm:$0xf]
      %v372 = vld [vmem:[%s335 + $0x10] sm:$0xf]
      %v373 = vld [vmem:[%s335 + $0x14] sm:$0xf]
      %v374 = vld [vmem:[%s335 + $0x18] sm:$0xf]
      %v375 = vld [vmem:[%s335 + $0x1c] sm:$0xf]
      %v376 = vld [vmem:[%s341] sm:$0xf]
      %v377 = vld [vmem:[%s341 + $0x4] sm:$0xf]
      %v378 = vld [vmem:[%s341 + $0x8] sm:$0xf]
      %v379 = vld [vmem:[%s341 + $0xc] sm:$0xf]
      %v380 = vld [vmem:[%s341 + $0x10] sm:$0xf]
      %v381 = vld [vmem:[%s341 + $0x14] sm:$0xf]
      %v382 = vld [vmem:[%s341 + $0x18] sm:$0xf]
      %v383 = vld [vmem:[%s341 + $0x1c] sm:$0xf]
      %v384 = vld [vmem:[%s341 + $0x20] sm:$0xf]
      %v385 = vld [vmem:[%s341 + $0x24] sm:$0xf]
      %v386 = vld [vmem:[%s341 + $0x28] sm:$0xf]
      %v387 = vld [vmem:[%s341 + $0x2c] sm:$0xf]
      %v388 = vld [vmem:[%s341 + $0x30] sm:$0xf]
      %v389 = vld [vmem:[%s341 + $0x34] sm:$0xf]
      %v390 = vld [vmem:[%s341 + $0x38] sm:$0xf]
      %v391 = vld [vmem:[%s341 + $0x3c] sm:$0xf]
      %v392 = vld [vmem:[%s346] sm:$0xf]
      %v393 = vld [vmem:[%s346 + $0x4] sm:$0xf]
      %v394 = vld [vmem:[%s346 + $0x8] sm:$0xf]
      %v395 = vld [vmem:[%s346 + $0xc] sm:$0xf]
      %v396 = vld [vmem:[%s346 + $0x10] sm:$0xf]
      %v397 = vld [vmem:[%s346 + $0x14] sm:$0xf]
      %v398 = vld [vmem:[%s346 + $0x18] sm:$0xf]
      %v399 = vld [vmem:[%s346 + $0x1c] sm:$0xf]
      %v400 = vld [vmem:[%s346 + $0x20] sm:$0xf]
      %v401 = vld [vmem:[%s346 + $0x24] sm:$0xf]
      %v402 = vld [vmem:[%s346 + $0x28] sm:$0xf]
      %v403 = vld [vmem:[%s346 + $0x2c] sm:$0xf]
      %v404 = vld [vmem:[%s346 + $0x30] sm:$0xf]
      %v405 = vld [vmem:[%s346 + $0x34] sm:$0xf]
      %v406 = vld [vmem:[%s346 + $0x38] sm:$0xf]
      %v407 = vld [vmem:[%s346 + $0x3c] sm:$0xf]
      %v416 = vunpack.c.l.b16 %v368
      %v417 = vunpack.c.l.b16 %v369
      %v418 = vunpack.c.l.b16 %v370
      %v419 = vunpack.c.l.b16 %v371
      %v420 = vunpack.c.l.b16 %v372
      %v421 = vunpack.c.l.b16 %v373
      %v422 = vunpack.c.l.b16 %v374
      %v423 = vunpack.c.l.b16 %v375
      %v424 = vpack.c.b16 %v417, %v416
      %v425 = vpack.c.b16 %v419, %v418
      %v426 = vpack.c.b16 %v421, %v420
      %v427 = vpack.c.b16 %v423, %v422
      %v444 = vunpack.c.l.b16 %v376
      %v445 = vunpack.c.l.b16 %v377
      %v446 = vunpack.c.l.b16 %v378
      %v447 = vunpack.c.l.b16 %v379
      %v448 = vunpack.c.l.b16 %v380
      %v449 = vunpack.c.l.b16 %v381
      %v450 = vunpack.c.l.b16 %v382
      %v451 = vunpack.c.l.b16 %v383
      %v452 = vunpack.c.l.b16 %v384
      %v453 = vunpack.c.l.b16 %v385
      %v454 = vunpack.c.l.b16 %v386
      %v455 = vunpack.c.l.b16 %v387
      %v456 = vunpack.c.l.b16 %v388
      %v457 = vunpack.c.l.b16 %v389
      %v458 = vunpack.c.l.b16 %v390
      %v459 = vunpack.c.l.b16 %v391
      %v460 = vpack.c.b16 %v445, %v444
      %v461 = vpack.c.b16 %v447, %v446
      %v462 = vpack.c.b16 %v449, %v448
      %v463 = vpack.c.b16 %v451, %v450
      %v464 = vpack.c.b16 %v453, %v452
      %v465 = vpack.c.b16 %v455, %v454
      %v466 = vpack.c.b16 %v457, %v456
      %v467 = vpack.c.b16 %v459, %v458
      %vm468 = vcmask 261120
      %v470 = vsel %vm468, %v424, 0
      %v473 = vsel %vm468, %v425, 0
      %v476 = vsel %vm468, %v426, 0
      %v479 = vsel %vm468, %v427, 0
      %v482 = vsel %vm468, %v460, 0
      %v485 = vsel %vm468, %v461, 0
      %v488 = vsel %vm468, %v462, 0
      %v491 = vsel %vm468, %v463, 0
      %v494 = vsel %vm468, %v464, 0
      %v497 = vsel %vm468, %v465, 0
      %v500 = vsel %vm468, %v466, 0
      %v503 = vsel %vm468, %v467, 0
      %505 = vmatprep.subr.bf16.mxu0 0
      %506 = vmatpush1.bf16.xpose.msra.mxu0 %v482
      %507 = vmatprep.subr.bf16.mxu0 0
      %508 = vmatpush1.bf16.xpose.msra.mxu0 %v485
      %509 = vmatprep.subr.bf16.mxu0 0
      %510 = vmatpush1.bf16.xpose.msra.mxu0 %v488
      %511 = vmatprep.subr.bf16.mxu0 0
      %512 = vmatpush1.bf16.xpose.msra.mxu0 %v491
      %513 = vmatprep.subr.bf16.mxu0 0
      %514 = vmatpush1.bf16.xpose.msra.mxu0 %v494
      %515 = vmatprep.subr.bf16.mxu0 0
      %516 = vmatpush1.bf16.xpose.msra.mxu0 %v497
      %517 = vmatprep.subr.bf16.mxu0 0
      %518 = vmatpush1.bf16.xpose.msra.mxu0 %v500
      %519 = vmatprep.subr.bf16.mxu0 0
      %520 = vmatpush1.bf16.xpose.msra.mxu0 %v503
      %521 = vmatprep.subr.bf16.mxu0 0
      %522 = vmatpush1.bf16.xpose.msra.mxu0 0
      %523 = vmatprep.subr.bf16.mxu0 0
      %524 = vmatpush1.bf16.xpose.msra.mxu0 0
      %525 = vmatprep.subr.bf16.mxu0 0
      %526 = vmatpush1.bf16.xpose.msra.mxu0 0
      %527 = vmatprep.subr.bf16.mxu0 0
      %528 = vmatpush1.bf16.xpose.msra.mxu0 0
      %529 = vmatprep.subr.bf16.mxu0 0
      %530 = vmatpush1.bf16.xpose.msra.mxu0 0
      %531 = vmatprep.subr.bf16.mxu0 0
      %532 = vmatpush1.bf16.xpose.msra.mxu0 0
      %533 = vmatprep.subr.bf16.mxu0 0
      %534 = vmatpush1.bf16.xpose.msra.mxu0 0
      %535 = vmatprep.subr.bf16.mxu0 0
      %536 = vmatpush1.bf16.xpose.msra.mxu0 0
      %537 = vmatprep.mubr.bf16.mxu0 0
      %538 = vmatmul.mubr.bf16.gmra.mrb[0].mxu0 %v470
      %v539 = vpop.f32.mrb[0].mxu0
      %v540 = vadd.f32 0.0, %v539
      %v541 = vpop.f32.mrb[0].mxu0
      %v542 = vpop.f32.mrb[0].mxu0
      %v543 = vadd.f32 0.0, %v542
      %v544 = vpop.f32.mrb[0].mxu0
      %545 = vmatprep.mubr.bf16.mxu0 0
      %546 = vmatmul.mubr.bf16.gmra.mrb[0].mxu0 %v473
      %v547 = vpop.f32.mrb[0].mxu0
      %v548 = vadd.f32 0.0, %v547
      %v549 = vpop.f32.mrb[0].mxu0
      %v550 = vpop.f32.mrb[0].mxu0
      %v551 = vadd.f32 0.0, %v550
      %v552 = vpop.f32.mrb[0].mxu0
      %553 = vmatprep.mubr.bf16.mxu0 0
      %554 = vmatmul.mubr.bf16.gmra.mrb[0].mxu0 %v476
      %v555 = vpop.f32.mrb[0].mxu0
      %v556 = vadd.f32 0.0, %v555
      %v557 = vpop.f32.mrb[0].mxu0
      %v558 = vpop.f32.mrb[0].mxu0
      %v559 = vadd.f32 0.0, %v558
      %v560 = vpop.f32.mrb[0].mxu0
      %561 = vmatprep.mubr.bf16.mxu0 0
      %562 = vmatmul.mubr.bf16.gmra.mrb[0].mxu0 %v479
      %v563 = vpop.f32.mrb[0].mxu0
      %v564 = vadd.f32 0.0, %v563
      %v565 = vpop.f32.mrb[0].mxu0
      %v566 = vpop.f32.mrb[0].mxu0
      %v567 = vadd.f32 0.0, %v566
      %v568 = vpop.f32.mrb[0].mxu0
      %569 = vdwg.mxu0
      %570 = vmax.xlane.f32.xlu0 %v540
      %v571 = vpop.xlane.xlu0 %570
      %572 = vmax.xlane.f32.xlu0 %v543
      %v573 = vpop.xlane.xlu0 %572
      %574 = vmax.xlane.f32.xlu0 %v548
      %v575 = vpop.xlane.xlu0 %574
      %576 = vmax.xlane.f32.xlu0 %v551
      %v577 = vpop.xlane.xlu0 %576
      %578 = vmax.xlane.f32.xlu0 %v556
      %v579 = vpop.xlane.xlu0 %578
      %580 = vmax.xlane.f32.xlu0 %v559
      %v581 = vpop.xlane.xlu0 %580
      %582 = vmax.xlane.f32.xlu0 %v564
      %v583 = vpop.xlane.xlu0 %582
      %584 = vmax.xlane.f32.xlu0 %v567
      %v585 = vpop.xlane.xlu0 %584
      %v586 = vsub.f32 %v540, %v571
      %v587 = vsub.f32 %v543, %v573
      %v588 = vsub.f32 %v548, %v575
      %v589 = vsub.f32 %v551, %v577
      %v590 = vsub.f32 %v556, %v579
      %v591 = vsub.f32 %v559, %v581
      %v592 = vsub.f32 %v564, %v583
      %v593 = vsub.f32 %v567, %v585
      %v594 = vmul.f32 %v586, 1.442695
      %v595 = vpow.pop %v594
      %v596 = vmul.f32 %v587, 1.442695
      %v597 = vpow.pop %v596
      %v598 = vmul.f32 %v588, 1.442695
      %v599 = vpow.pop %v598
      %v600 = vmul.f32 %v589, 1.442695
      %v601 = vpow.pop %v600
      %v602 = vmul.f32 %v590, 1.442695
      %v603 = vpow.pop %v602
      %v604 = vmul.f32 %v591, 1.442695
      %v605 = vpow.pop %v604
      %v606 = vmul.f32 %v592, 1.442695
      %v607 = vpow.pop %v606
      %v608 = vmul.f32 %v593, 1.442695
      %v609 = vpow.pop %v608
      %610 = vadd.xlane.f32.xlu0 %v595
      %v611 = vpop.xlane.xlu0 %610
      %612 = vadd.xlane.f32.xlu0 %v597
      %v613 = vpop.xlane.xlu0 %612
      %614 = vadd.xlane.f32.xlu0 %v599
      %v615 = vpop.xlane.xlu0 %614
      %616 = vadd.xlane.f32.xlu0 %v601
      %v617 = vpop.xlane.xlu0 %616
      %618 = vadd.xlane.f32.xlu0 %v603
      %v619 = vpop.xlane.xlu0 %618
      %620 = vadd.xlane.f32.xlu0 %v605
      %v621 = vpop.xlane.xlu0 %620
      %622 = vadd.xlane.f32.xlu0 %v607
      %v623 = vpop.xlane.xlu0 %622
      %624 = vadd.xlane.f32.xlu0 %v609
      %v625 = vpop.xlane.xlu0 %624
      %v626 = vpack.c.bf16 %v597, %v595
      %v627 = vpack.c.bf16 %v601, %v599
      %v628 = vpack.c.bf16 %v605, %v603
      %v629 = vpack.c.bf16 %v609, %v607
      %v646 = vunpack.c.l.b16 %v392
      %v647 = vunpack.c.l.b16 %v393
      %v648 = vunpack.c.l.b16 %v394
      %v649 = vunpack.c.l.b16 %v395
      %v650 = vunpack.c.l.b16 %v396
      %v651 = vunpack.c.l.b16 %v397
      %v652 = vunpack.c.l.b16 %v398
      %v653 = vunpack.c.l.b16 %v399
      %v654 = vunpack.c.l.b16 %v400
      %v655 = vunpack.c.l.b16 %v401
      %v656 = vunpack.c.l.b16 %v402
      %v657 = vunpack.c.l.b16 %v403
      %v658 = vunpack.c.l.b16 %v404
      %v659 = vunpack.c.l.b16 %v405
      %v660 = vunpack.c.l.b16 %v406
      %v661 = vunpack.c.l.b16 %v407
      %v662 = vpack.c.b16 %v647, %v646
      %v663 = vpack.c.b16 %v649, %v648
      %v664 = vpack.c.b16 %v651, %v650
      %v665 = vpack.c.b16 %v653, %v652
      %v666 = vpack.c.b16 %v655, %v654
      %v667 = vpack.c.b16 %v657, %v656
      %v668 = vpack.c.b16 %v659, %v658
      %v669 = vpack.c.b16 %v661, %v660
      %678 = vmatprep.subr.bf16.mxu0 0
      %679 = vmatpush1.bf16.msra.mxu0 %v662
      %680 = vmatprep.subr.bf16.mxu0 0
      %681 = vmatpush1.bf16.msra.mxu0 %v663
      %682 = vmatprep.subr.bf16.mxu0 0
      %683 = vmatpush1.bf16.msra.mxu0 %v664
      %684 = vmatprep.subr.bf16.mxu0 0
      %685 = vmatpush1.bf16.msra.mxu0 %v665
      %686 = vmatprep.subr.bf16.mxu0 0
      %687 = vmatpush1.bf16.msra.mxu0 %v666
      %688 = vmatprep.subr.bf16.mxu0 0
      %689 = vmatpush1.bf16.msra.mxu0 %v667
      %690 = vmatprep.subr.bf16.mxu0 0
      %691 = vmatpush1.bf16.msra.mxu0 %v668
      %692 = vmatprep.subr.bf16.mxu0 0
      %693 = vmatpush1.bf16.msra.mxu0 %v669
      %694 = vmatprep.subr.bf16.mxu0 0
      %695 = vmatpush1.bf16.msra.mxu0 0
      %696 = vmatprep.subr.bf16.mxu0 0
      %697 = vmatpush1.bf16.msra.mxu0 0
      %698 = vmatprep.subr.bf16.mxu0 0
      %699 = vmatpush1.bf16.msra.mxu0 0
      %700 = vmatprep.subr.bf16.mxu0 0
      %701 = vmatpush1.bf16.msra.mxu0 0
      %702 = vmatprep.subr.bf16.mxu0 0
      %703 = vmatpush1.bf16.msra.mxu0 0
      %704 = vmatprep.subr.bf16.mxu0 0
      %705 = vmatpush1.bf16.msra.mxu0 0
      %706 = vmatprep.subr.bf16.mxu0 0
      %707 = vmatpush1.bf16.msra.mxu0 0
      %708 = vmatprep.subr.bf16.mxu0 0
      %709 = vmatpush1.bf16.msra.mxu0 0
      %710 = vmatprep.mubr.bf16.mxu0 0
      %711 = vmatmul.mubr.bf16.gmra.mrb[0].mxu0 %v626
      %v712 = vpop.f32.mrb[0].mxu0
      %v713 = vadd.f32 0.0, %v712
      %v714 = vpop.f32.mrb[0].mxu0
      %v715 = vpop.f32.mrb[0].mxu0
      %v716 = vadd.f32 0.0, %v715
      %v717 = vpop.f32.mrb[0].mxu0
      %718 = vmatprep.mubr.bf16.mxu0 0
      %719 = vmatmul.mubr.bf16.gmra.mrb[0].mxu0 %v627
      %v720 = vpop.f32.mrb[0].mxu0
      %v721 = vadd.f32 0.0, %v720
      %v722 = vpop.f32.mrb[0].mxu0
      %v723 = vpop.f32.mrb[0].mxu0
      %v724 = vadd.f32 0.0, %v723
      %v725 = vpop.f32.mrb[0].mxu0
      %726 = vmatprep.mubr.bf16.mxu0 0
      %727 = vmatmul.mubr.bf16.gmra.mrb[0].mxu0 %v628
      %v728 = vpop.f32.mrb[0].mxu0
      %v729 = vadd.f32 0.0, %v728
      %v730 = vpop.f32.mrb[0].mxu0
      %v731 = vpop.f32.mrb[0].mxu0
      %v732 = vadd.f32 0.0, %v731
      %v733 = vpop.f32.mrb[0].mxu0
      %734 = vmatprep.mubr.bf16.mxu0 0
      %735 = vmatmul.mubr.bf16.gmra.mrb[0].mxu0 %v629
      %v736 = vpop.f32.mrb[0].mxu0
      %v737 = vadd.f32 0.0, %v736
      %v738 = vpop.f32.mrb[0].mxu0
      %v739 = vpop.f32.mrb[0].mxu0
      %v740 = vadd.f32 0.0, %v739
      %v741 = vpop.f32.mrb[0].mxu0
      %742 = vdwg.mxu0
      %v743 = vrcp.pop %v611
      %v744 = vrcp.pop %v613
      %v745 = vrcp.pop %v615
      %v746 = vrcp.pop %v617
      %v747 = vrcp.pop %v619
      %v748 = vrcp.pop %v621
      %v749 = vrcp.pop %v623
      %v750 = vrcp.pop %v625
      %v751 = vmul.f32 %v713, %v743
      %v752 = vmul.f32 %v716, %v744
      %v753 = vmul.f32 %v721, %v745
      %v754 = vmul.f32 %v724, %v746
      %v755 = vmul.f32 %v729, %v747
      %v756 = vmul.f32 %v732, %v748
      %v757 = vmul.f32 %v737, %v749
      %v758 = vmul.f32 %v740, %v750
      %v759 = vpack.c.bf16 %v752, %v751
      %v760 = vpack.c.bf16 %v754, %v753
      %v761 = vpack.c.bf16 %v756, %v755
      %v762 = vpack.c.bf16 %v758, %v757
      %763 = vst.msk [vmem:[#allocation2] sm:$0xff] %vm468, %v759
      %764 = vst.msk [vmem:[#allocation2 + $0x8] sm:$0xff] %vm468, %v760
      %765 = vst.msk [vmem:[#allocation2 + $0x10] sm:$0xff] %vm468, %v761
      %766 = vst.msk [vmem:[#allocation2 + $0x18] sm:$0xff] %vm468, %v762
      %767 = vrot.lane.b32.xlu0 %v424, 96
      %v768 = vpop.permute.xlu0 %767
      %769 = vrot.lane.b32.xlu0 %v425, 96
      %v770 = vpop.permute.xlu0 %769
      %771 = vrot.lane.b32.xlu0 %v426, 96
      %v772 = vpop.permute.xlu0 %771
      %773 = vrot.lane.b32.xlu0 %v427, 96
      %v774 = vpop.permute.xlu0 %773
      %775 = vrot.lane.b32.xlu0 %v460, 96
      %v776 = vpop.permute.xlu0 %775
      %777 = vrot.lane.b32.xlu0 %v461, 96
      %v778 = vpop.permute.xlu0 %777
      %779 = vrot.lane.b32.xlu0 %v462, 96
      %v780 = vpop.permute.xlu0 %779
      %781 = vrot.lane.b32.xlu0 %v463, 96
      %v782 = vpop.permute.xlu0 %781
      %783 = vrot.lane.b32.xlu0 %v464, 96
      %v784 = vpop.permute.xlu0 %783
      %785 = vrot.lane.b32.xlu0 %v465, 96
      %v786 = vpop.permute.xlu0 %785
      %787 = vrot.lane.b32.xlu0 %v466, 96
      %v788 = vpop.permute.xlu0 %787
      %789 = vrot.lane.b32.xlu0 %v467, 96
      %v790 = vpop.permute.xlu0 %789
      %v792 = vsel %vm468, %v768, 0
      %v795 = vsel %vm468, %v770, 0
      %v798 = vsel %vm468, %v772, 0
      %v801 = vsel %vm468, %v774, 0
      %v804 = vsel %vm468, %v776, 0
      %v807 = vsel %vm468, %v778, 0
      %v810 = vsel %vm468, %v780, 0
      %v813 = vsel %vm468, %v782, 0
      %v816 = vsel %vm468, %v784, 0
      %v819 = vsel %vm468, %v786, 0
      %v822 = vsel %vm468, %v788, 0
      %v825 = vsel %vm468, %v790, 0
      %827 = vmatprep.subr.bf16.mxu0 0
      %828 = vmatpush1.bf16.xpose.msra.mxu0 %v804
      %829 = vmatprep.subr.bf16.mxu0 0
      %830 = vmatpush1.bf16.xpose.msra.mxu0 %v807
      %831 = vmatprep.subr.bf16.mxu0 0
      %832 = vmatpush1.bf16.xpose.msra.mxu0 %v810
      %833 = vmatprep.subr.bf16.mxu0 0
      %834 = vmatpush1.bf16.xpose.msra.mxu0 %v813
      %835 = vmatprep.subr.bf16.mxu0 0
      %836 = vmatpush1.bf16.xpose.msra.mxu0 %v816
      %837 = vmatprep.subr.bf16.mxu0 0
      %838 = vmatpush1.bf16.xpose.msra.mxu0 %v819
      %839 = vmatprep.subr.bf16.mxu0 0
      %840 = vmatpush1.bf16.xpose.msra.mxu0 %v822
      %841 = vmatprep.subr.bf16.mxu0 0
      %842 = vmatpush1.bf16.xpose.msra.mxu0 %v825
      %843 = vmatprep.subr.bf16.mxu0 0
      %844 = vmatpush1.bf16.xpose.msra.mxu0 0
      %845 = vmatprep.subr.bf16.mxu0 0
      %846 = vmatpush1.bf16.xpose.msra.mxu0 0
      %847 = vmatprep.subr.bf16.mxu0 0
      %848 = vmatpush1.bf16.xpose.msra.mxu0 0
      %849 = vmatprep.subr.bf16.mxu0 0
      %850 = vmatpush1.bf16.xpose.msra.mxu0 0
      %851 = vmatprep.subr.bf16.mxu0 0
      %852 = vmatpush1.bf16.xpose.msra.mxu0 0
      %853 = vmatprep.subr.bf16.mxu0 0
      %854 = vmatpush1.bf16.xpose.msra.mxu0 0
      %855 = vmatprep.subr.bf16.mxu0 0
      %856 = vmatpush1.bf16.xpose.msra.mxu0 0
      %857 = vmatprep.subr.bf16.mxu0 0
      %858 = vmatpush1.bf16.xpose.msra.mxu0 0
      %859 = vmatprep.mubr.bf16.mxu0 0
      %860 = vmatmul.mubr.bf16.gmra.mrb[0].mxu0 %v792
      %v861 = vpop.f32.mrb[0].mxu0
      %v862 = vadd.f32 0.0, %v861
      %v863 = vpop.f32.mrb[0].mxu0
      %v864 = vpop.f32.mrb[0].mxu0
      %v865 = vadd.f32 0.0, %v864
      %v866 = vpop.f32.mrb[0].mxu0
      %867 = vmatprep.mubr.bf16.mxu0 0
      %868 = vmatmul.mubr.bf16.gmra.mrb[0].mxu0 %v795
      %v869 = vpop.f32.mrb[0].mxu0
      %v870 = vadd.f32 0.0, %v869
      %v871 = vpop.f32.mrb[0].mxu0
      %v872 = vpop.f32.mrb[0].mxu0
      %v873 = vadd.f32 0.0, %v872
      %v874 = vpop.f32.mrb[0].mxu0
      %875 = vmatprep.mubr.bf16.mxu0 0
      %876 = vmatmul.mubr.bf16.gmra.mrb[0].mxu0 %v798
      %v877 = vpop.f32.mrb[0].mxu0
      %v878 = vadd.f32 0.0, %v877
      %v879 = vpop.f32.mrb[0].mxu0
      %v880 = vpop.f32.mrb[0].mxu0
      %v881 = vadd.f32 0.0, %v880
      %v882 = vpop.f32.mrb[0].mxu0
      %883 = vmatprep.mubr.bf16.mxu0 0
      %884 = vmatmul.mubr.bf16.gmra.mrb[0].mxu0 %v801
      %v885 = vpop.f32.mrb[0].mxu0
      %v886 = vadd.f32 0.0, %v885
      %v887 = vpop.f32.mrb[0].mxu0
      %v888 = vpop.f32.mrb[0].mxu0
      %v889 = vadd.f32 0.0, %v888
      %v890 = vpop.f32.mrb[0].mxu0
      %891 = vdwg.mxu0
      %892 = vmax.xlane.f32.xlu0 %v862
      %v893 = vpop.xlane.xlu0 %892
      %894 = vmax.xlane.f32.xlu0 %v865
      %v895 = vpop.xlane.xlu0 %894
      %896 = vmax.xlane.f32.xlu0 %v870
      %v897 = vpop.xlane.xlu0 %896
      %898 = vmax.xlane.f32.xlu0 %v873
      %v899 = vpop.xlane.xlu0 %898
      %900 = vmax.xlane.f32.xlu0 %v878
      %v901 = vpop.xlane.xlu0 %900
      %902 = vmax.xlane.f32.xlu0 %v881
      %v903 = vpop.xlane.xlu0 %902
      %904 = vmax.xlane.f32.xlu0 %v886
      %v905 = vpop.xlane.xlu0 %904
      %906 = vmax.xlane.f32.xlu0 %v889
      %v907 = vpop.xlane.xlu0 %906
      %v908 = vsub.f32 %v862, %v893
      %v909 = vsub.f32 %v865, %v895
      %v910 = vsub.f32 %v870, %v897
      %v911 = vsub.f32 %v873, %v899
      %v912 = vsub.f32 %v878, %v901
      %v913 = vsub.f32 %v881, %v903
      %v914 = vsub.f32 %v886, %v905
      %v915 = vsub.f32 %v889, %v907
      %v916 = vmul.f32 %v908, 1.442695
      %v917 = vpow.pop %v916
      %v918 = vmul.f32 %v909, 1.442695
      %v919 = vpow.pop %v918
      %v920 = vmul.f32 %v910, 1.442695
      %v921 = vpow.pop %v920
      %v922 = vmul.f32 %v911, 1.442695
      %v923 = vpow.pop %v922
      %v924 = vmul.f32 %v912, 1.442695
      %v925 = vpow.pop %v924
      %v926 = vmul.f32 %v913, 1.442695
      %v927 = vpow.pop %v926
      %v928 = vmul.f32 %v914, 1.442695
      %v929 = vpow.pop %v928
      %v930 = vmul.f32 %v915, 1.442695
      %v931 = vpow.pop %v930
      %932 = vadd.xlane.f32.xlu0 %v917
      %v933 = vpop.xlane.xlu0 %932
      %934 = vadd.xlane.f32.xlu0 %v919
      %v935 = vpop.xlane.xlu0 %934
      %936 = vadd.xlane.f32.xlu0 %v921
      %v937 = vpop.xlane.xlu0 %936
      %938 = vadd.xlane.f32.xlu0 %v923
      %v939 = vpop.xlane.xlu0 %938
      %940 = vadd.xlane.f32.xlu0 %v925
      %v941 = vpop.xlane.xlu0 %940
      %942 = vadd.xlane.f32.xlu0 %v927
      %v943 = vpop.xlane.xlu0 %942
      %944 = vadd.xlane.f32.xlu0 %v929
      %v945 = vpop.xlane.xlu0 %944
      %946 = vadd.xlane.f32.xlu0 %v931
      %v947 = vpop.xlane.xlu0 %946
      %v948 = vpack.c.bf16 %v919, %v917
      %v949 = vpack.c.bf16 %v923, %v921
      %v950 = vpack.c.bf16 %v927, %v925
      %v951 = vpack.c.bf16 %v931, %v929
      %952 = vrot.lane.b32.xlu0 %v662, 96
      %v953 = vpop.permute.xlu0 %952
      %954 = vrot.lane.b32.xlu0 %v663, 96
      %v955 = vpop.permute.xlu0 %954
      %956 = vrot.lane.b32.xlu0 %v664, 96
      %v957 = vpop.permute.xlu0 %956
      %958 = vrot.lane.b32.xlu0 %v665, 96
      %v959 = vpop.permute.xlu0 %958
      %960 = vrot.lane.b32.xlu0 %v666, 96
      %v961 = vpop.permute.xlu0 %960
      %962 = vrot.lane.b32.xlu0 %v667, 96
      %v963 = vpop.permute.xlu0 %962
      %964 = vrot.lane.b32.xlu0 %v668, 96
      %v965 = vpop.permute.xlu0 %964
      %966 = vrot.lane.b32.xlu0 %v669, 96
      %v967 = vpop.permute.xlu0 %966
      %976 = vmatprep.subr.bf16.mxu0 0
      %977 = vmatpush1.bf16.msra.mxu0 %v953
      %978 = vmatprep.subr.bf16.mxu0 0
      %979 = vmatpush1.bf16.msra.mxu0 %v955
      %980 = vmatprep.subr.bf16.mxu0 0
      %981 = vmatpush1.bf16.msra.mxu0 %v957
      %982 = vmatprep.subr.bf16.mxu0 0
      %983 = vmatpush1.bf16.msra.mxu0 %v959
      %984 = vmatprep.subr.bf16.mxu0 0
      %985 = vmatpush1.bf16.msra.mxu0 %v961
      %986 = vmatprep.subr.bf16.mxu0 0
      %987 = vmatpush1.bf16.msra.mxu0 %v963
      %988 = vmatprep.subr.bf16.mxu0 0
      %989 = vmatpush1.bf16.msra.mxu0 %v965
      %990 = vmatprep.subr.bf16.mxu0 0
      %991 = vmatpush1.bf16.msra.mxu0 %v967
      %992 = vmatprep.subr.bf16.mxu0 0
      %993 = vmatpush1.bf16.msra.mxu0 0
      %994 = vmatprep.subr.bf16.mxu0 0
      %995 = vmatpush1.bf16.msra.mxu0 0
      %996 = vmatprep.subr.bf16.mxu0 0
      %997 = vmatpush1.bf16.msra.mxu0 0
      %998 = vmatprep.subr.bf16.mxu0 0
      %999 = vmatpush1.bf16.msra.mxu0 0
      %1000 = vmatprep.subr.bf16.mxu0 0
      %1001 = vmatpush1.bf16.msra.mxu0 0
      %1002 = vmatprep.subr.bf16.mxu0 0
      %1003 = vmatpush1.bf16.msra.mxu0 0
      %1004 = vmatprep.subr.bf16.mxu0 0
      %1005 = vmatpush1.bf16.msra.mxu0 0
      %1006 = vmatprep.subr.bf16.mxu0 0
      %1007 = vmatpush1.bf16.msra.mxu0 0
      %1008 = vmatprep.mubr.bf16.mxu0 0
      %1009 = vmatmul.mubr.bf16.gmra.mrb[0].mxu0 %v948
      %v1010 = vpop.f32.mrb[0].mxu0
      %v1011 = vadd.f32 0.0, %v1010
      %v1012 = vpop.f32.mrb[0].mxu0
      %v1013 = vpop.f32.mrb[0].mxu0
      %v1014 = vadd.f32 0.0, %v1013
      %v1015 = vpop.f32.mrb[0].mxu0
      %1016 = vmatprep.mubr.bf16.mxu0 0
      %1017 = vmatmul.mubr.bf16.gmra.mrb[0].mxu0 %v949
      %v1018 = vpop.f32.mrb[0].mxu0
      %v1019 = vadd.f32 0.0, %v1018
      %v1020 = vpop.f32.mrb[0].mxu0
      %v1021 = vpop.f32.mrb[0].mxu0
      %v1022 = vadd.f32 0.0, %v1021
      %v1023 = vpop.f32.mrb[0].mxu0
      %1024 = vmatprep.mubr.bf16.mxu0 0
      %1025 = vmatmul.mubr.bf16.gmra.mrb[0].mxu0 %v950
      %v1026 = vpop.f32.mrb[0].mxu0
      %v1027 = vadd.f32 0.0, %v1026
      %v1028 = vpop.f32.mrb[0].mxu0
      %v1029 = vpop.f32.mrb[0].mxu0
      %v1030 = vadd.f32 0.0, %v1029
      %v1031 = vpop.f32.mrb[0].mxu0
      %1032 = vmatprep.mubr.bf16.mxu0 0
      %1033 = vmatmul.mubr.bf16.gmra.mrb[0].mxu0 %v951
      %v1034 = vpop.f32.mrb[0].mxu0
      %v1035 = vadd.f32 0.0, %v1034
      %v1036 = vpop.f32.mrb[0].mxu0
      %v1037 = vpop.f32.mrb[0].mxu0
      %v1038 = vadd.f32 0.0, %v1037
      %v1039 = vpop.f32.mrb[0].mxu0
      %1040 = vdwg.mxu0
      %v1041 = vrcp.pop %v933
      %v1042 = vrcp.pop %v935
      %v1043 = vrcp.pop %v937
      %v1044 = vrcp.pop %v939
      %v1045 = vrcp.pop %v941
      %v1046 = vrcp.pop %v943
      %v1047 = vrcp.pop %v945
      %v1048 = vrcp.pop %v947
      %v1049 = vmul.f32 %v1011, %v1041
      %v1050 = vmul.f32 %v1014, %v1042
      %v1051 = vmul.f32 %v1019, %v1043
      %v1052 = vmul.f32 %v1022, %v1044
      %v1053 = vmul.f32 %v1027, %v1045
      %v1054 = vmul.f32 %v1030, %v1046
      %v1055 = vmul.f32 %v1035, %v1047
      %v1056 = vmul.f32 %v1038, %v1048
      %v1057 = vpack.c.bf16 %v1050, %v1049
      %v1058 = vpack.c.bf16 %v1052, %v1051
      %v1059 = vpack.c.bf16 %v1054, %v1053
      %v1060 = vpack.c.bf16 %v1056, %v1055
      %1065 = vrot.lane.b32.xlu0 %v1057, 32
      %v1066 = vpop.permute.xlu0 %1065
      %1067 = vrot.lane.b32.xlu0 %v1058, 32
      %v1068 = vpop.permute.xlu0 %1067
      %1069 = vrot.lane.b32.xlu0 %v1059, 32
      %v1070 = vpop.permute.xlu0 %1069
      %1071 = vrot.lane.b32.xlu0 %v1060, 32
      %v1072 = vpop.permute.xlu0 %1071
      %vm1077 = vcmask 523520
      %1078 = vst.msk [vmem:[#allocation2] sm:$0xff] %vm1077, %v1066
      %1079 = vst.msk [vmem:[#allocation2 + $0x8] sm:$0xff] %vm1077, %v1068
      %1080 = vst.msk [vmem:[#allocation2 + $0x10] sm:$0xff] %vm1077, %v1070
      %1081 = vst.msk [vmem:[#allocation2 + $0x18] sm:$0xff] %vm1077, %v1072
      %v1082 = vld [vmem:[#allocation2] sm:$0xff]
      %v1083 = vld [vmem:[#allocation2 + $0x8] sm:$0xff]
      %v1084 = vld [vmem:[#allocation2 + $0x10] sm:$0xff]
      %v1085 = vld [vmem:[#allocation2 + $0x18] sm:$0xff]
      %v1086 = vld [vmem:[%s4] sm:$0xf]
      %v1087 = vld [vmem:[%s4 + $0x4] sm:$0xf]
      %v1088 = vld [vmem:[%s4 + $0x8] sm:$0xf]
      %v1089 = vld [vmem:[%s4 + $0xc] sm:$0xf]
      %v1090 = vld [vmem:[%s4 + $0x10] sm:$0xf]
      %v1091 = vld [vmem:[%s4 + $0x14] sm:$0xf]
      %v1092 = vld [vmem:[%s4 + $0x18] sm:$0xf]
      %v1093 = vld [vmem:[%s4 + $0x1c] sm:$0xf]
      %v1102 = vunpack.c.l.b16 %v1086
      %v1103 = vunpack.c.l.b16 %v1087
      %v1104 = vunpack.c.l.b16 %v1088
      %v1105 = vunpack.c.l.b16 %v1089
      %v1106 = vunpack.c.l.b16 %v1090
      %v1107 = vunpack.c.l.b16 %v1091
      %v1108 = vunpack.c.l.b16 %v1092
      %v1109 = vunpack.c.l.b16 %v1093
      %v1110 = vpack.c.b16 %v1103, %v1102
      %v1111 = vpack.c.b16 %v1105, %v1104
      %v1112 = vpack.c.b16 %v1107, %v1106
      %v1113 = vpack.c.b16 %v1109, %v1108
      %vm1118 = vcmask 523264
      %v1120 = vsel %vm1118, %v1082, 0
      %v1123 = vsel %vm1118, %v1083, 0
      %v1126 = vsel %vm1118, %v1084, 0
      %v1129 = vsel %vm1118, %v1085, 0
      %1131 = vmatprep.subr.bf16.mxu0 0
      %1132 = vmatpush1.bf16.msra.mxu0 %v1110
      %1133 = vmatprep.subr.bf16.mxu0 0
      %1134 = vmatpush1.bf16.msra.mxu0 %v1111
      %1135 = vmatprep.subr.bf16.mxu0 0
      %1136 = vmatpush1.bf16.msra.mxu0 %v1112
      %1137 = vmatprep.subr.bf16.mxu0 0
      %1138 = vmatpush1.bf16.msra.mxu0 %v1113
      %1139 = vmatprep.subr.bf16.mxu0 0
      %1140 = vmatpush1.bf16.msra.mxu0 0
      %1141 = vmatprep.subr.bf16.mxu0 0
      %1142 = vmatpush1.bf16.msra.mxu0 0
      %1143 = vmatprep.subr.bf16.mxu0 0
      %1144 = vmatpush1.bf16.msra.mxu0 0
      %1145 = vmatprep.subr.bf16.mxu0 0
      %1146 = vmatpush1.bf16.msra.mxu0 0
      %1147 = vmatprep.subr.bf16.mxu0 0
      %1148 = vmatpush1.bf16.msra.mxu0 0
      %1149 = vmatprep.subr.bf16.mxu0 0
      %1150 = vmatpush1.bf16.msra.mxu0 0
      %1151 = vmatprep.subr.bf16.mxu0 0
      %1152 = vmatpush1.bf16.msra.mxu0 0
      %1153 = vmatprep.subr.bf16.mxu0 0
      %1154 = vmatpush1.bf16.msra.mxu0 0
      %1155 = vmatprep.subr.bf16.mxu0 0
      %1156 = vmatpush1.bf16.msra.mxu0 0
      %1157 = vmatprep.subr.bf16.mxu0 0
      %1158 = vmatpush1.bf16.msra.mxu0 0
      %1159 = vmatprep.subr.bf16.mxu0 0
      %1160 = vmatpush1.bf16.msra.mxu0 0
      %1161 = vmatprep.subr.bf16.mxu0 0
      %1162 = vmatpush1.bf16.msra.mxu0 0
      %1163 = vmatprep.mubr.bf16.mxu0 0
      %1164 = vmatmul.mubr.bf16.gmra.mrb[0].mxu0 %v1120
      %v1165 = vpop.f32.mrb[0].mxu0
      %v1166 = vadd.f32 0.0, %v1165
      %v1167 = vpop.f32.mrb[0].mxu0
      %v1168 = vpop.f32.mrb[0].mxu0
      %v1169 = vadd.f32 0.0, %v1168
      %v1170 = vpop.f32.mrb[0].mxu0
      %1171 = vmatprep.mubr.bf16.mxu0 0
      %1172 = vmatmul.mubr.bf16.gmra.mrb[0].mxu0 %v1123
      %v1173 = vpop.f32.mrb[0].mxu0
      %v1174 = vadd.f32 0.0, %v1173
      %v1175 = vpop.f32.mrb[0].mxu0
      %v1176 = vpop.f32.mrb[0].mxu0
      %v1177 = vadd.f32 0.0, %v1176
      %v1178 = vpop.f32.mrb[0].mxu0
      %1179 = vmatprep.mubr.bf16.mxu0 0
      %1180 = vmatmul.mubr.bf16.gmra.mrb[0].mxu0 %v1126
      %v1181 = vpop.f32.mrb[0].mxu0
      %v1182 = vadd.f32 0.0, %v1181
      %v1183 = vpop.f32.mrb[0].mxu0
      %v1184 = vpop.f32.mrb[0].mxu0
      %v1185 = vadd.f32 0.0, %v1184
      %v1186 = vpop.f32.mrb[0].mxu0
      %1187 = vmatprep.mubr.bf16.mxu0 0
      %1188 = vmatmul.mubr.bf16.gmra.mrb[0].mxu0 %v1129
      %v1189 = vpop.f32.mrb[0].mxu0
      %v1190 = vadd.f32 0.0, %v1189
      %v1191 = vpop.f32.mrb[0].mxu0
      %v1192 = vpop.f32.mrb[0].mxu0
      %v1193 = vadd.f32 0.0, %v1192
      %v1194 = vpop.f32.mrb[0].mxu0
      %1195 = vdwg.mxu0
      %v1196 = vld [vmem:[%s355] sm:$0xff]
      %v1197 = vld [vmem:[%s355 + $0x8] sm:$0xff]
      %v1198 = vld [vmem:[%s355 + $0x10] sm:$0xff]
      %v1199 = vld [vmem:[%s355 + $0x18] sm:$0xff]
      %v1200 = vld [vmem:[%s355 + $0x20] sm:$0xff]
      %v1201 = vld [vmem:[%s355 + $0x28] sm:$0xff]
      %v1202 = vld [vmem:[%s355 + $0x30] sm:$0xff]
      %v1203 = vld [vmem:[%s355 + $0x38] sm:$0xff]
      %v1204 = vadd.f32 %v1196, %v1166
      %v1205 = vadd.f32 %v1197, %v1169
      %v1206 = vadd.f32 %v1198, %v1174
      %v1207 = vadd.f32 %v1199, %v1177
      %v1208 = vadd.f32 %v1200, %v1182
      %v1209 = vadd.f32 %v1201, %v1185
      %v1210 = vadd.f32 %v1202, %v1190
      %v1211 = vadd.f32 %v1203, %v1193
      %v1212 = vld [vmem:[%s5] sm:$0x1]
      %v1214 = vlaneseq
      %v1215 = vshrl.u32 %v1214, 7
      %v1216 = vsub.s32 0, %v1215
      %v1217 = vrot.slane %v1212, %v1216
      %v1219 = vadd.f32 %v1204, %v1217
      %v1220 = vadd.f32 %v1205, %v1217
      %v1221 = vadd.f32 %v1206, %v1217
      %v1222 = vadd.f32 %v1207, %v1217
      %v1223 = vadd.f32 %v1208, %v1217
      %v1224 = vadd.f32 %v1209, %v1217
      %v1225 = vadd.f32 %v1210, %v1217
      %v1226 = vadd.f32 %v1211, %v1217
      %1227 = vst.msk [vmem:[%s365] sm:$0xff] %vm1118, %v1219
      %1228 = vst.msk [vmem:[%s365 + $0x8] sm:$0xff] %vm1118, %v1220
      %1229 = vst.msk [vmem:[%s365 + $0x10] sm:$0xff] %vm1118, %v1221
      %1230 = vst.msk [vmem:[%s365 + $0x18] sm:$0xff] %vm1118, %v1222
      %1231 = vst.msk [vmem:[%s365 + $0x20] sm:$0xff] %vm1118, %v1223
      %1232 = vst.msk [vmem:[%s365 + $0x28] sm:$0xff] %vm1118, %v1224
      %1233 = vst.msk [vmem:[%s365 + $0x30] sm:$0xff] %vm1118, %v1225
      %1234 = vst.msk [vmem:[%s365 + $0x38] sm:$0xff] %vm1118, %v1226
      %s1235 = smul.u32 8, %s22
      %p1236 = scmp.lt.s32.totalorder %s21, 1
      %s1237 = scalar_select %p1236, %s21, 1
      %p1238 = scmp.lt.s32.totalorder %s1235, 15
      %s1239 = scalar_select %p1238, %s1235, 15
      %s1240 = smul.addr %s1237, 16
      %s1241 = sadd.s32 %s1239, %s1240
      %s1242 = smul.addr %s1241, 8
      %s1243 = scalar_lea.vmem %s6, %s1242
      // Predicated region
      $region45: #{block_forward.4} parent=43 // pred_check
        %p1244 = pneg %p199
      $region46: #{block_forward.4} parent=43 // pred_check_branch
        %1246 = sbr.rel (%p1244) target = $region48
      $region47: #{block_forward.4} parent=43 // pred_region
        %s1247 = smul.u32 8, %s22
      $region48: #{block_forward.4} parent=43 // pred_fallthru
        _
    $region44: #{block_forward.4} parent=5 // pred_fallthru
      _
    %p1248 = scmp.le.s32.totalorder 2, %s12
    // Predicated region
    $region49: #{block_forward.4} parent=5 // pred_check
      %p1249 = pneg %p1248
    $region50: #{block_forward.4} parent=5 // pred_check_branch
      %1251 = sbr.rel (%p1249) target = $region52
    $region51: #{block_forward.4} parent=5 // pred_region
      %s1252 = ssub.s32 %s12, 2
      // Predicated region
      $region53: #{block_forward.4} parent=51 // pred_check
        %p1253 = pneg %p205
      $region54: #{block_forward.4} parent=51 // pred_check_branch
        %1255 = sbr.rel (%p1253) target = $region56
      $region55: #{block_forward.4} parent=51 // pred_region
        %s1256 = smul.u32 8, %s24
        %p1257 = scmp.lt.s32.totalorder %s23, 1
        %s1258 = scalar_select %p1257, %s23, 1
        %p1259 = scmp.lt.s32.totalorder %s1256, 15
        %s1260 = scalar_select %p1259, %s1256, 15
        %s1261 = smul.addr %s1258, 16
        %s1262 = sadd.s32 %s1260, %s1261
        %s1263 = smul.addr %s1262, 8
        %s1264 = scalar_lea.vmem %s6, %s1263
      $region56: #{block_forward.4} parent=51 // pred_fallthru
        _
    $region52: #{block_forward.4} parent=5 // pred_fallthru
      _
  $region6: #{block_forward.4} parent=0 // loop_footer
    %s16 = sadd.s32 1, %s12
  $region7: #{block_forward.4} parent=0 // loop_footer_branch
    %11 = sbr.rel target = $region3
  $region8: #{block_forward.4} parent=0 // loop_exit
    _

// kernel: block_forward.5
$region0: #{block_forward.5}
  #allocation0 [shape = 'u32[]', space=smem, size = 0x4, offset = 0x4, fixed_abs, tag = 'smem constant byte address 0x4 - core index']
  #allocation1 [shape = 'u32[144,128]{1,0:T(1,128)}', space=vmem, size = 0x12000, scoped, tag = 'internal scratch']
  #allocation2 [shape = 'f32[10,10,256]{2,1,0:T(8,128)}', space=vmem, size = 0x28000, scoped, tag = 'scratch operand']
  %s0 = inlined_call_operand.vmem [shape: f32[2,128,64], index: 0, kind: input, shape index: {}, may-alias: {0,1,2}]
  %s1 = inlined_call_operand.vmem [shape: f32[2,128,64], index: 1, kind: input, shape index: {}, may-alias: {0,1,2}]
  %s2 = inlined_call_operand.vmem [shape: f32[2,128,64], index: 2, kind: input, shape index: {}, may-alias: {0,1,2}]
  %s3 = inlined_call_operand.vmem [shape: bf16[64,256], index: 3, kind: input, shape index: {}]
  %s4 = inlined_call_operand.vmem [shape: f32[1,256], index: 4, kind: input, shape index: {}]
  %s5 = inlined_call_operand.vmem [shape: f32[9,256], index: 5, kind: input, shape index: {}]
  %s6 = inlined_call_operand.vmem [shape: f32[1,256], index: 6, kind: input, shape index: {}]
  %s7 = inlined_call_operand.vmem [shape: bf16[256,64], index: 7, kind: input, shape index: {}]
  %s8 = inlined_call_operand.vmem [shape: f32[1,64], index: 8, kind: input, shape index: {}]
  %s9 = inlined_call_operand.vmem [shape: f32[2,128,64], index: 9, kind: output, shape index: {}]
  %s10 = sld [smem:[#allocation0]]
  $region69: #{block_forward.5} parent=0
    _
  %s12 = ssub.s32 1, %s10
  %s13 = scalar_select 0, %s12, %s10
  loop: start=0, step=1, limit=6
  $region2: #{block_forward.5} parent=0 // loop_pre_header
    _
  $region3: #{block_forward.5} parent=0 // loop_header
    %s15 = sphi 0, %s19
    %p16 = scmp.ge.s32.totalorder %s15, 6
    %s22 = sphi 0, %s34
    %s23 = sphi 0, %s30
    %s24 = sphi 0, %s22
    %s25 = sphi 0, %s23
    %s26 = sphi 0, %s24
    %s27 = sphi 0, %s25
    %s39 = sphi 0, %s41
    %s42 = sphi 0, %s39
    %s43 = sphi 0, %s42
    %s59 = sphi 0, %s43
    %s73 = sphi 0, %s75
    %s76 = sphi 0, %s73
    %s77 = sphi 0, %s76
    %s93 = sphi 0, %s77
    %s107 = sphi 0, %s109
    %s110 = sphi 0, %s107
    %s111 = sphi 0, %s110
    %s127 = sphi 0, %s111
    %s131 = sphi 0, %s131
    %s133 = sphi 0, %s131
    %s134 = sphi 0, %s133
    %s148 = sphi 0, %s134
    %s152 = sphi 0, %s152
    %s154 = sphi 0, %s152
    %s155 = sphi 0, %s154
    %s169 = sphi 0, %s155
    %s173 = sphi 0, %s173
    %s175 = sphi 0, %s173
    %s176 = sphi 0, %s175
    %s190 = sphi 0, %s176
    %s194 = sphi 0, %s194
    %s196 = sphi 0, %s194
    %s197 = sphi 0, %s196
    %s211 = sphi 0, %s197
    %s215 = sphi 0, %s215
    %s217 = sphi 0, %s215
    %s218 = sphi 0, %s217
    %s232 = sphi 0, %s218
    %s236 = sphi 0, %s236
    %s238 = sphi 0, %s236
    %s239 = sphi 0, %s238
    %s253 = sphi 0, %s239
    %s261 = sphi 0, %s263
    %s264 = sphi 0, %s261
    %s265 = sphi 0, %s264
    %s281 = sphi 0, %s265
  $region4: #{block_forward.5} parent=0 // loop_header_branch
    %18 = sbr.rel (%p16) target = $region8
  $region5: #{block_forward.5} parent=0 // loop_body
    %s20 = ssub.s32 %s15, 1
    %s21 = ssub.s32 %s15, 2
    %s28 = sadd.s32 1, %s23
    %p29 = scmp.ge.s32.totalorder %s28, 2
    %s30 = scalar_select %p29, 0, %s28
    %s31 = sadd.s32 1, %s22
    %s32 = scalar_select %p29, %s31, %s22
    %p33 = scmp.ge.s32.totalorder %s32, 2
    %s34 = scalar_select %p33, 0, %s32
    %s35 = ssub.s32 %s22, %s34
    %s36 = ssub.s32 %s23, %s30
    %s37 = sor.u32 %s35, %s36
    %p38 = scmp.eq.s32.totalorder %s37, 0
    %s40 = sadd.s32 %s39, 1
    %s41 = scalar_select %p38, %s39, %s40
    %p44 = pneg %p38
    %p45 = scmp.eq.s32.totalorder %s15, 3
    %p46 = por %p44, %p45
    %p47 = scmp.ne.s32.totalorder %s39, %s42
    %p48 = scmp.eq.s32.totalorder %s15, 0
    %p49 = por %p47, %p48
    %p50 = scmp.ne.s32.totalorder %s39, %s42
    %p51 = scmp.eq.s32.totalorder %s20, 3
    %p52 = por %p50, %p51
    %p53 = scmp.ne.s32.totalorder %s42, %s43
    %p54 = scmp.eq.s32.totalorder %s20, 0
    %p55 = por %p53, %p54
    %p56 = scmp.ne.s32.totalorder %s42, %s43
    %p57 = scmp.eq.s32.totalorder %s21, 3
    %p58 = por %p56, %p57
    %p60 = scmp.ne.s32.totalorder %s43, %s59
    %p61 = scmp.eq.s32.totalorder %s21, 0
    %p62 = por %p60, %p61
    %s63 = ssub.s32 %s23, 1
    %p64 = scmp.gt.s32.totalorder %s63, 0
    %s65 = scalar_select %p64, %s63, 0
    %s66 = ssub.s32 %s30, 1
    %p67 = scmp.gt.s32.totalorder %s66, 0
    %s68 = scalar_select %p67, %s66, 0
    %s69 = ssub.s32 %s22, %s34
    %s70 = ssub.s32 %s65, %s68
    %s71 = sor.u32 %s69, %s70
    %p72 = scmp.eq.s32.totalorder %s71, 0
    %s74 = sadd.s32 %s73, 1
    %s75 = scalar_select %p72, %s73, %s74
    %p78 = pneg %p72
    %p79 = scmp.eq.s32.totalorder %s15, 3
    %p80 = por %p78, %p79
    %p81 = scmp.ne.s32.totalorder %s73, %s76
    %p82 = scmp.eq.s32.totalorder %s15, 0
    %p83 = por %p81, %p82
    %p84 = scmp.ne.s32.totalorder %s73, %s76
    %p85 = scmp.eq.s32.totalorder %s20, 3
    %p86 = por %p84, %p85
    %p87 = scmp.ne.s32.totalorder %s76, %s77
    %p88 = scmp.eq.s32.totalorder %s20, 0
    %p89 = por %p87, %p88
    %p90 = scmp.ne.s32.totalorder %s76, %s77
    %p91 = scmp.eq.s32.totalorder %s21, 3
    %p92 = por %p90, %p91
    %p94 = scmp.ne.s32.totalorder %s77, %s93
    %p95 = scmp.eq.s32.totalorder %s21, 0
    %p96 = por %p94, %p95
    %s97 = sadd.s32 %s23, 1
    %p98 = scmp.lt.s32.totalorder %s97, 1
    %s99 = scalar_select %p98, %s97, 1
    %s100 = sadd.s32 %s30, 1
    %p101 = scmp.lt.s32.totalorder %s100, 1
    %s102 = scalar_select %p101, %s100, 1
    %s103 = ssub.s32 %s22, %s34
    %s104 = ssub.s32 %s99, %s102
    %s105 = sor.u32 %s103, %s104
    %p106 = scmp.eq.s32.totalorder %s105, 0
    %s108 = sadd.s32 %s107, 1
    %s109 = scalar_select %p106, %s107, %s108
    %p112 = pneg %p106
    %p113 = scmp.eq.s32.totalorder %s15, 3
    %p114 = por %p112, %p113
    %p115 = scmp.ne.s32.totalorder %s107, %s110
    %p116 = scmp.eq.s32.totalorder %s15, 0
    %p117 = por %p115, %p116
    %p118 = scmp.ne.s32.totalorder %s107, %s110
    %p119 = scmp.eq.s32.totalorder %s20, 3
    %p120 = por %p118, %p119
    %p121 = scmp.ne.s32.totalorder %s110, %s111
    %p122 = scmp.eq.s32.totalorder %s20, 0
    %p123 = por %p121, %p122
    %p124 = scmp.ne.s32.totalorder %s110, %s111
    %p125 = scmp.eq.s32.totalorder %s21, 3
    %p126 = por %p124, %p125
    %p128 = scmp.ne.s32.totalorder %s111, %s127
    %p129 = scmp.eq.s32.totalorder %s21, 0
    %p130 = por %p128, %p129
    %s132 = sadd.s32 %s131, 1
    %p135 = scmp.eq.s32.totalorder %s15, 3
    %p136 = scmp.ne.s32.totalorder %s131, %s133
    %p137 = scmp.eq.s32.totalorder %s15, 0
    %p138 = por %p136, %p137
    %p139 = scmp.ne.s32.totalorder %s131, %s133
    %p140 = scmp.eq.s32.totalorder %s20, 3
    %p141 = por %p139, %p140
    %p142 = scmp.ne.s32.totalorder %s133, %s134
    %p143 = scmp.eq.s32.totalorder %s20, 0
    %p144 = por %p142, %p143
    %p145 = scmp.ne.s32.totalorder %s133, %s134
    %p146 = scmp.eq.s32.totalorder %s21, 3
    %p147 = por %p145, %p146
    %p149 = scmp.ne.s32.totalorder %s134, %s148
    %p150 = scmp.eq.s32.totalorder %s21, 0
    %p151 = por %p149, %p150
    %s153 = sadd.s32 %s152, 1
    %p156 = scmp.eq.s32.totalorder %s15, 3
    %p157 = scmp.ne.s32.totalorder %s152, %s154
    %p158 = scmp.eq.s32.totalorder %s15, 0
    %p159 = por %p157, %p158
    %p160 = scmp.ne.s32.totalorder %s152, %s154
    %p161 = scmp.eq.s32.totalorder %s20, 3
    %p162 = por %p160, %p161
    %p163 = scmp.ne.s32.totalorder %s154, %s155
    %p164 = scmp.eq.s32.totalorder %s20, 0
    %p165 = por %p163, %p164
    %p166 = scmp.ne.s32.totalorder %s154, %s155
    %p167 = scmp.eq.s32.totalorder %s21, 3
    %p168 = por %p166, %p167
    %p170 = scmp.ne.s32.totalorder %s155, %s169
    %p171 = scmp.eq.s32.totalorder %s21, 0
    %p172 = por %p170, %p171
    %s174 = sadd.s32 %s173, 1
    %p177 = scmp.eq.s32.totalorder %s15, 3
    %p178 = scmp.ne.s32.totalorder %s173, %s175
    %p179 = scmp.eq.s32.totalorder %s15, 0
    %p180 = por %p178, %p179
    %p181 = scmp.ne.s32.totalorder %s173, %s175
    %p182 = scmp.eq.s32.totalorder %s20, 3
    %p183 = por %p181, %p182
    %p184 = scmp.ne.s32.totalorder %s175, %s176
    %p185 = scmp.eq.s32.totalorder %s20, 0
    %p186 = por %p184, %p185
    %p187 = scmp.ne.s32.totalorder %s175, %s176
    %p188 = scmp.eq.s32.totalorder %s21, 3
    %p189 = por %p187, %p188
    %p191 = scmp.ne.s32.totalorder %s176, %s190
    %p192 = scmp.eq.s32.totalorder %s21, 0
    %p193 = por %p191, %p192
    %s195 = sadd.s32 %s194, 1
    %p198 = scmp.eq.s32.totalorder %s15, 3
    %p199 = scmp.ne.s32.totalorder %s194, %s196
    %p200 = scmp.eq.s32.totalorder %s15, 0
    %p201 = por %p199, %p200
    %p202 = scmp.ne.s32.totalorder %s194, %s196
    %p203 = scmp.eq.s32.totalorder %s20, 3
    %p204 = por %p202, %p203
    %p205 = scmp.ne.s32.totalorder %s196, %s197
    %p206 = scmp.eq.s32.totalorder %s20, 0
    %p207 = por %p205, %p206
    %p208 = scmp.ne.s32.totalorder %s196, %s197
    %p209 = scmp.eq.s32.totalorder %s21, 3
    %p210 = por %p208, %p209
    %p212 = scmp.ne.s32.totalorder %s197, %s211
    %p213 = scmp.eq.s32.totalorder %s21, 0
    %p214 = por %p212, %p213
    %s216 = sadd.s32 %s215, 1
    %p219 = scmp.eq.s32.totalorder %s15, 3
    %p220 = scmp.ne.s32.totalorder %s215, %s217
    %p221 = scmp.eq.s32.totalorder %s15, 0
    %p222 = por %p220, %p221
    %p223 = scmp.ne.s32.totalorder %s215, %s217
    %p224 = scmp.eq.s32.totalorder %s20, 3
    %p225 = por %p223, %p224
    %p226 = scmp.ne.s32.totalorder %s217, %s218
    %p227 = scmp.eq.s32.totalorder %s20, 0
    %p228 = por %p226, %p227
    %p229 = scmp.ne.s32.totalorder %s217, %s218
    %p230 = scmp.eq.s32.totalorder %s21, 3
    %p231 = por %p229, %p230
    %p233 = scmp.ne.s32.totalorder %s218, %s232
    %p234 = scmp.eq.s32.totalorder %s21, 0
    %p235 = por %p233, %p234
    %s237 = sadd.s32 %s236, 1
    %p240 = scmp.eq.s32.totalorder %s15, 3
    %p241 = scmp.ne.s32.totalorder %s236, %s238
    %p242 = scmp.eq.s32.totalorder %s15, 0
    %p243 = por %p241, %p242
    %p244 = scmp.ne.s32.totalorder %s236, %s238
    %p245 = scmp.eq.s32.totalorder %s20, 3
    %p246 = por %p244, %p245
    %p247 = scmp.ne.s32.totalorder %s238, %s239
    %p248 = scmp.eq.s32.totalorder %s20, 0
    %p249 = por %p247, %p248
    %p250 = scmp.ne.s32.totalorder %s238, %s239
    %p251 = scmp.eq.s32.totalorder %s21, 3
    %p252 = por %p250, %p251
    %p254 = scmp.ne.s32.totalorder %s239, %s253
    %p255 = scmp.eq.s32.totalorder %s21, 0
    %p256 = por %p254, %p255
    %s257 = ssub.s32 %s22, %s34
    %s258 = ssub.s32 %s23, %s30
    %s259 = sor.u32 %s257, %s258
    %p260 = scmp.eq.s32.totalorder %s259, 0
    %s262 = sadd.s32 %s261, 1
    %s263 = scalar_select %p260, %s261, %s262
    %p266 = pneg %p260
    %p267 = scmp.eq.s32.totalorder %s15, 3
    %p268 = por %p266, %p267
    %p269 = scmp.ne.s32.totalorder %s261, %s264
    %p270 = scmp.eq.s32.totalorder %s15, 0
    %p271 = por %p269, %p270
    %p272 = scmp.ne.s32.totalorder %s261, %s264
    %p273 = scmp.eq.s32.totalorder %s20, 3
    %p274 = por %p272, %p273
    %p275 = scmp.ne.s32.totalorder %s264, %s265
    %p276 = scmp.eq.s32.totalorder %s20, 0
    %p277 = por %p275, %p276
    %p278 = scmp.ne.s32.totalorder %s264, %s265
    %p279 = scmp.eq.s32.totalorder %s21, 3
    %p280 = por %p278, %p279
    %p282 = scmp.ne.s32.totalorder %s265, %s281
    %p283 = scmp.eq.s32.totalorder %s21, 0
    %p284 = por %p282, %p283
    %p285 = scmp.le.s32.totalorder 1, %s15
    %p286 = scmp.lt.s32.totalorder %s15, 5
    %p287 = pnand %p285, %p286
    %p288 = pneg %p287
    // Predicated region
    $region9: #{block_forward.5} parent=5 // pred_check
      _
    $region10: #{block_forward.5} parent=5 // pred_check_branch
      %290 = sbr.rel (%p287) target = $region12
    $region11: #{block_forward.5} parent=5 // pred_region
      %s291 = ssub.s32 %s15, 1
      // Predicated region
      $region13: #{block_forward.5} parent=11 // pred_check
        %p292 = pneg %p144
      $region14: #{block_forward.5} parent=11 // pred_check_branch
        %294 = sbr.rel (%p292) target = $region16
      $region15: #{block_forward.5} parent=11 // pred_region
        _
      $region16: #{block_forward.5} parent=11 // pred_fallthru
        _
      // Predicated region
      $region17: #{block_forward.5} parent=11 // pred_check
        %p295 = pneg %p165
      $region18: #{block_forward.5} parent=11 // pred_check_branch
        %297 = sbr.rel (%p295) target = $region20
      $region19: #{block_forward.5} parent=11 // pred_region
        _
      $region20: #{block_forward.5} parent=11 // pred_fallthru
        _
      // Predicated region
      $region21: #{block_forward.5} parent=11 // pred_check
        %p298 = pneg %p186
      $region22: #{block_forward.5} parent=11 // pred_check_branch
        %300 = sbr.rel (%p298) target = $region24
      $region23: #{block_forward.5} parent=11 // pred_region
        _
      $region24: #{block_forward.5} parent=11 // pred_fallthru
        _
      // Predicated region
      $region25: #{block_forward.5} parent=11 // pred_check
        %p301 = pneg %p207
      $region26: #{block_forward.5} parent=11 // pred_check_branch
        %303 = sbr.rel (%p301) target = $region28
      $region27: #{block_forward.5} parent=11 // pred_region
        _
      $region28: #{block_forward.5} parent=11 // pred_fallthru
        _
      // Predicated region
      $region29: #{block_forward.5} parent=11 // pred_check
        %p304 = pneg %p228
      $region30: #{block_forward.5} parent=11 // pred_check_branch
        %306 = sbr.rel (%p304) target = $region32
      $region31: #{block_forward.5} parent=11 // pred_region
        _
      $region32: #{block_forward.5} parent=11 // pred_fallthru
        _
      // Predicated region
      $region33: #{block_forward.5} parent=11 // pred_check
        %p307 = pneg %p249
      $region34: #{block_forward.5} parent=11 // pred_check_branch
        %309 = sbr.rel (%p307) target = $region36
      $region35: #{block_forward.5} parent=11 // pred_region
        _
      $region36: #{block_forward.5} parent=11 // pred_fallthru
        _
    $region12: #{block_forward.5} parent=5 // pred_fallthru
      _
    %p310 = scmp.lt.s32.totalorder %s15, 4
    // Predicated region
    $region37: #{block_forward.5} parent=5 // pred_check
      %p311 = pneg %p310
    $region38: #{block_forward.5} parent=5 // pred_check_branch
      %313 = sbr.rel (%p311) target = $region40
    $region39: #{block_forward.5} parent=5 // pred_region
      // Predicated region
      $region41: #{block_forward.5} parent=39 // pred_check
        %p314 = pneg %p49
      $region42: #{block_forward.5} parent=39 // pred_check_branch
        %316 = sbr.rel (%p314) target = $region44
      $region43: #{block_forward.5} parent=39 // pred_region
        %s317 = smul.u32 8, %s23
        %p318 = scmp.lt.s32.totalorder %s22, 1
        %s319 = scalar_select %p318, %s22, 1
        %p320 = scmp.lt.s32.totalorder %s317, 15
        %s321 = scalar_select %p320, %s317, 15
        %s322 = smul.addr %s319, 16
        %s323 = sadd.s32 %s321, %s322
        %s324 = smul.addr %s323, 8
        %s325 = scalar_lea.vmem %s0, %s324
        %s326 = smul.u32 8, %s23
      $region44: #{block_forward.5} parent=39 // pred_fallthru
        _
      // Predicated region
      $region45: #{block_forward.5} parent=39 // pred_check
        %p327 = pneg %p83
      $region46: #{block_forward.5} parent=39 // pred_check_branch
        %329 = sbr.rel (%p327) target = $region48
      $region47: #{block_forward.5} parent=39 // pred_region
        %s330 = ssub.s32 %s23, 1
        %p331 = scmp.gt.s32.totalorder %s330, 0
        %s332 = scalar_select %p331, %s330, 0
        %s333 = smul.u32 8, %s332
        %p334 = scmp.lt.s32.totalorder %s22, 1
        %s335 = scalar_select %p334, %s22, 1
        %p336 = scmp.lt.s32.totalorder %s333, 15
        %s337 = scalar_select %p336, %s333, 15
        %s338 = smul.addr %s335, 16
        %s339 = sadd.s32 %s337, %s338
        %s340 = smul.addr %s339, 8
        %s341 = scalar_lea.vmem %s1, %s340
        %s342 = ssub.s32 %s23, 1
        %p343 = scmp.gt.s32.totalorder %s342, 0
        %s344 = scalar_select %p343, %s342, 0
        %s345 = smul.u32 8, %s344
      $region48: #{block_forward.5} parent=39 // pred_fallthru
        _
      // Predicated region
      $region49: #{block_forward.5} parent=39 // pred_check
        %p346 = pneg %p117
      $region50: #{block_forward.5} parent=39 // pred_check_branch
        %348 = sbr.rel (%p346) target = $region52
      $region51: #{block_forward.5} parent=39 // pred_region
        %s349 = sadd.s32 %s23, 1
        %p350 = scmp.lt.s32.totalorder %s349, 1
        %s351 = scalar_select %p350, %s349, 1
        %s352 = smul.u32 8, %s351
        %p353 = scmp.lt.s32.totalorder %s22, 1
        %s354 = scalar_select %p353, %s22, 1
        %p355 = scmp.lt.s32.totalorder %s352, 15
        %s356 = scalar_select %p355, %s352, 15
        %s357 = smul.addr %s354, 16
        %s358 = sadd.s32 %s356, %s357
        %s359 = smul.addr %s358, 8
        %s360 = scalar_lea.vmem %s2, %s359
        %s361 = sadd.s32 %s23, 1
        %p362 = scmp.lt.s32.totalorder %s361, 1
        %s363 = scalar_select %p362, %s361, 1
        %s364 = smul.u32 8, %s363
      $region52: #{block_forward.5} parent=39 // pred_fallthru
        _
    $region40: #{block_forward.5} parent=5 // pred_fallthru
      _
    %p365 = scmp.le.s32.totalorder 1, %s15
    %p366 = scmp.lt.s32.totalorder %s15, 5
    %p367 = pnand %p365, %p366
    %p368 = pneg %p367
    // Predicated region
    $region53: #{block_forward.5} parent=5 // pred_check
      _
    $region54: #{block_forward.5} parent=5 // pred_check_branch
      %370 = sbr.rel (%p367) target = $region56
    $region55: #{block_forward.5} parent=5 // pred_region
      %s371 = ssub.s32 %s15, 1
      %s372 = smul.u32 8, %s25
      %p373 = scmp.lt.s32.totalorder %s24, 1
      %s374 = scalar_select %p373, %s24, 1
      %p375 = scmp.lt.s32.totalorder %s372, 15
      %s376 = scalar_select %p375, %s372, 15
      %s377 = smul.addr %s374, 16
      %s378 = sadd.s32 %s376, %s377
      %s379 = smul.addr %s378, 8
      %s380 = scalar_lea.vmem %s0, %s379
      %p381 = pneg %p55
      %p382 = pneg %p52
      %s383 = ssub.s32 %s25, 1
      %p384 = scmp.gt.s32.totalorder %s383, 0
      %s385 = scalar_select %p384, %s383, 0
      %s386 = smul.u32 8, %s385
      %p387 = scmp.lt.s32.totalorder %s24, 1
      %s388 = scalar_select %p387, %s24, 1
      %p389 = scmp.lt.s32.totalorder %s386, 15
      %s390 = scalar_select %p389, %s386, 15
      %s391 = smul.addr %s388, 16
      %s392 = sadd.s32 %s390, %s391
      %s393 = smul.addr %s392, 8
      %s394 = scalar_lea.vmem %s1, %s393
      %p395 = pneg %p89
      %p396 = pneg %p86
      %s397 = sadd.s32 %s25, 1
      %p398 = scmp.lt.s32.totalorder %s397, 1
      %s399 = scalar_select %p398, %s397, 1
      %s400 = smul.u32 8, %s399
      %p401 = scmp.lt.s32.totalorder %s24, 1
      %s402 = scalar_select %p401, %s24, 1
      %p403 = scmp.lt.s32.totalorder %s400, 15
      %s404 = scalar_select %p403, %s400, 15
      %s405 = smul.addr %s402, 16
      %s406 = sadd.s32 %s404, %s405
      %s407 = smul.addr %s406, 8
      %s408 = scalar_lea.vmem %s2, %s407
      %p409 = pneg %p123
      %p410 = pneg %p120
      %p411 = pneg %p144
      %p412 = pneg %p141
      %p413 = pneg %p165
      %p414 = pneg %p162
      %p415 = pneg %p186
      %p416 = pneg %p183
      %p417 = pneg %p207
      %p418 = pneg %p204
      %p419 = pneg %p228
      %p420 = pneg %p225
      %p421 = pneg %p249
      %p422 = pneg %p246
      %p423 = pneg %p277
      %p424 = pneg %p274
      %s425 = smul.u32 8, %s25
      %p426 = scmp.lt.s32.totalorder %s24, 1
      %s427 = scalar_select %p426, %s24, 1
      %p428 = scmp.lt.s32.totalorder %s425, 15
      %s429 = scalar_select %p428, %s425, 15
      %s430 = smul.addr %s427, 16
      %s431 = sadd.s32 %s429, %s430
      %s432 = smul.addr %s431, 8
      %s433 = scalar_lea.vmem %s9, %s432
      %s434 = smul.u32 8, %s25
      %p435 = scmp.lt.s32.totalorder %s24, 1
      %s436 = scalar_select %p435, %s24, 1
      %p437 = scmp.lt.s32.totalorder %s434, 15
      %s438 = scalar_select %p437, %s434, 15
      %s439 = smul.addr %s436, 16
      %s440 = sadd.s32 %s438, %s439
      %s441 = smul.addr %s440, 8
      %s442 = scalar_lea.vmem %s0, %s441
      %s443 = smul.u32 8, %s25
      %s444 = ssub.s32 %s25, 1
      %p445 = scmp.gt.s32.totalorder %s444, 0
      %s446 = scalar_select %p445, %s444, 0
      %s447 = smul.u32 8, %s446
      %p448 = scmp.lt.s32.totalorder %s24, 1
      %s449 = scalar_select %p448, %s24, 1
      %p450 = scmp.lt.s32.totalorder %s447, 15
      %s451 = scalar_select %p450, %s447, 15
      %s452 = smul.addr %s449, 16
      %s453 = sadd.s32 %s451, %s452
      %s454 = smul.addr %s453, 8
      %s455 = scalar_lea.vmem %s1, %s454
      %s456 = ssub.s32 %s25, 1
      %p457 = scmp.gt.s32.totalorder %s456, 0
      %s458 = scalar_select %p457, %s456, 0
      %s459 = smul.u32 8, %s458
      %s460 = sadd.s32 %s25, 1
      %p461 = scmp.lt.s32.totalorder %s460, 1
      %s462 = scalar_select %p461, %s460, 1
      %s463 = smul.u32 8, %s462
      %p464 = scmp.lt.s32.totalorder %s24, 1
      %s465 = scalar_select %p464, %s24, 1
      %p466 = scmp.lt.s32.totalorder %s463, 15
      %s467 = scalar_select %p466, %s463, 15
      %s468 = smul.addr %s465, 16
      %s469 = sadd.s32 %s467, %s468
      %s470 = smul.addr %s469, 8
      %s471 = scalar_lea.vmem %s2, %s470
      %s472 = sadd.s32 %s25, 1
      %p473 = scmp.lt.s32.totalorder %s472, 1
      %s474 = scalar_select %p473, %s472, 1
      %s475 = smul.u32 8, %s474
      %s476 = smul.u32 8, %s25
      %p477 = scmp.lt.s32.totalorder %s24, 1
      %s478 = scalar_select %p477, %s24, 1
      %p479 = scmp.lt.s32.totalorder %s476, 15
      %s480 = scalar_select %p479, %s476, 15
      %s481 = smul.addr %s478, 16
      %s482 = sadd.s32 %s480, %s481
      %s483 = smul.addr %s482, 8
      %s484 = scalar_lea.vmem %s9, %s483
      %s485 = smul.u32 8, %s25
      %v487 = vld [vmem:[%s442] sm:$0xff]
      %v488 = vld [vmem:[%s442 + $0x8] sm:$0xff]
      %v489 = vld [vmem:[%s442 + $0x10] sm:$0xff]
      %v490 = vld [vmem:[%s442 + $0x18] sm:$0xff]
      %v491 = vld [vmem:[%s442 + $0x20] sm:$0xff]
      %v492 = vld [vmem:[%s442 + $0x28] sm:$0xff]
      %v493 = vld [vmem:[%s442 + $0x30] sm:$0xff]
      %v494 = vld [vmem:[%s442 + $0x38] sm:$0xff]
      %vm495 = vcmask 523264
      %v496 = vsel %vm495, %v487, 0.0
      %497 = vadd.xlane.f32.xlu0 %v496
      %v498 = vpop.xlane.xlu0 %497
      %v499 = vsel %vm495, %v488, 0.0
      %500 = vadd.xlane.f32.xlu0 %v499
      %v501 = vpop.xlane.xlu0 %500
      %v502 = vsel %vm495, %v489, 0.0
      %503 = vadd.xlane.f32.xlu0 %v502
      %v504 = vpop.xlane.xlu0 %503
      %v505 = vsel %vm495, %v490, 0.0
      %506 = vadd.xlane.f32.xlu0 %v505
      %v507 = vpop.xlane.xlu0 %506
      %v508 = vsel %vm495, %v491, 0.0
      %509 = vadd.xlane.f32.xlu0 %v508
      %v510 = vpop.xlane.xlu0 %509
      %v511 = vsel %vm495, %v492, 0.0
      %512 = vadd.xlane.f32.xlu0 %v511
      %v513 = vpop.xlane.xlu0 %512
      %v514 = vsel %vm495, %v493, 0.0
      %515 = vadd.xlane.f32.xlu0 %v514
      %v516 = vpop.xlane.xlu0 %515
      %v517 = vsel %vm495, %v494, 0.0
      %518 = vadd.xlane.f32.xlu0 %v517
      %v519 = vpop.xlane.xlu0 %518
      %v520 = vrcp.pop 64.0
      %v521 = vmul.f32 %v498, %v520
      %v522 = vmul.f32 %v501, %v520
      %v523 = vmul.f32 %v504, %v520
      %v524 = vmul.f32 %v507, %v520
      %v525 = vmul.f32 %v510, %v520
      %v526 = vmul.f32 %v513, %v520
      %v527 = vmul.f32 %v516, %v520
      %v528 = vmul.f32 %v519, %v520
      %v529 = vsub.f32 %v487, %v521
      %v530 = vsub.f32 %v488, %v522
      %v531 = vsub.f32 %v489, %v523
      %v532 = vsub.f32 %v490, %v524
      %v533 = vsub.f32 %v491, %v525
      %v534 = vsub.f32 %v492, %v526
      %v535 = vsub.f32 %v493, %v527
      %v536 = vsub.f32 %v494, %v528
      %v537 = vmul.f32 %v529, %v529
      %v538 = vmul.f32 %v530, %v530
      %v539 = vmul.f32 %v531, %v531
      %v540 = vmul.f32 %v532, %v532
      %v541 = vmul.f32 %v533, %v533
      %v542 = vmul.f32 %v534, %v534
      %v543 = vmul.f32 %v535, %v535
      %v544 = vmul.f32 %v536, %v536
      %v545 = vsel %vm495, %v537, 0.0
      %546 = vadd.xlane.f32.xlu0 %v545
      %v547 = vpop.xlane.xlu0 %546
      %v548 = vsel %vm495, %v538, 0.0
      %549 = vadd.xlane.f32.xlu0 %v548
      %v550 = vpop.xlane.xlu0 %549
      %v551 = vsel %vm495, %v539, 0.0
      %552 = vadd.xlane.f32.xlu0 %v551
      %v553 = vpop.xlane.xlu0 %552
      %v554 = vsel %vm495, %v540, 0.0
      %555 = vadd.xlane.f32.xlu0 %v554
      %v556 = vpop.xlane.xlu0 %555
      %v557 = vsel %vm495, %v541, 0.0
      %558 = vadd.xlane.f32.xlu0 %v557
      %v559 = vpop.xlane.xlu0 %558
      %v560 = vsel %vm495, %v542, 0.0
      %561 = vadd.xlane.f32.xlu0 %v560
      %v562 = vpop.xlane.xlu0 %561
      %v563 = vsel %vm495, %v543, 0.0
      %564 = vadd.xlane.f32.xlu0 %v563
      %v565 = vpop.xlane.xlu0 %564
      %v566 = vsel %vm495, %v544, 0.0
      %567 = vadd.xlane.f32.xlu0 %v566
      %v568 = vpop.xlane.xlu0 %567
      %v569 = vmul.f32 %v547, %v520
      %v570 = vmul.f32 %v550, %v520
      %v571 = vmul.f32 %v553, %v520
      %v572 = vmul.f32 %v556, %v520
      %v573 = vmul.f32 %v559, %v520
      %v574 = vmul.f32 %v562, %v520
      %v575 = vmul.f32 %v565, %v520
      %v576 = vmul.f32 %v568, %v520
      %v577 = vadd.f32 %v569, 1e-05
      %v578 = vadd.f32 %v570, 1e-05
      %v579 = vadd.f32 %v571, 1e-05
      %v580 = vadd.f32 %v572, 1e-05
      %v581 = vadd.f32 %v573, 1e-05
      %v582 = vadd.f32 %v574, 1e-05
      %v583 = vadd.f32 %v575, 1e-05
      %v584 = vadd.f32 %v576, 1e-05
      %v585 = vrsqrt.pop %v577
      %v586 = vrsqrt.pop %v578
      %v587 = vrsqrt.pop %v579
      %v588 = vrsqrt.pop %v580
      %v589 = vrsqrt.pop %v581
      %v590 = vrsqrt.pop %v582
      %v591 = vrsqrt.pop %v583
      %v592 = vrsqrt.pop %v584
      %v593 = vmul.f32 %v529, %v585
      %v594 = vmul.f32 %v530, %v586
      %v595 = vmul.f32 %v531, %v587
      %v596 = vmul.f32 %v532, %v588
      %v597 = vmul.f32 %v533, %v589
      %v598 = vmul.f32 %v534, %v590
      %v599 = vmul.f32 %v535, %v591
      %v600 = vmul.f32 %v536, %v592
      %v601 = vpack.c.bf16 %v594, %v593
      %v602 = vpack.c.bf16 %v596, %v595
      %v603 = vpack.c.bf16 %v598, %v597
      %v604 = vpack.c.bf16 %v600, %v599
      %v605 = vld [vmem:[%s3] sm:$0xff]
      %v606 = vld [vmem:[%s3 + $0x8] sm:$0xff]
      %v607 = vld [vmem:[%s3 + $0x10] sm:$0xff]
      %v608 = vld [vmem:[%s3 + $0x18] sm:$0xff]
      %v609 = vld [vmem:[%s3 + $0x20] sm:$0xff]
      %v610 = vld [vmem:[%s3 + $0x28] sm:$0xff]
      %v611 = vld [vmem:[%s3 + $0x30] sm:$0xff]
      %v612 = vld [vmem:[%s3 + $0x38] sm:$0xff]
      %v613 = vld [vmem:[%s4] sm:$0x3]
      %v615 = vlaneseq
      %v616 = vshrl.u32 %v615, 7
      %v617 = vsub.s32 0, %v616
      %v618 = vrot.slane %v613, %v617
      %v619 = vlaneseq
      %v620 = vshrl.u32 %v619, 7
      %v621 = vsub.s32 1, %v620
      %v622 = vrot.slane %v613, %v621
      %v633 = vunpack.c.l.b16 %v605
      %v634 = vunpack.c.h.b16 %v605
      %v635 = vunpack.c.l.b16 %v606
      %v636 = vunpack.c.h.b16 %v606
      %v637 = vunpack.c.l.b16 %v607
      %v638 = vunpack.c.h.b16 %v607
      %v639 = vunpack.c.l.b16 %v608
      %v640 = vunpack.c.h.b16 %v608
      %v641 = vunpack.c.l.b16 %v609
      %v642 = vunpack.c.h.b16 %v609
      %v643 = vunpack.c.l.b16 %v610
      %v644 = vunpack.c.h.b16 %v610
      %v645 = vunpack.c.l.b16 %v611
      %v646 = vunpack.c.h.b16 %v611
      %v647 = vunpack.c.l.b16 %v612
      %v648 = vunpack.c.h.b16 %v612
      %v649 = vpack.c.b16 %v635, %v633
      %v650 = vpack.c.b16 %v636, %v634
      %v651 = vpack.c.b16 %v639, %v637
      %v652 = vpack.c.b16 %v640, %v638
      %v653 = vpack.c.b16 %v643, %v641
      %v654 = vpack.c.b16 %v644, %v642
      %v655 = vpack.c.b16 %v647, %v645
      %v656 = vpack.c.b16 %v648, %v646
      %v666 = vsel %vm495, %v601, 0
      %v669 = vsel %vm495, %v602, 0
      %v672 = vsel %vm495, %v603, 0
      %v675 = vsel %vm495, %v604, 0
      %677 = vmatprep.subr.bf16.mxu0 %v650
      %678 = vmatpush1.bf16.msra.mxu0 %v649
      %679 = vmatprep.subr.bf16.mxu0 %v652
      %680 = vmatpush1.bf16.msra.mxu0 %v651
      %681 = vmatprep.subr.bf16.mxu0 %v654
      %682 = vmatpush1.bf16.msra.mxu0 %v653
      %683 = vmatprep.subr.bf16.mxu0 %v656
      %684 = vmatpush1.bf16.msra.mxu0 %v655
      %685 = vmatprep.subr.bf16.mxu0 0
      %686 = vmatpush1.bf16.msra.mxu0 0
      %687 = vmatprep.subr.bf16.mxu0 0
      %688 = vmatpush1.bf16.msra.mxu0 0
      %689 = vmatprep.subr.bf16.mxu0 0
      %690 = vmatpush1.bf16.msra.mxu0 0
      %691 = vmatprep.subr.bf16.mxu0 0
      %692 = vmatpush1.bf16.msra.mxu0 0
      %693 = vmatprep.subr.bf16.mxu0 0
      %694 = vmatpush1.bf16.msra.mxu0 0
      %695 = vmatprep.subr.bf16.mxu0 0
      %696 = vmatpush1.bf16.msra.mxu0 0
      %697 = vmatprep.subr.bf16.mxu0 0
      %698 = vmatpush1.bf16.msra.mxu0 0
      %699 = vmatprep.subr.bf16.mxu0 0
      %700 = vmatpush1.bf16.msra.mxu0 0
      %701 = vmatprep.subr.bf16.mxu0 0
      %702 = vmatpush1.bf16.msra.mxu0 0
      %703 = vmatprep.subr.bf16.mxu0 0
      %704 = vmatpush1.bf16.msra.mxu0 0
      %705 = vmatprep.subr.bf16.mxu0 0
      %706 = vmatpush1.bf16.msra.mxu0 0
      %707 = vmatprep.subr.bf16.mxu0 0
      %708 = vmatpush1.bf16.msra.mxu0 0
      %709 = vmatprep.mubr.bf16.mxu0 0
      %710 = vmatmul.mubr.bf16.gmra.mrb[0].mxu0 %v666
      %v711 = vpop.f32.mrb[0].mxu0
      %v712 = vadd.f32 %v618, %v711
      %v713 = vpop.f32.mrb[0].mxu0
      %v714 = vadd.f32 %v622, %v713
      %v715 = vpop.f32.mrb[0].mxu0
      %v716 = vadd.f32 %v618, %v715
      %v717 = vpop.f32.mrb[0].mxu0
      %v718 = vadd.f32 %v622, %v717
      %719 = vmatprep.mubr.bf16.mxu0 0
      %720 = vmatmul.mubr.bf16.gmra.mrb[0].mxu0 %v669
      %v721 = vpop.f32.mrb[0].mxu0
      %v722 = vadd.f32 %v618, %v721
      %v723 = vpop.f32.mrb[0].mxu0
      %v724 = vadd.f32 %v622, %v723
      %v725 = vpop.f32.mrb[0].mxu0
      %v726 = vadd.f32 %v618, %v725
      %v727 = vpop.f32.mrb[0].mxu0
      %v728 = vadd.f32 %v622, %v727
      %729 = vmatprep.mubr.bf16.mxu0 0
      %730 = vmatmul.mubr.bf16.gmra.mrb[0].mxu0 %v672
      %v731 = vpop.f32.mrb[0].mxu0
      %v732 = vadd.f32 %v618, %v731
      %v733 = vpop.f32.mrb[0].mxu0
      %v734 = vadd.f32 %v622, %v733
      %v735 = vpop.f32.mrb[0].mxu0
      %v736 = vadd.f32 %v618, %v735
      %v737 = vpop.f32.mrb[0].mxu0
      %v738 = vadd.f32 %v622, %v737
      %739 = vmatprep.mubr.bf16.mxu0 0
      %740 = vmatmul.mubr.bf16.gmra.mrb[0].mxu0 %v675
      %v741 = vpop.f32.mrb[0].mxu0
      %v742 = vadd.f32 %v618, %v741
      %v743 = vpop.f32.mrb[0].mxu0
      %v744 = vadd.f32 %v622, %v743
      %v745 = vpop.f32.mrb[0].mxu0
      %v746 = vadd.f32 %v618, %v745
      %v747 = vpop.f32.mrb[0].mxu0
      %v748 = vadd.f32 %v622, %v747
      %749 = vdwg.mxu0
      %p750 = scmp.gt.s32.totalorder %s25, 0
      %v751 = vld [vmem:[%s455 + $0x38] sm:$0xff]
      %v752 = vsel %vm495, %v751, 0.0
      %753 = vadd.xlane.f32.xlu0 %v752
      %v754 = vpop.xlane.xlu0 %753
      %v755 = vmul.f32 %v754, %v520
      %v756 = vsub.f32 %v751, %v755
      %v757 = vmul.f32 %v756, %v756
      %v758 = vsel %vm495, %v757, 0.0
      %759 = vadd.xlane.f32.xlu0 %v758
      %v760 = vpop.xlane.xlu0 %759
      %v761 = vmul.f32 %v760, %v520
      %v762 = vadd.f32 %v761, 1e-05
      %v763 = vrsqrt.pop %v762
      %v764 = vmul.f32 %v756, %v763
      %v765 = vpack.c.bf16 %v764, %v764
      %v767 = vsel %vm495, %v765, 0
      %769 = vmatprep.subr.bf16.mxu0 %v650
      %770 = vmatpush1.bf16.msra.mxu0 %v649
      %771 = vmatprep.subr.bf16.mxu0 %v652
      %772 = vmatpush1.bf16.msra.mxu0 %v651
      %773 = vmatprep.subr.bf16.mxu0 %v654
      %774 = vmatpush1.bf16.msra.mxu0 %v653
      %775 = vmatprep.subr.bf16.mxu0 %v656
      %776 = vmatpush1.bf16.msra.mxu0 %v655
      %777 = vmatprep.subr.bf16.mxu0 0
      %778 = vmatpush1.bf16.msra.mxu0 0
      %779 = vmatprep.subr.bf16.mxu0 0
      %780 = vmatpush1.bf16.msra.mxu0 0
      %781 = vmatprep.subr.bf16.mxu0 0
      %782 = vmatpush1.bf16.msra.mxu0 0
      %783 = vmatprep.subr.bf16.mxu0 0
      %784 = vmatpush1.bf16.msra.mxu0 0
      %785 = vmatprep.subr.bf16.mxu0 0
      %786 = vmatpush1.bf16.msra.mxu0 0
      %787 = vmatprep.subr.bf16.mxu0 0
      %788 = vmatpush1.bf16.msra.mxu0 0
      %789 = vmatprep.subr.bf16.mxu0 0
      %790 = vmatpush1.bf16.msra.mxu0 0
      %791 = vmatprep.subr.bf16.mxu0 0
      %792 = vmatpush1.bf16.msra.mxu0 0
      %793 = vmatprep.subr.bf16.mxu0 0
      %794 = vmatpush1.bf16.msra.mxu0 0
      %795 = vmatprep.subr.bf16.mxu0 0
      %796 = vmatpush1.bf16.msra.mxu0 0
      %797 = vmatprep.subr.bf16.mxu0 0
      %798 = vmatpush1.bf16.msra.mxu0 0
      %799 = vmatprep.subr.bf16.mxu0 0
      %800 = vmatpush1.bf16.msra.mxu0 0
      %801 = vmatprep.mubr.bf16.mxu0 0
      %802 = vmatmul.mubr.bf16.gmra.mrb[0].mxu0 %v767
      %v803 = vpop.f32.mrb[0].mxu0
      %v804 = vadd.f32 %v618, %v803
      %v805 = vpop.f32.mrb[0].mxu0
      %v806 = vadd.f32 %v622, %v805
      %v807 = vpop.f32.mrb[0].mxu0
      %v808 = vpop.f32.mrb[0].mxu0
      %809 = vdwg.mxu0
      %s810 = scalar_select %p750, 1, 0
      %v811 = vstv %s810
      %vm812 = vcmp.eq.s32.totalorder %v811, 1
      %v813 = vsel %vm812, %v804, 0.0
      %v814 = vsel %vm812, %v806, 0.0
      %p815 = scmp.lt.s32.totalorder %s25, 1
      %v816 = vld [vmem:[%s471] sm:$0xff]
      %v817 = vsel %vm495, %v816, 0.0
      %818 = vadd.xlane.f32.xlu0 %v817
      %v819 = vpop.xlane.xlu0 %818
      %v820 = vmul.f32 %v819, %v520
      %v821 = vsub.f32 %v816, %v820
      %v822 = vmul.f32 %v821, %v821
      %v823 = vsel %vm495, %v822, 0.0
      %824 = vadd.xlane.f32.xlu0 %v823
      %v825 = vpop.xlane.xlu0 %824
      %v826 = vmul.f32 %v825, %v520
      %v827 = vadd.f32 %v826, 1e-05
      %v828 = vrsqrt.pop %v827
      %v829 = vmul.f32 %v821, %v828
      %v830 = vpack.c.bf16 %v829, %v829
      %v832 = vsel %vm495, %v830, 0
      %834 = vmatprep.subr.bf16.mxu0 %v650
      %835 = vmatpush1.bf16.msra.mxu0 %v649
      %836 = vmatprep.subr.bf16.mxu0 %v652
      %837 = vmatpush1.bf16.msra.mxu0 %v651
      %838 = vmatprep.subr.bf16.mxu0 %v654
      %839 = vmatpush1.bf16.msra.mxu0 %v653
      %840 = vmatprep.subr.bf16.mxu0 %v656
      %841 = vmatpush1.bf16.msra.mxu0 %v655
      %842 = vmatprep.subr.bf16.mxu0 0
      %843 = vmatpush1.bf16.msra.mxu0 0
      %844 = vmatprep.subr.bf16.mxu0 0
      %845 = vmatpush1.bf16.msra.mxu0 0
      %846 = vmatprep.subr.bf16.mxu0 0
      %847 = vmatpush1.bf16.msra.mxu0 0
      %848 = vmatprep.subr.bf16.mxu0 0
      %849 = vmatpush1.bf16.msra.mxu0 0
      %850 = vmatprep.subr.bf16.mxu0 0
      %851 = vmatpush1.bf16.msra.mxu0 0
      %852 = vmatprep.subr.bf16.mxu0 0
      %853 = vmatpush1.bf16.msra.mxu0 0
      %854 = vmatprep.subr.bf16.mxu0 0
      %855 = vmatpush1.bf16.msra.mxu0 0
      %856 = vmatprep.subr.bf16.mxu0 0
      %857 = vmatpush1.bf16.msra.mxu0 0
      %858 = vmatprep.subr.bf16.mxu0 0
      %859 = vmatpush1.bf16.msra.mxu0 0
      %860 = vmatprep.subr.bf16.mxu0 0
      %861 = vmatpush1.bf16.msra.mxu0 0
      %862 = vmatprep.subr.bf16.mxu0 0
      %863 = vmatpush1.bf16.msra.mxu0 0
      %864 = vmatprep.subr.bf16.mxu0 0
      %865 = vmatpush1.bf16.msra.mxu0 0
      %866 = vmatprep.mubr.bf16.mxu0 0
      %867 = vmatmul.mubr.bf16.gmra.mrb[0].mxu0 %v832
      %v868 = vpop.f32.mrb[0].mxu0
      %v869 = vadd.f32 %v618, %v868
      %v870 = vpop.f32.mrb[0].mxu0
      %v871 = vadd.f32 %v622, %v870
      %v872 = vpop.f32.mrb[0].mxu0
      %v873 = vpop.f32.mrb[0].mxu0
      %874 = vdwg.mxu0
      %s875 = scalar_select %p815, 1, 0
      %v876 = vstv %s875
      %vm877 = vcmp.eq.s32.totalorder %v876, 1
      %v878 = vsel %vm877, %v869, 0.0
      %v879 = vsel %vm877, %v871, 0.0
      %v896 = vrot.slane %v712, 7
      %v897 = vrot.slane %v714, 7
      %v898 = vrot.slane %v716, 7
      %v899 = vrot.slane %v718, 7
      %v900 = vrot.slane %v722, 7
      %v901 = vrot.slane %v724, 7
      %v902 = vrot.slane %v726, 7
      %v903 = vrot.slane %v728, 7
      %v904 = vrot.slane %v732, 7
      %v905 = vrot.slane %v734, 7
      %v906 = vrot.slane %v736, 7
      %v907 = vrot.slane %v738, 7
      %v908 = vrot.slane %v742, 7
      %v909 = vrot.slane %v744, 7
      %v910 = vrot.slane %v746, 7
      %v911 = vrot.slane %v748, 7
      %s928 = scalar_lea.vmem [#allocation2], 32
      %929 = vst [vmem:[%s928] sm:$0xfe] %v896
      %930 = vst [vmem:[%s928 + $0x8] sm:$0xfe] %v897
      %931 = vst [vmem:[%s928 + $0x10] sm:$0x1] %v896
      %932 = vst [vmem:[%s928 + $0x18] sm:$0x1] %v897
      %933 = vst [vmem:[%s928 + $0x20] sm:$0xfe] %v898
      %934 = vst [vmem:[%s928 + $0x28] sm:$0xfe] %v899
      %935 = vst [vmem:[%s928 + $0x30] sm:$0x1] %v898
      %936 = vst [vmem:[%s928 + $0x38] sm:$0x1] %v899
      %937 = vst [vmem:[%s928 + $0x40] sm:$0xfe] %v900
      %938 = vst [vmem:[%s928 + $0x48] sm:$0xfe] %v901
      %939 = vst [vmem:[%s928 + $0x50] sm:$0x1] %v900
      %940 = vst [vmem:[%s928 + $0x58] sm:$0x1] %v901
      %941 = vst [vmem:[%s928 + $0x60] sm:$0xfe] %v902
      %942 = vst [vmem:[%s928 + $0x68] sm:$0xfe] %v903
      %943 = vst [vmem:[%s928 + $0x70] sm:$0x1] %v902
      %944 = vst [vmem:[%s928 + $0x78] sm:$0x1] %v903
      %945 = vst [vmem:[%s928 + $0x80] sm:$0xfe] %v904
      %946 = vst [vmem:[%s928 + $0x88] sm:$0xfe] %v905
      %947 = vst [vmem:[%s928 + $0x90] sm:$0x1] %v904
      %948 = vst [vmem:[%s928 + $0x98] sm:$0x1] %v905
      %949 = vst [vmem:[%s928 + $0xa0] sm:$0xfe] %v906
      %950 = vst [vmem:[%s928 + $0xa8] sm:$0xfe] %v907
      %951 = vst [vmem:[%s928 + $0xb0] sm:$0x1] %v906
      %952 = vst [vmem:[%s928 + $0xb8] sm:$0x1] %v907
      %953 = vst [vmem:[%s928 + $0xc0] sm:$0xfe] %v908
      %954 = vst [vmem:[%s928 + $0xc8] sm:$0xfe] %v909
      %955 = vst [vmem:[%s928 + $0xd0] sm:$0x1] %v908
      %956 = vst [vmem:[%s928 + $0xd8] sm:$0x1] %v909
      %957 = vst [vmem:[%s928 + $0xe0] sm:$0xfe] %v910
      %958 = vst [vmem:[%s928 + $0xe8] sm:$0xfe] %v911
      %959 = vst [vmem:[%s928 + $0xf0] sm:$0x1] %v910
      %960 = vst [vmem:[%s928 + $0xf8] sm:$0x1] %v911
      %v963 = vrot.slane %v813, 7
      %v964 = vrot.slane %v814, 7
      %967 = vst [vmem:[#allocation2] sm:$0xfe] %v963
      %968 = vst [vmem:[#allocation2 + $0x8] sm:$0xfe] %v964
      %969 = vst [vmem:[#allocation2 + $0x10] sm:$0x1] %v963
      %970 = vst [vmem:[#allocation2 + $0x18] sm:$0x1] %v964
      %v973 = vrot.slane %v878, 7
      %v974 = vrot.slane %v879, 7
      %s977 = scalar_lea.vmem [#allocation2], 288
      %978 = vst [vmem:[%s977] sm:$0xfe] %v973
      %979 = vst [vmem:[%s977 + $0x8] sm:$0xfe] %v974
      %980 = vst [vmem:[%s977 + $0x10] sm:$0x1] %v973
      %981 = vst [vmem:[%s977 + $0x18] sm:$0x1] %v974
      %v982 = vlaneseq
      %vm983 = vcmp.ge.s32.totalorder %v982, 0
      %vm984 = vcmp.lt.s32.totalorder %v982, 256
      %vm985 = vmand %vm983, %vm984
      %986 = vst.msk [vmem:[#allocation2] ss:$8 sm:$0x3] %vm985, 0.0
      %987 = vst.msk [vmem:[#allocation2] ss:$8 sm:$0x0] %vm985, 0.0
      %s988 = scalar_lea.vmem [#allocation2], 32
      %989 = vst.msk [vmem:[%s988] ss:$8 sm:$0x3] %vm985, 0.0
      %990 = vst.msk [vmem:[%s988] ss:$8 sm:$0x0] %vm985, 0.0
      %s991 = scalar_lea.vmem [#allocation2], 64
      %992 = vst.msk [vmem:[%s991] ss:$8 sm:$0x3] %vm985, 0.0
      %993 = vst.msk [vmem:[%s991] ss:$8 sm:$0x0] %vm985, 0.0
      %s994 = scalar_lea.vmem [#allocation2], 96
      %995 = vst.msk [vmem:[%s994] ss:$8 sm:$0x3] %vm985, 0.0
      %996 = vst.msk [vmem:[%s994] ss:$8 sm:$0x0] %vm985, 0.0
      %s997 = scalar_lea.vmem [#allocation2], 128
      %998 = vst.msk [vmem:[%s997] ss:$8 sm:$0x3] %vm985, 0.0
      %999 = vst.msk [vmem:[%s997] ss:$8 sm:$0x0] %vm985, 0.0
      %s1000 = scalar_lea.vmem [#allocation2], 160
      %1001 = vst.msk [vmem:[%s1000] ss:$8 sm:$0x3] %vm985, 0.0
      %1002 = vst.msk [vmem:[%s1000] ss:$8 sm:$0x0] %vm985, 0.0
      %s1003 = scalar_lea.vmem [#allocation2], 192
      %1004 = vst.msk [vmem:[%s1003] ss:$8 sm:$0x3] %vm985, 0.0
      %1005 = vst.msk [vmem:[%s1003] ss:$8 sm:$0x0] %vm985, 0.0
      %s1006 = scalar_lea.vmem [#allocation2], 224
      %1007 = vst.msk [vmem:[%s1006] ss:$8 sm:$0x3] %vm985, 0.0
      %1008 = vst.msk [vmem:[%s1006] ss:$8 sm:$0x0] %vm985, 0.0
      %s1009 = scalar_lea.vmem [#allocation2], 256
      %1010 = vst.msk [vmem:[%s1009] ss:$8 sm:$0x3] %vm985, 0.0
      %1011 = vst.msk [vmem:[%s1009] ss:$8 sm:$0x0] %vm985, 0.0
      %s1012 = scalar_lea.vmem [#allocation2], 288
      %1013 = vst.msk [vmem:[%s1012] ss:$8 sm:$0x3] %vm985, 0.0
      %1014 = vst.msk [vmem:[%s1012] ss:$8 sm:$0x0] %vm985, 0.0
      %s1015 = scalar_lea.vmem [#allocation2], 17
      %1016 = vst.msk [vmem:[%s1015] ss:$8 sm:$0x3] %vm985, 0.0
      %1017 = vst.msk [vmem:[%s1015] ss:$8 sm:$0x0] %vm985, 0.0
      %s1018 = scalar_lea.vmem [#allocation2], 49
      %1019 = vst.msk [vmem:[%s1018] ss:$8 sm:$0x3] %vm985, 0.0
      %1020 = vst.msk [vmem:[%s1018] ss:$8 sm:$0x0] %vm985, 0.0
      %s1021 = scalar_lea.vmem [#allocation2], 81
      %1022 = vst.msk [vmem:[%s1021] ss:$8 sm:$0x3] %vm985, 0.0
      %1023 = vst.msk [vmem:[%s1021] ss:$8 sm:$0x0] %vm985, 0.0
      %s1024 = scalar_lea.vmem [#allocation2], 113
      %1025 = vst.msk [vmem:[%s1024] ss:$8 sm:$0x3] %vm985, 0.0
      %1026 = vst.msk [vmem:[%s1024] ss:$8 sm:$0x0] %vm985, 0.0
      %s1027 = scalar_lea.vmem [#allocation2], 145
      %1028 = vst.msk [vmem:[%s1027] ss:$8 sm:$0x3] %vm985, 0.0
      %1029 = vst.msk [vmem:[%s1027] ss:$8 sm:$0x0] %vm985, 0.0
      %s1030 = scalar_lea.vmem [#allocation2], 177
      %1031 = vst.msk [vmem:[%s1030] ss:$8 sm:$0x3] %vm985, 0.0
      %1032 = vst.msk [vmem:[%s1030] ss:$8 sm:$0x0] %vm985, 0.0
      %s1033 = scalar_lea.vmem [#allocation2], 209
      %1034 = vst.msk [vmem:[%s1033] ss:$8 sm:$0x3] %vm985, 0.0
      %1035 = vst.msk [vmem:[%s1033] ss:$8 sm:$0x0] %vm985, 0.0
      %s1036 = scalar_lea.vmem [#allocation2], 241
      %1037 = vst.msk [vmem:[%s1036] ss:$8 sm:$0x3] %vm985, 0.0
      %1038 = vst.msk [vmem:[%s1036] ss:$8 sm:$0x0] %vm985, 0.0
      %s1039 = scalar_lea.vmem [#allocation2], 273
      %1040 = vst.msk [vmem:[%s1039] ss:$8 sm:$0x3] %vm985, 0.0
      %1041 = vst.msk [vmem:[%s1039] ss:$8 sm:$0x0] %vm985, 0.0
      %s1042 = scalar_lea.vmem [#allocation2], 305
      %1043 = vst.msk [vmem:[%s1042] ss:$8 sm:$0x3] %vm985, 0.0
      %1044 = vst.msk [vmem:[%s1042] ss:$8 sm:$0x0] %vm985, 0.0
      %v1045 = vld [vmem:[%s5] sm:$0xff]
      %v1046 = vld [vmem:[%s5 + $0x8] sm:$0xff]
      %v1047 = vld [vmem:[%s5 + $0x10] sm:$0x1]
      %v1048 = vld [vmem:[%s5 + $0x18] sm:$0x1]
      %v1049 = vld [vmem:[#allocation2] sm:$0xff]
      %v1050 = vld [vmem:[#allocation2 + $0x8] sm:$0xff]
      %v1051 = vld [vmem:[#allocation2 + $0x20] sm:$0xff]
      %v1052 = vld [vmem:[#allocation2 + $0x28] sm:$0xff]
      %v1053 = vld [vmem:[#allocation2 + $0x40] sm:$0xff]
      %v1054 = vld [vmem:[#allocation2 + $0x48] sm:$0xff]
      %v1055 = vld [vmem:[#allocation2 + $0x60] sm:$0xff]
      %v1056 = vld [vmem:[#allocation2 + $0x68] sm:$0xff]
      %v1057 = vld [vmem:[#allocation2 + $0x80] sm:$0xff]
      %v1058 = vld [vmem:[#allocation2 + $0x88] sm:$0xff]
      %v1059 = vld [vmem:[#allocation2 + $0xa0] sm:$0xff]
      %v1060 = vld [vmem:[#allocation2 + $0xa8] sm:$0xff]
      %v1061 = vld [vmem:[#allocation2 + $0xc0] sm:$0xff]
      %v1062 = vld [vmem:[#allocation2 + $0xc8] sm:$0xff]
      %v1063 = vld [vmem:[#allocation2 + $0xe0] sm:$0xff]
      %v1064 = vld [vmem:[#allocation2 + $0xe8] sm:$0xff]
      %v1065 = vld [vmem:[#allocation2 + $0x100] sm:$0xff]
      %v1066 = vld [vmem:[#allocation2 + $0x108] sm:$0xff]
      %v1067 = vld [vmem:[#allocation2 + $0x120] sm:$0xff]
      %v1068 = vld [vmem:[#allocation2 + $0x128] sm:$0xff]
      %v1069 = vlaneseq
      %v1070 = vshrl.u32 %v1069, 7
      %v1071 = vsub.s32 0, %v1070
      %v1072 = vrot.slane %v1045, %v1071
      %v1073 = vlaneseq
      %v1074 = vshrl.u32 %v1073, 7
      %v1075 = vsub.s32 0, %v1074
      %v1076 = vrot.slane %v1046, %v1075
      %v1077 = vmul.f32 %v1049, %v1072
      %v1078 = vmul.f32 %v1050, %v1076
      %v1079 = vmul.f32 %v1051, %v1072
      %v1080 = vmul.f32 %v1052, %v1076
      %v1081 = vmul.f32 %v1053, %v1072
      %v1082 = vmul.f32 %v1054, %v1076
      %v1083 = vmul.f32 %v1055, %v1072
      %v1084 = vmul.f32 %v1056, %v1076
      %v1085 = vmul.f32 %v1057, %v1072
      %v1086 = vmul.f32 %v1058, %v1076
      %v1087 = vmul.f32 %v1059, %v1072
      %v1088 = vmul.f32 %v1060, %v1076
      %v1089 = vmul.f32 %v1061, %v1072
      %v1090 = vmul.f32 %v1062, %v1076
      %v1091 = vmul.f32 %v1063, %v1072
      %v1092 = vmul.f32 %v1064, %v1076
      %v1093 = vadd.f32 %v1077, 0.0
      %v1094 = vadd.f32 %v1078, 0.0
      %v1095 = vadd.f32 %v1079, 0.0
      %v1096 = vadd.f32 %v1080, 0.0
      %v1097 = vadd.f32 %v1081, 0.0
      %v1098 = vadd.f32 %v1082, 0.0
      %v1099 = vadd.f32 %v1083, 0.0
      %v1100 = vadd.f32 %v1084, 0.0
      %v1101 = vadd.f32 %v1085, 0.0
      %v1102 = vadd.f32 %v1086, 0.0
      %v1103 = vadd.f32 %v1087, 0.0
      %v1104 = vadd.f32 %v1088, 0.0
      %v1105 = vadd.f32 %v1089, 0.0
      %v1106 = vadd.f32 %v1090, 0.0
      %v1107 = vadd.f32 %v1091, 0.0
      %v1108 = vadd.f32 %v1092, 0.0
      %v1109 = vlaneseq
      %v1110 = vshrl.u32 %v1109, 7
      %v1111 = vsub.s32 3, %v1110
      %v1112 = vrot.slane %v1045, %v1111
      %v1113 = vlaneseq
      %v1114 = vshrl.u32 %v1113, 7
      %v1115 = vsub.s32 3, %v1114
      %v1116 = vrot.slane %v1046, %v1115
      %v1117 = vmul.f32 %v1051, %v1112
      %v1118 = vmul.f32 %v1052, %v1116
      %v1119 = vmul.f32 %v1053, %v1112
      %v1120 = vmul.f32 %v1054, %v1116
      %v1121 = vmul.f32 %v1055, %v1112
      %v1122 = vmul.f32 %v1056, %v1116
      %v1123 = vmul.f32 %v1057, %v1112
      %v1124 = vmul.f32 %v1058, %v1116
      %v1125 = vmul.f32 %v1059, %v1112
      %v1126 = vmul.f32 %v1060, %v1116
      %v1127 = vmul.f32 %v1061, %v1112
      %v1128 = vmul.f32 %v1062, %v1116
      %v1129 = vmul.f32 %v1063, %v1112
      %v1130 = vmul.f32 %v1064, %v1116
      %v1131 = vmul.f32 %v1065, %v1112
      %v1132 = vmul.f32 %v1066, %v1116
      %v1133 = vadd.f32 %v1093, %v1117
      %v1134 = vadd.f32 %v1094, %v1118
      %v1135 = vadd.f32 %v1095, %v1119
      %v1136 = vadd.f32 %v1096, %v1120
      %v1137 = vadd.f32 %v1097, %v1121
      %v1138 = vadd.f32 %v1098, %v1122
      %v1139 = vadd.f32 %v1099, %v1123
      %v1140 = vadd.f32 %v1100, %v1124
      %v1141 = vadd.f32 %v1101, %v1125
      %v1142 = vadd.f32 %v1102, %v1126
      %v1143 = vadd.f32 %v1103, %v1127
      %v1144 = vadd.f32 %v1104, %v1128
      %v1145 = vadd.f32 %v1105, %v1129
      %v1146 = vadd.f32 %v1106, %v1130
      %v1147 = vadd.f32 %v1107, %v1131
      %v1148 = vadd.f32 %v1108, %v1132
      %v1149 = vlaneseq
      %v1150 = vshrl.u32 %v1149, 7
      %v1151 = vsub.s32 6, %v1150
      %v1152 = vrot.slane %v1045, %v1151
      %v1153 = vlaneseq
      %v1154 = vshrl.u32 %v1153, 7
      %v1155 = vsub.s32 6, %v1154
      %v1156 = vrot.slane %v1046, %v1155
      %v1157 = vmul.f32 %v1053, %v1152
      %v1158 = vmul.f32 %v1054, %v1156
      %v1159 = vmul.f32 %v1055, %v1152
      %v1160 = vmul.f32 %v1056, %v1156
      %v1161 = vmul.f32 %v1057, %v1152
      %v1162 = vmul.f32 %v1058, %v1156
      %v1163 = vmul.f32 %v1059, %v1152
      %v1164 = vmul.f32 %v1060, %v1156
      %v1165 = vmul.f32 %v1061, %v1152
      %v1166 = vmul.f32 %v1062, %v1156
      %v1167 = vmul.f32 %v1063, %v1152
      %v1168 = vmul.f32 %v1064, %v1156
      %v1169 = vmul.f32 %v1065, %v1152
      %v1170 = vmul.f32 %v1066, %v1156
      %v1171 = vmul.f32 %v1067, %v1152
      %v1172 = vmul.f32 %v1068, %v1156
      %v1173 = vadd.f32 %v1133, %v1157
      %v1174 = vadd.f32 %v1134, %v1158
      %v1175 = vadd.f32 %v1135, %v1159
      %v1176 = vadd.f32 %v1136, %v1160
      %v1177 = vadd.f32 %v1137, %v1161
      %v1178 = vadd.f32 %v1138, %v1162
      %v1179 = vadd.f32 %v1139, %v1163
      %v1180 = vadd.f32 %v1140, %v1164
      %v1181 = vadd.f32 %v1141, %v1165
      %v1182 = vadd.f32 %v1142, %v1166
      %v1183 = vadd.f32 %v1143, %v1167
      %v1184 = vadd.f32 %v1144, %v1168
      %v1185 = vadd.f32 %v1145, %v1169
      %v1186 = vadd.f32 %v1146, %v1170
      %v1187 = vadd.f32 %v1147, %v1171
      %v1188 = vadd.f32 %v1148, %v1172
      %v1189 = vld [vmem:[#allocation2] sm:$0xfe]
      %v1190 = vld [vmem:[#allocation2 + $0x8] sm:$0xfe]
      %v1191 = vld [vmem:[#allocation2 + $0x10] sm:$0x1]
      %v1192 = vld [vmem:[#allocation2 + $0x18] sm:$0x1]
      %v1193 = vld [vmem:[#allocation2 + $0x20] sm:$0xfe]
      %v1194 = vld [vmem:[#allocation2 + $0x28] sm:$0xfe]
      %v1195 = vld [vmem:[#allocation2 + $0x30] sm:$0x1]
      %v1196 = vld [vmem:[#allocation2 + $0x38] sm:$0x1]
      %v1197 = vld [vmem:[#allocation2 + $0x40] sm:$0xfe]
      %v1198 = vld [vmem:[#allocation2 + $0x48] sm:$0xfe]
      %v1199 = vld [vmem:[#allocation2 + $0x50] sm:$0x1]
      %v1200 = vld [vmem:[#allocation2 + $0x58] sm:$0x1]
      %v1201 = vld [vmem:[#allocation2 + $0x60] sm:$0xfe]
      %v1202 = vld [vmem:[#allocation2 + $0x68] sm:$0xfe]
      %v1203 = vld [vmem:[#allocation2 + $0x70] sm:$0x1]
      %v1204 = vld [vmem:[#allocation2 + $0x78] sm:$0x1]
      %v1205 = vld [vmem:[#allocation2 + $0x80] sm:$0xfe]
      %v1206 = vld [vmem:[#allocation2 + $0x88] sm:$0xfe]
      %v1207 = vld [vmem:[#allocation2 + $0x90] sm:$0x1]
      %v1208 = vld [vmem:[#allocation2 + $0x98] sm:$0x1]
      %v1209 = vld [vmem:[#allocation2 + $0xa0] sm:$0xfe]
      %v1210 = vld [vmem:[#allocation2 + $0xa8] sm:$0xfe]
      %v1211 = vld [vmem:[#allocation2 + $0xb0] sm:$0x1]
      %v1212 = vld [vmem:[#allocation2 + $0xb8] sm:$0x1]
      %v1213 = vld [vmem:[#allocation2 + $0xc0] sm:$0xfe]
      %v1214 = vld [vmem:[#allocation2 + $0xc8] sm:$0xfe]
      %v1215 = vld [vmem:[#allocation2 + $0xd0] sm:$0x1]
      %v1216 = vld [vmem:[#allocation2 + $0xd8] sm:$0x1]
      %v1217 = vld [vmem:[#allocation2 + $0xe0] sm:$0xfe]
      %v1218 = vld [vmem:[#allocation2 + $0xe8] sm:$0xfe]
      %v1219 = vld [vmem:[#allocation2 + $0xf0] sm:$0x1]
      %v1220 = vld [vmem:[#allocation2 + $0xf8] sm:$0x1]
      %v1221 = vld [vmem:[#allocation2 + $0x100] sm:$0xfe]
      %v1222 = vld [vmem:[#allocation2 + $0x108] sm:$0xfe]
      %v1223 = vld [vmem:[#allocation2 + $0x110] sm:$0x1]
      %v1224 = vld [vmem:[#allocation2 + $0x118] sm:$0x1]
      %v1225 = vld [vmem:[#allocation2 + $0x120] sm:$0xfe]
      %v1226 = vld [vmem:[#allocation2 + $0x128] sm:$0xfe]
      %v1227 = vld [vmem:[#allocation2 + $0x130] sm:$0x1]
      %v1228 = vld [vmem:[#allocation2 + $0x138] sm:$0x1]
      %v1229 = vlaneseq
      %v1230 = vshrl.u32 %v1229, 7
      %v1231 = vsub.s32 1, %v1230
      %v1232 = vrot.slane %v1045, %v1231
      %v1233 = vlaneseq
      %v1234 = vshrl.u32 %v1233, 7
      %v1235 = vsub.s32 1, %v1234
      %v1236 = vrot.slane %v1046, %v1235
      %v1237 = vmul.f32 %v1189, %v1232
      %v1238 = vmul.f32 %v1190, %v1236
      %v1239 = vmul.f32 %v1191, %v1232
      %v1240 = vmul.f32 %v1192, %v1236
      %v1241 = vmul.f32 %v1193, %v1232
      %v1242 = vmul.f32 %v1194, %v1236
      %v1243 = vmul.f32 %v1195, %v1232
      %v1244 = vmul.f32 %v1196, %v1236
      %v1245 = vmul.f32 %v1197, %v1232
      %v1246 = vmul.f32 %v1198, %v1236
      %v1247 = vmul.f32 %v1199, %v1232
      %v1248 = vmul.f32 %v1200, %v1236
      %v1249 = vmul.f32 %v1201, %v1232
      %v1250 = vmul.f32 %v1202, %v1236
      %v1251 = vmul.f32 %v1203, %v1232
      %v1252 = vmul.f32 %v1204, %v1236
      %v1253 = vmul.f32 %v1205, %v1232
      %v1254 = vmul.f32 %v1206, %v1236
      %v1255 = vmul.f32 %v1207, %v1232
      %v1256 = vmul.f32 %v1208, %v1236
      %v1257 = vmul.f32 %v1209, %v1232
      %v1258 = vmul.f32 %v1210, %v1236
      %v1259 = vmul.f32 %v1211, %v1232
      %v1260 = vmul.f32 %v1212, %v1236
      %v1261 = vmul.f32 %v1213, %v1232
      %v1262 = vmul.f32 %v1214, %v1236
      %v1263 = vmul.f32 %v1215, %v1232
      %v1264 = vmul.f32 %v1216, %v1236
      %v1265 = vmul.f32 %v1217, %v1232
      %v1266 = vmul.f32 %v1218, %v1236
      %v1267 = vmul.f32 %v1219, %v1232
      %v1268 = vmul.f32 %v1220, %v1236
      %vm1301 = vcmask 1046528
      %v1302 = vrot.slane %v1237, 1
      %v1303 = vrot.slane %v1239, 1
      %v1304 = vsel %vm1301, %v1302, %v1303
      %v1305 = vrot.slane %v1238, 1
      %v1306 = vrot.slane %v1240, 1
      %v1307 = vsel %vm1301, %v1305, %v1306
      %v1308 = vrot.slane %v1241, 1
      %v1309 = vrot.slane %v1243, 1
      %v1310 = vsel %vm1301, %v1308, %v1309
      %v1311 = vrot.slane %v1242, 1
      %v1312 = vrot.slane %v1244, 1
      %v1313 = vsel %vm1301, %v1311, %v1312
      %v1314 = vrot.slane %v1245, 1
      %v1315 = vrot.slane %v1247, 1
      %v1316 = vsel %vm1301, %v1314, %v1315
      %v1317 = vrot.slane %v1246, 1
      %v1318 = vrot.slane %v1248, 1
      %v1319 = vsel %vm1301, %v1317, %v1318
      %v1320 = vrot.slane %v1249, 1
      %v1321 = vrot.slane %v1251, 1
      %v1322 = vsel %vm1301, %v1320, %v1321
      %v1323 = vrot.slane %v1250, 1
      %v1324 = vrot.slane %v1252, 1
      %v1325 = vsel %vm1301, %v1323, %v1324
      %v1326 = vrot.slane %v1253, 1
      %v1327 = vrot.slane %v1255, 1
      %v1328 = vsel %vm1301, %v1326, %v1327
      %v1329 = vrot.slane %v1254, 1
      %v1330 = vrot.slane %v1256, 1
      %v1331 = vsel %vm1301, %v1329, %v1330
      %v1332 = vrot.slane %v1257, 1
      %v1333 = vrot.slane %v1259, 1
      %v1334 = vsel %vm1301, %v1332, %v1333
      %v1335 = vrot.slane %v1258, 1
      %v1336 = vrot.slane %v1260, 1
      %v1337 = vsel %vm1301, %v1335, %v1336
      %v1338 = vrot.slane %v1261, 1
      %v1339 = vrot.slane %v1263, 1
      %v1340 = vsel %vm1301, %v1338, %v1339
      %v1341 = vrot.slane %v1262, 1
      %v1342 = vrot.slane %v1264, 1
      %v1343 = vsel %vm1301, %v1341, %v1342
      %v1344 = vrot.slane %v1265, 1
      %v1345 = vrot.slane %v1267, 1
      %v1346 = vsel %vm1301, %v1344, %v1345
      %v1347 = vrot.slane %v1266, 1
      %v1348 = vrot.slane %v1268, 1
      %v1349 = vsel %vm1301, %v1347, %v1348
      %v1366 = vadd.f32 %v1173, %v1304
      %v1367 = vadd.f32 %v1174, %v1307
      %v1368 = vadd.f32 %v1175, %v1310
      %v1369 = vadd.f32 %v1176, %v1313
      %v1370 = vadd.f32 %v1177, %v1316
      %v1371 = vadd.f32 %v1178, %v1319
      %v1372 = vadd.f32 %v1179, %v1322
      %v1373 = vadd.f32 %v1180, %v1325
      %v1374 = vadd.f32 %v1181, %v1328
      %v1375 = vadd.f32 %v1182, %v1331
      %v1376 = vadd.f32 %v1183, %v1334
      %v1377 = vadd.f32 %v1184, %v1337
      %v1378 = vadd.f32 %v1185, %v1340
      %v1379 = vadd.f32 %v1186, %v1343
      %v1380 = vadd.f32 %v1187, %v1346
      %v1381 = vadd.f32 %v1188, %v1349
      %v1382 = vlaneseq
      %v1383 = vshrl.u32 %v1382, 7
      %v1384 = vsub.s32 4, %v1383
      %v1385 = vrot.slane %v1045, %v1384
      %v1386 = vlaneseq
      %v1387 = vshrl.u32 %v1386, 7
      %v1388 = vsub.s32 4, %v1387
      %v1389 = vrot.slane %v1046, %v1388
      %v1390 = vmul.f32 %v1193, %v1385
      %v1391 = vmul.f32 %v1194, %v1389
      %v1392 = vmul.f32 %v1195, %v1385
      %v1393 = vmul.f32 %v1196, %v1389
      %v1394 = vmul.f32 %v1197, %v1385
      %v1395 = vmul.f32 %v1198, %v1389
      %v1396 = vmul.f32 %v1199, %v1385
      %v1397 = vmul.f32 %v1200, %v1389
      %v1398 = vmul.f32 %v1201, %v1385
      %v1399 = vmul.f32 %v1202, %v1389
      %v1400 = vmul.f32 %v1203, %v1385
      %v1401 = vmul.f32 %v1204, %v1389
      %v1402 = vmul.f32 %v1205, %v1385
      %v1403 = vmul.f32 %v1206, %v1389
      %v1404 = vmul.f32 %v1207, %v1385
      %v1405 = vmul.f32 %v1208, %v1389
      %v1406 = vmul.f32 %v1209, %v1385
      %v1407 = vmul.f32 %v1210, %v1389
      %v1408 = vmul.f32 %v1211, %v1385
      %v1409 = vmul.f32 %v1212, %v1389
      %v1410 = vmul.f32 %v1213, %v1385
      %v1411 = vmul.f32 %v1214, %v1389
      %v1412 = vmul.f32 %v1215, %v1385
      %v1413 = vmul.f32 %v1216, %v1389
      %v1414 = vmul.f32 %v1217, %v1385
      %v1415 = vmul.f32 %v1218, %v1389
      %v1416 = vmul.f32 %v1219, %v1385
      %v1417 = vmul.f32 %v1220, %v1389
      %v1418 = vmul.f32 %v1221, %v1385
      %v1419 = vmul.f32 %v1222, %v1389
      %v1420 = vmul.f32 %v1223, %v1385
      %v1421 = vmul.f32 %v1224, %v1389
      %v1454 = vrot.slane %v1390, 1
      %v1455 = vrot.slane %v1392, 1
      %v1456 = vsel %vm1301, %v1454, %v1455
      %v1457 = vrot.slane %v1391, 1
      %v1458 = vrot.slane %v1393, 1
      %v1459 = vsel %vm1301, %v1457, %v1458
      %v1460 = vrot.slane %v1394, 1
      %v1461 = vrot.slane %v1396, 1
      %v1462 = vsel %vm1301, %v1460, %v1461
      %v1463 = vrot.slane %v1395, 1
      %v1464 = vrot.slane %v1397, 1
      %v1465 = vsel %vm1301, %v1463, %v1464
      %v1466 = vrot.slane %v1398, 1
      %v1467 = vrot.slane %v1400, 1
      %v1468 = vsel %vm1301, %v1466, %v1467
      %v1469 = vrot.slane %v1399, 1
      %v1470 = vrot.slane %v1401, 1
      %v1471 = vsel %vm1301, %v1469, %v1470
      %v1472 = vrot.slane %v1402, 1
      %v1473 = vrot.slane %v1404, 1
      %v1474 = vsel %vm1301, %v1472, %v1473
      %v1475 = vrot.slane %v1403, 1
      %v1476 = vrot.slane %v1405, 1
      %v1477 = vsel %vm1301, %v1475, %v1476
      %v1478 = vrot.slane %v1406, 1
      %v1479 = vrot.slane %v1408, 1
      %v1480 = vsel %vm1301, %v1478, %v1479
      %v1481 = vrot.slane %v1407, 1
      %v1482 = vrot.slane %v1409, 1
      %v1483 = vsel %vm1301, %v1481, %v1482
      %v1484 = vrot.slane %v1410, 1
      %v1485 = vrot.slane %v1412, 1
      %v1486 = vsel %vm1301, %v1484, %v1485
      %v1487 = vrot.slane %v1411, 1
      %v1488 = vrot.slane %v1413, 1
      %v1489 = vsel %vm1301, %v1487, %v1488
      %v1490 = vrot.slane %v1414, 1
      %v1491 = vrot.slane %v1416, 1
      %v1492 = vsel %vm1301, %v1490, %v1491
      %v1493 = vrot.slane %v1415, 1
      %v1494 = vrot.slane %v1417, 1
      %v1495 = vsel %vm1301, %v1493, %v1494
      %v1496 = vrot.slane %v1418, 1
      %v1497 = vrot.slane %v1420, 1
      %v1498 = vsel %vm1301, %v1496, %v1497
      %v1499 = vrot.slane %v1419, 1
      %v1500 = vrot.slane %v1421, 1
      %v1501 = vsel %vm1301, %v1499, %v1500
      %v1518 = vadd.f32 %v1366, %v1456
      %v1519 = vadd.f32 %v1367, %v1459
      %v1520 = vadd.f32 %v1368, %v1462
      %v1521 = vadd.f32 %v1369, %v1465
      %v1522 = vadd.f32 %v1370, %v1468
      %v1523 = vadd.f32 %v1371, %v1471
      %v1524 = vadd.f32 %v1372, %v1474
      %v1525 = vadd.f32 %v1373, %v1477
      %v1526 = vadd.f32 %v1374, %v1480
      %v1527 = vadd.f32 %v1375, %v1483
      %v1528 = vadd.f32 %v1376, %v1486
      %v1529 = vadd.f32 %v1377, %v1489
      %v1530 = vadd.f32 %v1378, %v1492
      %v1531 = vadd.f32 %v1379, %v1495
      %v1532 = vadd.f32 %v1380, %v1498
      %v1533 = vadd.f32 %v1381, %v1501
      %v1534 = vlaneseq
      %v1535 = vshrl.u32 %v1534, 7
      %v1536 = vsub.s32 7, %v1535
      %v1537 = vrot.slane %v1045, %v1536
      %v1538 = vlaneseq
      %v1539 = vshrl.u32 %v1538, 7
      %v1540 = vsub.s32 7, %v1539
      %v1541 = vrot.slane %v1046, %v1540
      %v1542 = vmul.f32 %v1197, %v1537
      %v1543 = vmul.f32 %v1198, %v1541
      %v1544 = vmul.f32 %v1199, %v1537
      %v1545 = vmul.f32 %v1200, %v1541
      %v1546 = vmul.f32 %v1201, %v1537
      %v1547 = vmul.f32 %v1202, %v1541
      %v1548 = vmul.f32 %v1203, %v1537
      %v1549 = vmul.f32 %v1204, %v1541
      %v1550 = vmul.f32 %v1205, %v1537
      %v1551 = vmul.f32 %v1206, %v1541
      %v1552 = vmul.f32 %v1207, %v1537
      %v1553 = vmul.f32 %v1208, %v1541
      %v1554 = vmul.f32 %v1209, %v1537
      %v1555 = vmul.f32 %v1210, %v1541
      %v1556 = vmul.f32 %v1211, %v1537
      %v1557 = vmul.f32 %v1212, %v1541
      %v1558 = vmul.f32 %v1213, %v1537
      %v1559 = vmul.f32 %v1214, %v1541
      %v1560 = vmul.f32 %v1215, %v1537
      %v1561 = vmul.f32 %v1216, %v1541
      %v1562 = vmul.f32 %v1217, %v1537
      %v1563 = vmul.f32 %v1218, %v1541
      %v1564 = vmul.f32 %v1219, %v1537
      %v1565 = vmul.f32 %v1220, %v1541
      %v1566 = vmul.f32 %v1221, %v1537
      %v1567 = vmul.f32 %v1222, %v1541
      %v1568 = vmul.f32 %v1223, %v1537
      %v1569 = vmul.f32 %v1224, %v1541
      %v1570 = vmul.f32 %v1225, %v1537
      %v1571 = vmul.f32 %v1226, %v1541
      %v1572 = vmul.f32 %v1227, %v1537
      %v1573 = vmul.f32 %v1228, %v1541
      %v1606 = vrot.slane %v1542, 1
      %v1607 = vrot.slane %v1544, 1
      %v1608 = vsel %vm1301, %v1606, %v1607
      %v1609 = vrot.slane %v1543, 1
      %v1610 = vrot.slane %v1545, 1
      %v1611 = vsel %vm1301, %v1609, %v1610
      %v1612 = vrot.slane %v1546, 1
      %v1613 = vrot.slane %v1548, 1
      %v1614 = vsel %vm1301, %v1612, %v1613
      %v1615 = vrot.slane %v1547, 1
      %v1616 = vrot.slane %v1549, 1
      %v1617 = vsel %vm1301, %v1615, %v1616
      %v1618 = vrot.slane %v1550, 1
      %v1619 = vrot.slane %v1552, 1
      %v1620 = vsel %vm1301, %v1618, %v1619
      %v1621 = vrot.slane %v1551, 1
      %v1622 = vrot.slane %v1553, 1
      %v1623 = vsel %vm1301, %v1621, %v1622
      %v1624 = vrot.slane %v1554, 1
      %v1625 = vrot.slane %v1556, 1
      %v1626 = vsel %vm1301, %v1624, %v1625
      %v1627 = vrot.slane %v1555, 1
      %v1628 = vrot.slane %v1557, 1
      %v1629 = vsel %vm1301, %v1627, %v1628
      %v1630 = vrot.slane %v1558, 1
      %v1631 = vrot.slane %v1560, 1
      %v1632 = vsel %vm1301, %v1630, %v1631
      %v1633 = vrot.slane %v1559, 1
      %v1634 = vrot.slane %v1561, 1
      %v1635 = vsel %vm1301, %v1633, %v1634
      %v1636 = vrot.slane %v1562, 1
      %v1637 = vrot.slane %v1564, 1
      %v1638 = vsel %vm1301, %v1636, %v1637
      %v1639 = vrot.slane %v1563, 1
      %v1640 = vrot.slane %v1565, 1
      %v1641 = vsel %vm1301, %v1639, %v1640
      %v1642 = vrot.slane %v1566, 1
      %v1643 = vrot.slane %v1568, 1
      %v1644 = vsel %vm1301, %v1642, %v1643
      %v1645 = vrot.slane %v1567, 1
      %v1646 = vrot.slane %v1569, 1
      %v1647 = vsel %vm1301, %v1645, %v1646
      %v1648 = vrot.slane %v1570, 1
      %v1649 = vrot.slane %v1572, 1
      %v1650 = vsel %vm1301, %v1648, %v1649
      %v1651 = vrot.slane %v1571, 1
      %v1652 = vrot.slane %v1573, 1
      %v1653 = vsel %vm1301, %v1651, %v1652
      %v1670 = vadd.f32 %v1518, %v1608
      %v1671 = vadd.f32 %v1519, %v1611
      %v1672 = vadd.f32 %v1520, %v1614
      %v1673 = vadd.f32 %v1521, %v1617
      %v1674 = vadd.f32 %v1522, %v1620
      %v1675 = vadd.f32 %v1523, %v1623
      %v1676 = vadd.f32 %v1524, %v1626
      %v1677 = vadd.f32 %v1525, %v1629
      %v1678 = vadd.f32 %v1526, %v1632
      %v1679 = vadd.f32 %v1527, %v1635
      %v1680 = vadd.f32 %v1528, %v1638
      %v1681 = vadd.f32 %v1529, %v1641
      %v1682 = vadd.f32 %v1530, %v1644
      %v1683 = vadd.f32 %v1531, %v1647
      %v1684 = vadd.f32 %v1532, %v1650
      %v1685 = vadd.f32 %v1533, %v1653
      %v1686 = vld [vmem:[#allocation2] sm:$0xfc]
      %v1687 = vld [vmem:[#allocation2 + $0x8] sm:$0xfc]
      %v1688 = vld [vmem:[#allocation2 + $0x10] sm:$0x3]
      %v1689 = vld [vmem:[#allocation2 + $0x18] sm:$0x3]
      %v1690 = vld [vmem:[#allocation2 + $0x20] sm:$0xfc]
      %v1691 = vld [vmem:[#allocation2 + $0x28] sm:$0xfc]
      %v1692 = vld [vmem:[#allocation2 + $0x30] sm:$0x3]
      %v1693 = vld [vmem:[#allocation2 + $0x38] sm:$0x3]
      %v1694 = vld [vmem:[#allocation2 + $0x40] sm:$0xfc]
      %v1695 = vld [vmem:[#allocation2 + $0x48] sm:$0xfc]
      %v1696 = vld [vmem:[#allocation2 + $0x50] sm:$0x3]
      %v1697 = vld [vmem:[#allocation2 + $0x58] sm:$0x3]
      %v1698 = vld [vmem:[#allocation2 + $0x60] sm:$0xfc]
      %v1699 = vld [vmem:[#allocation2 + $0x68] sm:$0xfc]
      %v1700 = vld [vmem:[#allocation2 + $0x70] sm:$0x3]
      %v1701 = vld [vmem:[#allocation2 + $0x78] sm:$0x3]
      %v1702 = vld [vmem:[#allocation2 + $0x80] sm:$0xfc]
      %v1703 = vld [vmem:[#allocation2 + $0x88] sm:$0xfc]
      %v1704 = vld [vmem:[#allocation2 + $0x90] sm:$0x3]
      %v1705 = vld [vmem:[#allocation2 + $0x98] sm:$0x3]
      %v1706 = vld [vmem:[#allocation2 + $0xa0] sm:$0xfc]
      %v1707 = vld [vmem:[#allocation2 + $0xa8] sm:$0xfc]
      %v1708 = vld [vmem:[#allocation2 + $0xb0] sm:$0x3]
      %v1709 = vld [vmem:[#allocation2 + $0xb8] sm:$0x3]
      %v1710 = vld [vmem:[#allocation2 + $0xc0] sm:$0xfc]
      %v1711 = vld [vmem:[#allocation2 + $0xc8] sm:$0xfc]
      %v1712 = vld [vmem:[#allocation2 + $0xd0] sm:$0x3]
      %v1713 = vld [vmem:[#allocation2 + $0xd8] sm:$0x3]
      %v1714 = vld [vmem:[#allocation2 + $0xe0] sm:$0xfc]
      %v1715 = vld [vmem:[#allocation2 + $0xe8] sm:$0xfc]
      %v1716 = vld [vmem:[#allocation2 + $0xf0] sm:$0x3]
      %v1717 = vld [vmem:[#allocation2 + $0xf8] sm:$0x3]
      %v1718 = vld [vmem:[#allocation2 + $0x100] sm:$0xfc]
      %v1719 = vld [vmem:[#allocation2 + $0x108] sm:$0xfc]
      %v1720 = vld [vmem:[#allocation2 + $0x110] sm:$0x3]
      %v1721 = vld [vmem:[#allocation2 + $0x118] sm:$0x3]
      %v1722 = vld [vmem:[#allocation2 + $0x120] sm:$0xfc]
      %v1723 = vld [vmem:[#allocation2 + $0x128] sm:$0xfc]
      %v1724 = vld [vmem:[#allocation2 + $0x130] sm:$0x3]
      %v1725 = vld [vmem:[#allocation2 + $0x138] sm:$0x3]
      %v1726 = vlaneseq
      %v1727 = vshrl.u32 %v1726, 7
      %v1728 = vsub.s32 2, %v1727
      %v1729 = vrot.slane %v1045, %v1728
      %v1730 = vlaneseq
      %v1731 = vshrl.u32 %v1730, 7
      %v1732 = vsub.s32 2, %v1731
      %v1733 = vrot.slane %v1046, %v1732
      %v1734 = vmul.f32 %v1686, %v1729
      %v1735 = vmul.f32 %v1687, %v1733
      %v1736 = vmul.f32 %v1688, %v1729
      %v1737 = vmul.f32 %v1689, %v1733
      %v1738 = vmul.f32 %v1690, %v1729
      %v1739 = vmul.f32 %v1691, %v1733
      %v1740 = vmul.f32 %v1692, %v1729
      %v1741 = vmul.f32 %v1693, %v1733
      %v1742 = vmul.f32 %v1694, %v1729
      %v1743 = vmul.f32 %v1695, %v1733
      %v1744 = vmul.f32 %v1696, %v1729
      %v1745 = vmul.f32 %v1697, %v1733
      %v1746 = vmul.f32 %v1698, %v1729
      %v1747 = vmul.f32 %v1699, %v1733
      %v1748 = vmul.f32 %v1700, %v1729
      %v1749 = vmul.f32 %v1701, %v1733
      %v1750 = vmul.f32 %v1702, %v1729
      %v1751 = vmul.f32 %v1703, %v1733
      %v1752 = vmul.f32 %v1704, %v1729
      %v1753 = vmul.f32 %v1705, %v1733
      %v1754 = vmul.f32 %v1706, %v1729
      %v1755 = vmul.f32 %v1707, %v1733
      %v1756 = vmul.f32 %v1708, %v1729
      %v1757 = vmul.f32 %v1709, %v1733
      %v1758 = vmul.f32 %v1710, %v1729
      %v1759 = vmul.f32 %v1711, %v1733
      %v1760 = vmul.f32 %v1712, %v1729
      %v1761 = vmul.f32 %v1713, %v1733
      %v1762 = vmul.f32 %v1714, %v1729
      %v1763 = vmul.f32 %v1715, %v1733
      %v1764 = vmul.f32 %v1716, %v1729
      %v1765 = vmul.f32 %v1717, %v1733
      %vm1798 = vcmask 1045504
      %v1799 = vrot.slane %v1734, 2
      %v1800 = vrot.slane %v1736, 2
      %v1801 = vsel %vm1798, %v1799, %v1800
      %v1802 = vrot.slane %v1735, 2
      %v1803 = vrot.slane %v1737, 2
      %v1804 = vsel %vm1798, %v1802, %v1803
      %v1805 = vrot.slane %v1738, 2
      %v1806 = vrot.slane %v1740, 2
      %v1807 = vsel %vm1798, %v1805, %v1806
      %v1808 = vrot.slane %v1739, 2
      %v1809 = vrot.slane %v1741, 2
      %v1810 = vsel %vm1798, %v1808, %v1809
      %v1811 = vrot.slane %v1742, 2
      %v1812 = vrot.slane %v1744, 2
      %v1813 = vsel %vm1798, %v1811, %v1812
      %v1814 = vrot.slane %v1743, 2
      %v1815 = vrot.slane %v1745, 2
      %v1816 = vsel %vm1798, %v1814, %v1815
      %v1817 = vrot.slane %v1746, 2
      %v1818 = vrot.slane %v1748, 2
      %v1819 = vsel %vm1798, %v1817, %v1818
      %v1820 = vrot.slane %v1747, 2
      %v1821 = vrot.slane %v1749, 2
      %v1822 = vsel %vm1798, %v1820, %v1821
      %v1823 = vrot.slane %v1750, 2
      %v1824 = vrot.slane %v1752, 2
      %v1825 = vsel %vm1798, %v1823, %v1824
      %v1826 = vrot.slane %v1751, 2
      %v1827 = vrot.slane %v1753, 2
      %v1828 = vsel %vm1798, %v1826, %v1827
      %v1829 = vrot.slane %v1754, 2
      %v1830 = vrot.slane %v1756, 2
      %v1831 = vsel %vm1798, %v1829, %v1830
      %v1832 = vrot.slane %v1755, 2
      %v1833 = vrot.slane %v1757, 2
      %v1834 = vsel %vm1798, %v1832, %v1833
      %v1835 = vrot.slane %v1758, 2
      %v1836 = vrot.slane %v1760, 2
      %v1837 = vsel %vm1798, %v1835, %v1836
      %v1838 = vrot.slane %v1759, 2
      %v1839 = vrot.slane %v1761, 2
      %v1840 = vsel %vm1798, %v1838, %v1839
      %v1841 = vrot.slane %v1762, 2
      %v1842 = vrot.slane %v1764, 2
      %v1843 = vsel %vm1798, %v1841, %v1842
      %v1844 = vrot.slane %v1763, 2
      %v1845 = vrot.slane %v1765, 2
      %v1846 = vsel %vm1798, %v1844, %v1845
      %v1863 = vadd.f32 %v1670, %v1801
      %v1864 = vadd.f32 %v1671, %v1804
      %v1865 = vadd.f32 %v1672, %v1807
      %v1866 = vadd.f32 %v1673, %v1810
      %v1867 = vadd.f32 %v1674, %v1813
      %v1868 = vadd.f32 %v1675, %v1816
      %v1869 = vadd.f32 %v1676, %v1819
      %v1870 = vadd.f32 %v1677, %v1822
      %v1871 = vadd.f32 %v1678, %v1825
      %v1872 = vadd.f32 %v1679, %v1828
      %v1873 = vadd.f32 %v1680, %v1831
      %v1874 = vadd.f32 %v1681, %v1834
      %v1875 = vadd.f32 %v1682, %v1837
      %v1876 = vadd.f32 %v1683, %v1840
      %v1877 = vadd.f32 %v1684, %v1843
      %v1878 = vadd.f32 %v1685, %v1846
      %v1879 = vlaneseq
      %v1880 = vshrl.u32 %v1879, 7
      %v1881 = vsub.s32 5, %v1880
      %v1882 = vrot.slane %v1045, %v1881
      %v1883 = vlaneseq
      %v1884 = vshrl.u32 %v1883, 7
      %v1885 = vsub.s32 5, %v1884
      %v1886 = vrot.slane %v1046, %v1885
      %v1887 = vmul.f32 %v1690, %v1882
      %v1888 = vmul.f32 %v1691, %v1886
      %v1889 = vmul.f32 %v1692, %v1882
      %v1890 = vmul.f32 %v1693, %v1886
      %v1891 = vmul.f32 %v1694, %v1882
      %v1892 = vmul.f32 %v1695, %v1886
      %v1893 = vmul.f32 %v1696, %v1882
      %v1894 = vmul.f32 %v1697, %v1886
      %v1895 = vmul.f32 %v1698, %v1882
      %v1896 = vmul.f32 %v1699, %v1886
      %v1897 = vmul.f32 %v1700, %v1882
      %v1898 = vmul.f32 %v1701, %v1886
      %v1899 = vmul.f32 %v1702, %v1882
      %v1900 = vmul.f32 %v1703, %v1886
      %v1901 = vmul.f32 %v1704, %v1882
      %v1902 = vmul.f32 %v1705, %v1886
      %v1903 = vmul.f32 %v1706, %v1882
      %v1904 = vmul.f32 %v1707, %v1886
      %v1905 = vmul.f32 %v1708, %v1882
      %v1906 = vmul.f32 %v1709, %v1886
      %v1907 = vmul.f32 %v1710, %v1882
      %v1908 = vmul.f32 %v1711, %v1886
      %v1909 = vmul.f32 %v1712, %v1882
      %v1910 = vmul.f32 %v1713, %v1886
      %v1911 = vmul.f32 %v1714, %v1882
      %v1912 = vmul.f32 %v1715, %v1886
      %v1913 = vmul.f32 %v1716, %v1882
      %v1914 = vmul.f32 %v1717, %v1886
      %v1915 = vmul.f32 %v1718, %v1882
      %v1916 = vmul.f32 %v1719, %v1886
      %v1917 = vmul.f32 %v1720, %v1882
      %v1918 = vmul.f32 %v1721, %v1886
      %v1951 = vrot.slane %v1887, 2
      %v1952 = vrot.slane %v1889, 2
      %v1953 = vsel %vm1798, %v1951, %v1952
      %v1954 = vrot.slane %v1888, 2
      %v1955 = vrot.slane %v1890, 2
      %v1956 = vsel %vm1798, %v1954, %v1955
      %v1957 = vrot.slane %v1891, 2
      %v1958 = vrot.slane %v1893, 2
      %v1959 = vsel %vm1798, %v1957, %v1958
      %v1960 = vrot.slane %v1892, 2
      %v1961 = vrot.slane %v1894, 2
      %v1962 = vsel %vm1798, %v1960, %v1961
      %v1963 = vrot.slane %v1895, 2
      %v1964 = vrot.slane %v1897, 2
      %v1965 = vsel %vm1798, %v1963, %v1964
      %v1966 = vrot.slane %v1896, 2
      %v1967 = vrot.slane %v1898, 2
      %v1968 = vsel %vm1798, %v1966, %v1967
      %v1969 = vrot.slane %v1899, 2
      %v1970 = vrot.slane %v1901, 2
      %v1971 = vsel %vm1798, %v1969, %v1970
      %v1972 = vrot.slane %v1900, 2
      %v1973 = vrot.slane %v1902, 2
      %v1974 = vsel %vm1798, %v1972, %v1973
      %v1975 = vrot.slane %v1903, 2
      %v1976 = vrot.slane %v1905, 2
      %v1977 = vsel %vm1798, %v1975, %v1976
      %v1978 = vrot.slane %v1904, 2
      %v1979 = vrot.slane %v1906, 2
      %v1980 = vsel %vm1798, %v1978, %v1979
      %v1981 = vrot.slane %v1907, 2
      %v1982 = vrot.slane %v1909, 2
      %v1983 = vsel %vm1798, %v1981, %v1982
      %v1984 = vrot.slane %v1908, 2
      %v1985 = vrot.slane %v1910, 2
      %v1986 = vsel %vm1798, %v1984, %v1985
      %v1987 = vrot.slane %v1911, 2
      %v1988 = vrot.slane %v1913, 2
      %v1989 = vsel %vm1798, %v1987, %v1988
      %v1990 = vrot.slane %v1912, 2
      %v1991 = vrot.slane %v1914, 2
      %v1992 = vsel %vm1798, %v1990, %v1991
      %v1993 = vrot.slane %v1915, 2
      %v1994 = vrot.slane %v1917, 2
      %v1995 = vsel %vm1798, %v1993, %v1994
      %v1996 = vrot.slane %v1916, 2
      %v1997 = vrot.slane %v1918, 2
      %v1998 = vsel %vm1798, %v1996, %v1997
      %v2015 = vadd.f32 %v1863, %v1953
      %v2016 = vadd.f32 %v1864, %v1956
      %v2017 = vadd.f32 %v1865, %v1959
      %v2018 = vadd.f32 %v1866, %v1962
      %v2019 = vadd.f32 %v1867, %v1965
      %v2020 = vadd.f32 %v1868, %v1968
      %v2021 = vadd.f32 %v1869, %v1971
      %v2022 = vadd.f32 %v1870, %v1974
      %v2023 = vadd.f32 %v1871, %v1977
      %v2024 = vadd.f32 %v1872, %v1980
      %v2025 = vadd.f32 %v1873, %v1983
      %v2026 = vadd.f32 %v1874, %v1986
      %v2027 = vadd.f32 %v1875, %v1989
      %v2028 = vadd.f32 %v1876, %v1992
      %v2029 = vadd.f32 %v1877, %v1995
      %v2030 = vadd.f32 %v1878, %v1998
      %v2031 = vlaneseq
      %v2032 = vshrl.u32 %v2031, 7
      %v2033 = vsub.s32 0, %v2032
      %v2034 = vrot.slane %v1047, %v2033
      %v2035 = vlaneseq
      %v2036 = vshrl.u32 %v2035, 7
      %v2037 = vsub.s32 0, %v2036
      %v2038 = vrot.slane %v1048, %v2037
      %v2039 = vmul.f32 %v1694, %v2034
      %v2040 = vmul.f32 %v1695, %v2038
      %v2041 = vmul.f32 %v1696, %v2034
      %v2042 = vmul.f32 %v1697, %v2038
      %v2043 = vmul.f32 %v1698, %v2034
      %v2044 = vmul.f32 %v1699, %v2038
      %v2045 = vmul.f32 %v1700, %v2034
      %v2046 = vmul.f32 %v1701, %v2038
      %v2047 = vmul.f32 %v1702, %v2034
      %v2048 = vmul.f32 %v1703, %v2038
      %v2049 = vmul.f32 %v1704, %v2034
      %v2050 = vmul.f32 %v1705, %v2038
      %v2051 = vmul.f32 %v1706, %v2034
      %v2052 = vmul.f32 %v1707, %v2038
      %v2053 = vmul.f32 %v1708, %v2034
      %v2054 = vmul.f32 %v1709, %v2038
      %v2055 = vmul.f32 %v1710, %v2034
      %v2056 = vmul.f32 %v1711, %v2038
      %v2057 = vmul.f32 %v1712, %v2034
      %v2058 = vmul.f32 %v1713, %v2038
      %v2059 = vmul.f32 %v1714, %v2034
      %v2060 = vmul.f32 %v1715, %v2038
      %v2061 = vmul.f32 %v1716, %v2034
      %v2062 = vmul.f32 %v1717, %v2038
      %v2063 = vmul.f32 %v1718, %v2034
      %v2064 = vmul.f32 %v1719, %v2038
      %v2065 = vmul.f32 %v1720, %v2034
      %v2066 = vmul.f32 %v1721, %v2038
      %v2067 = vmul.f32 %v1722, %v2034
      %v2068 = vmul.f32 %v1723, %v2038
      %v2069 = vmul.f32 %v1724, %v2034
      %v2070 = vmul.f32 %v1725, %v2038
      %v2103 = vrot.slane %v2039, 2
      %v2104 = vrot.slane %v2041, 2
      %v2105 = vsel %vm1798, %v2103, %v2104
      %v2106 = vrot.slane %v2040, 2
      %v2107 = vrot.slane %v2042, 2
      %v2108 = vsel %vm1798, %v2106, %v2107
      %v2109 = vrot.slane %v2043, 2
      %v2110 = vrot.slane %v2045, 2
      %v2111 = vsel %vm1798, %v2109, %v2110
      %v2112 = vrot.slane %v2044, 2
      %v2113 = vrot.slane %v2046, 2
      %v2114 = vsel %vm1798, %v2112, %v2113
      %v2115 = vrot.slane %v2047, 2
      %v2116 = vrot.slane %v2049, 2
      %v2117 = vsel %vm1798, %v2115, %v2116
      %v2118 = vrot.slane %v2048, 2
      %v2119 = vrot.slane %v2050, 2
      %v2120 = vsel %vm1798, %v2118, %v2119
      %v2121 = vrot.slane %v2051, 2
      %v2122 = vrot.slane %v2053, 2
      %v2123 = vsel %vm1798, %v2121, %v2122
      %v2124 = vrot.slane %v2052, 2
      %v2125 = vrot.slane %v2054, 2
      %v2126 = vsel %vm1798, %v2124, %v2125
      %v2127 = vrot.slane %v2055, 2
      %v2128 = vrot.slane %v2057, 2
      %v2129 = vsel %vm1798, %v2127, %v2128
      %v2130 = vrot.slane %v2056, 2
      %v2131 = vrot.slane %v2058, 2
      %v2132 = vsel %vm1798, %v2130, %v2131
      %v2133 = vrot.slane %v2059, 2
      %v2134 = vrot.slane %v2061, 2
      %v2135 = vsel %vm1798, %v2133, %v2134
      %v2136 = vrot.slane %v2060, 2
      %v2137 = vrot.slane %v2062, 2
      %v2138 = vsel %vm1798, %v2136, %v2137
      %v2139 = vrot.slane %v2063, 2
      %v2140 = vrot.slane %v2065, 2
      %v2141 = vsel %vm1798, %v2139, %v2140
      %v2142 = vrot.slane %v2064, 2
      %v2143 = vrot.slane %v2066, 2
      %v2144 = vsel %vm1798, %v2142, %v2143
      %v2145 = vrot.slane %v2067, 2
      %v2146 = vrot.slane %v2069, 2
      %v2147 = vsel %vm1798, %v2145, %v2146
      %v2148 = vrot.slane %v2068, 2
      %v2149 = vrot.slane %v2070, 2
      %v2150 = vsel %vm1798, %v2148, %v2149
      %v2167 = vadd.f32 %v2015, %v2105
      %v2168 = vadd.f32 %v2016, %v2108
      %v2169 = vadd.f32 %v2017, %v2111
      %v2170 = vadd.f32 %v2018, %v2114
      %v2171 = vadd.f32 %v2019, %v2117
      %v2172 = vadd.f32 %v2020, %v2120
      %v2173 = vadd.f32 %v2021, %v2123
      %v2174 = vadd.f32 %v2022, %v2126
      %v2175 = vadd.f32 %v2023, %v2129
      %v2176 = vadd.f32 %v2024, %v2132
      %v2177 = vadd.f32 %v2025, %v2135
      %v2178 = vadd.f32 %v2026, %v2138
      %v2179 = vadd.f32 %v2027, %v2141
      %v2180 = vadd.f32 %v2028, %v2144
      %v2181 = vadd.f32 %v2029, %v2147
      %v2182 = vadd.f32 %v2030, %v2150
      %v2183 = vld [vmem:[%s6] sm:$0x3]
      %v2185 = vlaneseq
      %v2186 = vshrl.u32 %v2185, 7
      %v2187 = vsub.s32 0, %v2186
      %v2188 = vrot.slane %v2183, %v2187
      %v2189 = vlaneseq
      %v2190 = vshrl.u32 %v2189, 7
      %v2191 = vsub.s32 1, %v2190
      %v2192 = vrot.slane %v2183, %v2191
      %v2195 = vadd.f32 %v2167, %v2188
      %v2196 = vadd.f32 %v2168, %v2192
      %v2197 = vadd.f32 %v2169, %v2188
      %v2198 = vadd.f32 %v2170, %v2192
      %v2199 = vadd.f32 %v2171, %v2188
      %v2200 = vadd.f32 %v2172, %v2192
      %v2201 = vadd.f32 %v2173, %v2188
      %v2202 = vadd.f32 %v2174, %v2192
      %v2203 = vadd.f32 %v2175, %v2188
      %v2204 = vadd.f32 %v2176, %v2192
      %v2205 = vadd.f32 %v2177, %v2188
      %v2206 = vadd.f32 %v2178, %v2192
      %v2207 = vadd.f32 %v2179, %v2188
      %v2208 = vadd.f32 %v2180, %v2192
      %v2209 = vadd.f32 %v2181, %v2188
      %v2210 = vadd.f32 %v2182, %v2192
      %v2211 = vmul.f32 %v2195, 0.5
      %v2212 = vmul.f32 %v2196, 0.5
      %v2213 = vmul.f32 %v2197, 0.5
      %v2214 = vmul.f32 %v2198, 0.5
      %v2215 = vmul.f32 %v2199, 0.5
      %v2216 = vmul.f32 %v2200, 0.5
      %v2217 = vmul.f32 %v2201, 0.5
      %v2218 = vmul.f32 %v2202, 0.5
      %v2219 = vmul.f32 %v2203, 0.5
      %v2220 = vmul.f32 %v2204, 0.5
      %v2221 = vmul.f32 %v2205, 0.5
      %v2222 = vmul.f32 %v2206, 0.5
      %v2223 = vmul.f32 %v2207, 0.5
      %v2224 = vmul.f32 %v2208, 0.5
      %v2225 = vmul.f32 %v2209, 0.5
      %v2226 = vmul.f32 %v2210, 0.5
      %v2227 = vmul.f32 %v2195, 0.70710677
      %v2228 = vmul.f32 %v2196, 0.70710677
      %v2229 = vmul.f32 %v2197, 0.70710677
      %v2230 = vmul.f32 %v2198, 0.70710677
      %v2231 = vmul.f32 %v2199, 0.70710677
      %v2232 = vmul.f32 %v2200, 0.70710677
      %v2233 = vmul.f32 %v2201, 0.70710677
      %v2234 = vmul.f32 %v2202, 0.70710677
      %v2235 = vmul.f32 %v2203, 0.70710677
      %v2236 = vmul.f32 %v2204, 0.70710677
      %v2237 = vmul.f32 %v2205, 0.70710677
      %v2238 = vmul.f32 %v2206, 0.70710677
      %v2239 = vmul.f32 %v2207, 0.70710677
      %v2240 = vmul.f32 %v2208, 0.70710677
      %v2241 = vmul.f32 %v2209, 0.70710677
      %v2242 = vmul.f32 %v2210, 0.70710677
      %v2243 = verf.f32.pop %v2227
      %v2244 = verf.f32.pop %v2228
      %v2245 = verf.f32.pop %v2229
      %v2246 = verf.f32.pop %v2230
      %v2247 = verf.f32.pop %v2231
      %v2248 = verf.f32.pop %v2232
      %v2249 = verf.f32.pop %v2233
      %v2250 = verf.f32.pop %v2234
      %v2251 = verf.f32.pop %v2235
      %v2252 = verf.f32.pop %v2236
      %v2253 = verf.f32.pop %v2237
      %v2254 = verf.f32.pop %v2238
      %v2255 = verf.f32.pop %v2239
      %v2256 = verf.f32.pop %v2240
      %v2257 = verf.f32.pop %v2241
      %v2258 = verf.f32.pop %v2242
      %v2259 = vadd.f32 %v2243, 1.0
      %v2260 = vadd.f32 %v2244, 1.0
      %v2261 = vadd.f32 %v2245, 1.0
      %v2262 = vadd.f32 %v2246, 1.0
      %v2263 = vadd.f32 %v2247, 1.0
      %v2264 = vadd.f32 %v2248, 1.0
      %v2265 = vadd.f32 %v2249, 1.0
      %v2266 = vadd.f32 %v2250, 1.0
      %v2267 = vadd.f32 %v2251, 1.0
      %v2268 = vadd.f32 %v2252, 1.0
      %v2269 = vadd.f32 %v2253, 1.0
      %v2270 = vadd.f32 %v2254, 1.0
      %v2271 = vadd.f32 %v2255, 1.0
      %v2272 = vadd.f32 %v2256, 1.0
      %v2273 = vadd.f32 %v2257, 1.0
      %v2274 = vadd.f32 %v2258, 1.0
      %v2275 = vmul.f32 %v2211, %v2259
      %v2276 = vmul.f32 %v2212, %v2260
      %v2277 = vmul.f32 %v2213, %v2261
      %v2278 = vmul.f32 %v2214, %v2262
      %v2279 = vmul.f32 %v2215, %v2263
      %v2280 = vmul.f32 %v2216, %v2264
      %v2281 = vmul.f32 %v2217, %v2265
      %v2282 = vmul.f32 %v2218, %v2266
      %v2283 = vmul.f32 %v2219, %v2267
      %v2284 = vmul.f32 %v2220, %v2268
      %v2285 = vmul.f32 %v2221, %v2269
      %v2286 = vmul.f32 %v2222, %v2270
      %v2287 = vmul.f32 %v2223, %v2271
      %v2288 = vmul.f32 %v2224, %v2272
      %v2289 = vmul.f32 %v2225, %v2273
      %v2290 = vmul.f32 %v2226, %v2274
      %v2291 = vpack.c.bf16 %v2277, %v2275
      %v2292 = vpack.c.bf16 %v2278, %v2276
      %v2293 = vpack.c.bf16 %v2281, %v2279
      %v2294 = vpack.c.bf16 %v2282, %v2280
      %v2295 = vpack.c.bf16 %v2285, %v2283
      %v2296 = vpack.c.bf16 %v2286, %v2284
      %v2297 = vpack.c.bf16 %v2289, %v2287
      %v2298 = vpack.c.bf16 %v2290, %v2288
      %v2299 = vld [vmem:[%s7] sm:$0xf]
      %v2300 = vld [vmem:[%s7 + $0x4] sm:$0xf]
      %v2301 = vld [vmem:[%s7 + $0x8] sm:$0xf]
      %v2302 = vld [vmem:[%s7 + $0xc] sm:$0xf]
      %v2303 = vld [vmem:[%s7 + $0x10] sm:$0xf]
      %v2304 = vld [vmem:[%s7 + $0x14] sm:$0xf]
      %v2305 = vld [vmem:[%s7 + $0x18] sm:$0xf]
      %v2306 = vld [vmem:[%s7 + $0x1c] sm:$0xf]
      %v2307 = vld [vmem:[%s7 + $0x20] sm:$0xf]
      %v2308 = vld [vmem:[%s7 + $0x24] sm:$0xf]
      %v2309 = vld [vmem:[%s7 + $0x28] sm:$0xf]
      %v2310 = vld [vmem:[%s7 + $0x2c] sm:$0xf]
      %v2311 = vld [vmem:[%s7 + $0x30] sm:$0xf]
      %v2312 = vld [vmem:[%s7 + $0x34] sm:$0xf]
      %v2313 = vld [vmem:[%s7 + $0x38] sm:$0xf]
      %v2314 = vld [vmem:[%s7 + $0x3c] sm:$0xf]
      %v2315 = vld [vmem:[%s7 + $0x40] sm:$0xf]
      %v2316 = vld [vmem:[%s7 + $0x44] sm:$0xf]
      %v2317 = vld [vmem:[%s7 + $0x48] sm:$0xf]
      %v2318 = vld [vmem:[%s7 + $0x4c] sm:$0xf]
      %v2319 = vld [vmem:[%s7 + $0x50] sm:$0xf]
      %v2320 = vld [vmem:[%s7 + $0x54] sm:$0xf]
      %v2321 = vld [vmem:[%s7 + $0x58] sm:$0xf]
      %v2322 = vld [vmem:[%s7 + $0x5c] sm:$0xf]
      %v2323 = vld [vmem:[%s7 + $0x60] sm:$0xf]
      %v2324 = vld [vmem:[%s7 + $0x64] sm:$0xf]
      %v2325 = vld [vmem:[%s7 + $0x68] sm:$0xf]
      %v2326 = vld [vmem:[%s7 + $0x6c] sm:$0xf]
      %v2327 = vld [vmem:[%s7 + $0x70] sm:$0xf]
      %v2328 = vld [vmem:[%s7 + $0x74] sm:$0xf]
      %v2329 = vld [vmem:[%s7 + $0x78] sm:$0xf]
      %v2330 = vld [vmem:[%s7 + $0x7c] sm:$0xf]
      %v2331 = vld [vmem:[%s8] sm:$0x1]
      %v2333 = vlaneseq
      %v2334 = vshrl.u32 %v2333, 7
      %v2335 = vsub.s32 0, %v2334
      %v2336 = vrot.slane %v2331, %v2335
      %v2370 = vunpack.c.l.b16 %v2299
      %v2371 = vunpack.c.l.b16 %v2300
      %v2372 = vunpack.c.l.b16 %v2301
      %v2373 = vunpack.c.l.b16 %v2302
      %v2374 = vunpack.c.l.b16 %v2303
      %v2375 = vunpack.c.l.b16 %v2304
      %v2376 = vunpack.c.l.b16 %v2305
      %v2377 = vunpack.c.l.b16 %v2306
      %v2378 = vunpack.c.l.b16 %v2307
      %v2379 = vunpack.c.l.b16 %v2308
      %v2380 = vunpack.c.l.b16 %v2309
      %v2381 = vunpack.c.l.b16 %v2310
      %v2382 = vunpack.c.l.b16 %v2311
      %v2383 = vunpack.c.l.b16 %v2312
      %v2384 = vunpack.c.l.b16 %v2313
      %v2385 = vunpack.c.l.b16 %v2314
      %v2386 = vunpack.c.l.b16 %v2315
      %v2387 = vunpack.c.l.b16 %v2316
      %v2388 = vunpack.c.l.b16 %v2317
      %v2389 = vunpack.c.l.b16 %v2318
      %v2390 = vunpack.c.l.b16 %v2319
      %v2391 = vunpack.c.l.b16 %v2320
      %v2392 = vunpack.c.l.b16 %v2321
      %v2393 = vunpack.c.l.b16 %v2322
      %v2394 = vunpack.c.l.b16 %v2323
      %v2395 = vunpack.c.l.b16 %v2324
      %v2396 = vunpack.c.l.b16 %v2325
      %v2397 = vunpack.c.l.b16 %v2326
      %v2398 = vunpack.c.l.b16 %v2327
      %v2399 = vunpack.c.l.b16 %v2328
      %v2400 = vunpack.c.l.b16 %v2329
      %v2401 = vunpack.c.l.b16 %v2330
      %v2402 = vpack.c.b16 %v2371, %v2370
      %v2403 = vpack.c.b16 %v2373, %v2372
      %v2404 = vpack.c.b16 %v2375, %v2374
      %v2405 = vpack.c.b16 %v2377, %v2376
      %v2406 = vpack.c.b16 %v2379, %v2378
      %v2407 = vpack.c.b16 %v2381, %v2380
      %v2408 = vpack.c.b16 %v2383, %v2382
      %v2409 = vpack.c.b16 %v2385, %v2384
      %v2410 = vpack.c.b16 %v2387, %v2386
      %v2411 = vpack.c.b16 %v2389, %v2388
      %v2412 = vpack.c.b16 %v2391, %v2390
      %v2413 = vpack.c.b16 %v2393, %v2392
      %v2414 = vpack.c.b16 %v2395, %v2394
      %v2415 = vpack.c.b16 %v2397, %v2396
      %v2416 = vpack.c.b16 %v2399, %v2398
      %v2417 = vpack.c.b16 %v2401, %v2400
      %2434 = vmatprep.subr.bf16.mxu0 0
      %2435 = vmatpush1.bf16.msra.mxu0 %v2402
      %2436 = vmatprep.subr.bf16.mxu0 0
      %2437 = vmatpush1.bf16.msra.mxu0 %v2403
      %2438 = vmatprep.subr.bf16.mxu0 0
      %2439 = vmatpush1.bf16.msra.mxu0 %v2404
      %2440 = vmatprep.subr.bf16.mxu0 0
      %2441 = vmatpush1.bf16.msra.mxu0 %v2405
      %2442 = vmatprep.subr.bf16.mxu0 0
      %2443 = vmatpush1.bf16.msra.mxu0 %v2406
      %2444 = vmatprep.subr.bf16.mxu0 0
      %2445 = vmatpush1.bf16.msra.mxu0 %v2407
      %2446 = vmatprep.subr.bf16.mxu0 0
      %2447 = vmatpush1.bf16.msra.mxu0 %v2408
      %2448 = vmatprep.subr.bf16.mxu0 0
      %2449 = vmatpush1.bf16.msra.mxu0 %v2409
      %2450 = vmatprep.subr.bf16.mxu0 0
      %2451 = vmatpush1.bf16.msra.mxu0 %v2410
      %2452 = vmatprep.subr.bf16.mxu0 0
      %2453 = vmatpush1.bf16.msra.mxu0 %v2411
      %2454 = vmatprep.subr.bf16.mxu0 0
      %2455 = vmatpush1.bf16.msra.mxu0 %v2412
      %2456 = vmatprep.subr.bf16.mxu0 0
      %2457 = vmatpush1.bf16.msra.mxu0 %v2413
      %2458 = vmatprep.subr.bf16.mxu0 0
      %2459 = vmatpush1.bf16.msra.mxu0 %v2414
      %2460 = vmatprep.subr.bf16.mxu0 0
      %2461 = vmatpush1.bf16.msra.mxu0 %v2415
      %2462 = vmatprep.subr.bf16.mxu0 0
      %2463 = vmatpush1.bf16.msra.mxu0 %v2416
      %2464 = vmatprep.subr.bf16.mxu0 0
      %2465 = vmatpush1.bf16.msra.mxu0 %v2417
      %2466 = vmatprep.mubr.bf16.mxu0 %v2292
      %2467 = vmatmul.mubr.bf16.gmra.mrb[0].mxu0 %v2291
      %v2468 = vpop.f32.mrb[0].mxu0
      %v2469 = vadd.f32 %v2336, %v2468
      %v2470 = vpop.f32.mrb[0].mxu0
      %v2471 = vpop.f32.mrb[0].mxu0
      %v2472 = vadd.f32 %v2336, %v2471
      %v2473 = vpop.f32.mrb[0].mxu0
      %2474 = vmatprep.mubr.bf16.mxu0 %v2294
      %2475 = vmatmul.mubr.bf16.gmra.mrb[0].mxu0 %v2293
      %v2476 = vpop.f32.mrb[0].mxu0
      %v2477 = vadd.f32 %v2336, %v2476
      %v2478 = vpop.f32.mrb[0].mxu0
      %v2479 = vpop.f32.mrb[0].mxu0
      %v2480 = vadd.f32 %v2336, %v2479
      %v2481 = vpop.f32.mrb[0].mxu0
      %2482 = vmatprep.mubr.bf16.mxu0 %v2296
      %2483 = vmatmul.mubr.bf16.gmra.mrb[0].mxu0 %v2295
      %v2484 = vpop.f32.mrb[0].mxu0
      %v2485 = vadd.f32 %v2336, %v2484
      %v2486 = vpop.f32.mrb[0].mxu0
      %v2487 = vpop.f32.mrb[0].mxu0
      %v2488 = vadd.f32 %v2336, %v2487
      %v2489 = vpop.f32.mrb[0].mxu0
      %2490 = vmatprep.mubr.bf16.mxu0 %v2298
      %2491 = vmatmul.mubr.bf16.gmra.mrb[0].mxu0 %v2297
      %v2492 = vpop.f32.mrb[0].mxu0
      %v2493 = vadd.f32 %v2336, %v2492
      %v2494 = vpop.f32.mrb[0].mxu0
      %v2495 = vpop.f32.mrb[0].mxu0
      %v2496 = vadd.f32 %v2336, %v2495
      %v2497 = vpop.f32.mrb[0].mxu0
      %2498 = vdwg.mxu0
      %v2499 = vadd.f32 %v487, %v2469
      %v2500 = vadd.f32 %v488, %v2472
      %v2501 = vadd.f32 %v489, %v2477
      %v2502 = vadd.f32 %v490, %v2480
      %v2503 = vadd.f32 %v491, %v2485
      %v2504 = vadd.f32 %v492, %v2488
      %v2505 = vadd.f32 %v493, %v2493
      %v2506 = vadd.f32 %v494, %v2496
      %2507 = vst.msk [vmem:[%s484] sm:$0xff] %vm495, %v2499
      %2508 = vst.msk [vmem:[%s484 + $0x8] sm:$0xff] %vm495, %v2500
      %2509 = vst.msk [vmem:[%s484 + $0x10] sm:$0xff] %vm495, %v2501
      %2510 = vst.msk [vmem:[%s484 + $0x18] sm:$0xff] %vm495, %v2502
      %2511 = vst.msk [vmem:[%s484 + $0x20] sm:$0xff] %vm495, %v2503
      %2512 = vst.msk [vmem:[%s484 + $0x28] sm:$0xff] %vm495, %v2504
      %2513 = vst.msk [vmem:[%s484 + $0x30] sm:$0xff] %vm495, %v2505
      %2514 = vst.msk [vmem:[%s484 + $0x38] sm:$0xff] %vm495, %v2506
      %s2515 = smul.u32 8, %s25
      %p2516 = scmp.lt.s32.totalorder %s24, 1
      %s2517 = scalar_select %p2516, %s24, 1
      %p2518 = scmp.lt.s32.totalorder %s2515, 15
      %s2519 = scalar_select %p2518, %s2515, 15
      %s2520 = smul.addr %s2517, 16
      %s2521 = sadd.s32 %s2519, %s2520
      %s2522 = smul.addr %s2521, 8
      %s2523 = scalar_lea.vmem %s9, %s2522
      // Predicated region
      $region57: #{block_forward.5} parent=55 // pred_check
        %p2524 = pneg %p274
      $region58: #{block_forward.5} parent=55 // pred_check_branch
        %2526 = sbr.rel (%p2524) target = $region60
      $region59: #{block_forward.5} parent=55 // pred_region
        %s2527 = smul.u32 8, %s25
      $region60: #{block_forward.5} parent=55 // pred_fallthru
        _
    $region56: #{block_forward.5} parent=5 // pred_fallthru
      _
    %p2528 = scmp.le.s32.totalorder 2, %s15
    // Predicated region
    $region61: #{block_forward.5} parent=5 // pred_check
      %p2529 = pneg %p2528
    $region62: #{block_forward.5} parent=5 // pred_check_branch
      %2531 = sbr.rel (%p2529) target = $region64
    $region63: #{block_forward.5} parent=5 // pred_region
      %s2532 = ssub.s32 %s15, 2
      // Predicated region
      $region65: #{block_forward.5} parent=63 // pred_check
        %p2533 = pneg %p280
      $region66: #{block_forward.5} parent=63 // pred_check_branch
        %2535 = sbr.rel (%p2533) target = $region68
      $region67: #{block_forward.5} parent=63 // pred_region
        %s2536 = smul.u32 8, %s27
        %p2537 = scmp.lt.s32.totalorder %s26, 1
        %s2538 = scalar_select %p2537, %s26, 1
        %p2539 = scmp.lt.s32.totalorder %s2536, 15
        %s2540 = scalar_select %p2539, %s2536, 15
        %s2541 = smul.addr %s2538, 16
        %s2542 = sadd.s32 %s2540, %s2541
        %s2543 = smul.addr %s2542, 8
        %s2544 = scalar_lea.vmem %s9, %s2543
      $region68: #{block_forward.5} parent=63 // pred_fallthru
        _
    $region64: #{block_forward.5} parent=5 // pred_fallthru
      _
  $region6: #{block_forward.5} parent=0 // loop_footer
    %s19 = sadd.s32 1, %s15
  $region7: #{block_forward.5} parent=0 // loop_footer_branch
    %14 = sbr.rel target = $region3
  $region8: #{block_forward.5} parent=0 // loop_exit
    _

</llo_original>
